<compile_context>
chip_gen: v6e
topology: v6e:2x2x1
jax: 0.10.0
libtpu: 0.0.40
codegen_flags: <defaults>
</compile_context>

<pallas_src>
import math
from functools import partial

import jax
import jax.numpy as jnp
from jax.experimental import pallas as pl
from jax.experimental.pallas import tpu as pltpu

# ----------------------------- model configuration -----------------------------
SPACETIME_NDIM = 2
NB_UNET_LEVELS = 2
NB_FILTERS = 8
BN_EPS = 1e-5  # nn.BatchNorm2d default

# TODO(synk): the module's default nb_unet_levels=4 makes torch.add() fail inside the
# reference forward (channel mismatch between the upsampled tensor and the skip, and a
# mismatched in_channels on the doubled second-half conv); nb_unet_levels=2 is the
# largest self-consistent setting, so that configuration is reproduced here.

# Conv layers in network order: (name, cin, cout).
_CONV_DEFS = (
    ("first", 1, NB_FILTERS),                  # first conv for first level
    ("down0", NB_FILTERS, NB_FILTERS),         # first_half[0]
    ("down1", NB_FILTERS, 2 * NB_FILTERS),     # first_half[1]
    ("bottom", 2 * NB_FILTERS, NB_FILTERS),    # bottom conv
    ("up0", NB_FILTERS, NB_FILTERS),           # second_half[0] (applied twice)
    ("up1", NB_FILTERS, NB_FILTERS),           # second_half[1] (applied twice)
)


def _param_layout():
    """Single packed parameter matrix: one row-block (cout, 9*cin+3) per
    ConvWithBatchNorm ([9 tap weight blocks | bias | gamma | beta]; row offsets are
    multiples of 8), plus an 8-row column block for the final 1x1 conv."""
    offs, rows, width = {}, 0, 0
    for name, cin, cout in _CONV_DEFS:
        offs[name] = (rows, cin, cout)
        rows += cout
        width = max(width, 9 * cin + 3)
    offs["final"] = (rows, NB_FILTERS, 1)
    rows += NB_FILTERS
    return offs, rows, width


_PARAM_OFFS, _PARAM_ROWS, _PARAM_WIDTH = _param_layout()   # (64, 147) for nf=8


# --------------------------- in-kernel building blocks --------------------------
def _shift_lanes(v, delta, length):
    """u[..., l] = v[..., (l + delta) % length] for a static integer delta."""
    k = (-delta) % length
    if k == 0:
        return v
    return pltpu.roll(v, k, axis=1)


def _conv_bn_relu(act, p_ref, name, level, xs, ys, *, n, h, w, length):
    """3x3 conv (padding=1) + bias + batch-stat BatchNorm + ReLU at pyramid `level`.

    `act` is (cin, length) on the full-resolution flattened lane grid; only lanes whose
    per-image (y, x) are both multiples of 2**level carry real data, the remaining
    lanes are ignored garbage (masked out of every reduction, never fed into a valid
    output lane).
    """
    r0, cin, cout = _PARAM_OFFS[name]
    s = 1 << level

    taps = []
    acc = None
    for t in range(9):
        ky, kx = divmod(t, 3)
        dy, dx = ky - 1, kx - 1
        v = _shift_lanes(act, s * (dy * w + dx), length)
        conds = []
        if dy == -1:
            conds.append(ys >= s)
        elif dy == 1:
            conds.append(ys < (h - s))
        if dx == -1:
            conds.append(xs >= s)
        elif dx == 1:
            conds.append(xs < (w - s))
        if conds:
            m = conds[0]
            for c in conds[1:]:
                m = jnp.logical_and(m, c)
            v = jnp.where(m, v, 0.0)          # zero-padding of the conv halo
        if cin == 1:
            # Degenerate K=1 matmul is pointless: 9 VPU broadcast MACs instead.
            wt = p_ref[r0:r0 + cout, t:t + 1]                      # (cout, 1)
            contrib = wt * v                                       # (cout, length)
            acc = contrib if acc is None else acc + contrib
        else:
            taps.append(v)

    if cin == 1:
        y = acc
    else:
        rhs = jnp.concatenate(taps, axis=0)                        # (9*cin, length)
        wts = p_ref[r0:r0 + cout, 0:9 * cin]                       # (cout, 9*cin)
        y = jnp.dot(wts, rhs, preferred_element_type=jnp.float32)  # one fused matmul

    bias = p_ref[r0:r0 + cout, 9 * cin + 0:9 * cin + 1]            # (cout, 1)
    gamma = p_ref[r0:r0 + cout, 9 * cin + 1:9 * cin + 2]
    beta = p_ref[r0:r0 + cout, 9 * cin + 2:9 * cin + 3]
    y = y + bias

    # Training-mode BatchNorm (per-batch mean / biased variance) over the valid lanes.
    # TODO(synk): eval-mode running statistics are not modeled (module default .train()).
    inv = 1.0 / float(n * (h // s) * (w // s))
    if s == 1:
        mean = jnp.sum(y, axis=1, keepdims=True) * inv
        d = y - mean
        var = jnp.sum(d * d, axis=1, keepdims=True) * inv
    else:
        valid = jnp.logical_and((xs & (s - 1)) == 0, (ys & (s - 1)) == 0)
        mean = jnp.sum(jnp.where(valid, y, 0.0), axis=1, keepdims=True) * inv
        d = y - mean
        var = jnp.sum(jnp.where(valid, d * d, 0.0), axis=1, keepdims=True) * inv

    yn = d * jax.lax.rsqrt(var + BN_EPS)
    return jnp.maximum(yn * gamma + beta, 0.0)


def _maxpool2(act, level, *, w, length):
    """2x2 / stride-2 max-pool from `level` to `level`+1 on the flat lane grid:
    two lane-rolls + two maxes; result valid on the stride-2**(level+1) lanes."""
    s = 1 << level
    m = jnp.maximum(act, _shift_lanes(act, s, length))
    return jnp.maximum(m, _shift_lanes(m, s * w, length))


def _upsample2(act, level_out, xs, ys, *, w, length):
    """Nearest-neighbour 2x upsample from `level_out`+1 to `level_out`: two lane-rolls
    + two selects (replicate each coarse value over its 2x2 fine block)."""
    s = 1 << level_out
    v = jnp.where((xs & s) != 0, _shift_lanes(act, -s, length), act)
    return jnp.where((ys & s) != 0, _shift_lanes(v, -s * w, length), v)


# ----------------------------------- kernel -------------------------------------
def _unet_kernel(x_ref, p_ref, o_ref, *, n, h, w, nf):
    length = n * h * w
    # Per-image (x, y) lane coordinates (h, w powers of two; each image occupies a
    # contiguous h*w lane block): used for conv boundary masks, BN valid-lane masks and
    # the upsample replication selects.
    li = jax.lax.broadcasted_iota(jnp.int32, (1, length), 1)
    xs = jnp.bitwise_and(li, w - 1)
    ys = jnp.bitwise_and(jnp.right_shift(li, int(math.log2(w))), h - 1)

    cbr = partial(_conv_bn_relu, p_ref=p_ref, xs=xs, ys=ys,
                  n=n, h=h, w=w, length=length)

    x_in = x_ref[...]                                    # (1, length) -- also skip #0

    # ---- first conv for first level: ConvWithBatchNorm(1 -> nf), level 0 -----------
    a = cbr(x_in, name="first", level=0)
    # ---- down level 0: conv (nf -> nf) + max-pool; pooled map is skip #1 -----------
    a = cbr(a, name="down0", level=0)
    p1 = _maxpool2(a, 0, w=w, length=length)
    # ---- down level 1: conv (nf -> 2nf) + max-pool (no skip) -----------------------
    a = cbr(p1, name="down1", level=1)
    a = _maxpool2(a, 1, w=w, length=length)
    # ---- bottom conv (2nf -> nf), level 2 -------------------------------------------
    a = cbr(a, name="bottom", level=2)
    # ---- up level 0: upsample x2 + pooled-skip add + second_half[0] applied twice ---
    a = _upsample2(a, 1, xs, ys, w=w, length=length) + p1
    a = cbr(a, name="up0", level=1)
    a = cbr(a, name="up0", level=1)       # reference applies the same module twice
    # ---- up level 1: upsample x2 + input-skip add (1ch broadcast over nf) + conv x2 -
    a = _upsample2(a, 0, xs, ys, w=w, length=length) + x_in
    a = cbr(a, name="up1", level=0)
    a = cbr(a, name="up1", level=0)
    # ---- final nn.Conv2d(nf, 1, 1): per-channel weighted sublane reduction ----------
    r_fin = _PARAM_OFFS["final"][0]
    w_col = p_ref[r_fin:r_fin + nf, 0:1]                 # (nf, 1)
    b_fin = p_ref[r_fin:r_fin + 1, 1:2]                  # (1, 1)
    o_ref[...] = jnp.sum(a * w_col, axis=0, keepdims=True) + b_fin


# ------------------------------ host-side wrapper --------------------------------
def unet_forward(x_nchw, packed_params):
    """Forward pass matching UNetModel(spacetime_ndim=2, nb_unet_levels=2, nb_filters=8)."""
    n, c, h, w = x_nchw.shape
    nf = NB_FILTERS
    assert c == 1, "UNetModel takes a single input channel"
    assert h >= 4 and w >= 4 and (h & (h - 1)) == 0 and (w & (w - 1)) == 0, \
        "power-of-two spatial dims required by the flattened-lane coordinate masks"
    length = n * h * w

    # NCHW -> lane-dense (1, n*h*w): channels live in sublanes inside the kernel and
    # the flattened batch*spatial axis in lanes (lane-dense input, output and stores).
    x_flat = x_nchw.astype(jnp.float32).reshape(1, length)

    # TODO(synk): for large images (or the smaller 64 MiB VMEM on v7x) grow a spatially
    # tiled grid marked 'parallel' (megacore) with a two-pass / grid-accumulated
    # BatchNorm; at these shapes a single invocation covers everything.
    out = pl.pallas_call(
        partial(_unet_kernel, n=n, h=h, w=w, nf=nf),
        out_shape=jax.ShapeDtypeStruct((1, length), jnp.float32),
        in_specs=[pl.BlockSpec(memory_space=pltpu.MemorySpace.VMEM),
                  pl.BlockSpec(memory_space=pltpu.MemorySpace.VMEM)],
        out_specs=pl.BlockSpec(memory_space=pltpu.MemorySpace.VMEM),
    )(x_flat, packed_params)
    return out.reshape(n, 1, h, w)


# ------------------------------ parameter setup ----------------------------------
def _init_conv(key, cin, cout, k):
    kw_key, kb_key = jax.random.split(key)
    fan_in = cin * k * k
    bound = 1.0 / math.sqrt(fan_in)          # PyTorch Conv2d default init bounds
    wgt = jax.random.uniform(kw_key, (k, k, cin, cout), jnp.float32, -bound, bound)
    b = jax.random.uniform(kb_key, (cout,), jnp.float32, -bound, bound)
    return wgt, b


def init_params(seed=0):
    """Build the single packed (64, 147) parameter operand (one input DMA)."""
    keys = jax.random.split(jax.random.PRNGKey(seed), len(_CONV_DEFS) + 1)
    pp = jnp.zeros((_PARAM_ROWS, _PARAM_WIDTH), jnp.float32)
    for i, (name, cin, cout) in enumerate(_CONV_DEFS):
        r0 = _PARAM_OFFS[name][0]
        wgt, b = _init_conv(keys[i], cin, cout, 3)           # (3, 3, cin, cout)
        w_flat = jnp.transpose(wgt.reshape(9 * cin, cout))   # (cout, 9*cin) [co, t*cin+ci]
        pp = pp.at[r0:r0 + cout, 0:9 * cin].set(w_flat)
        pp = pp.at[r0:r0 + cout, 9 * cin + 0].set(b)
        pp = pp.at[r0:r0 + cout, 9 * cin + 1].set(1.0)       # BatchNorm gamma
        pp = pp.at[r0:r0 + cout, 9 * cin + 2].set(0.0)       # BatchNorm beta
    r_fin = _PARAM_OFFS["final"][0]
    w1, b1 = _init_conv(keys[-1], NB_FILTERS, 1, 1)          # final nn.Conv2d(nf, 1, 1)
    pp = pp.at[r_fin:r_fin + NB_FILTERS, 0].set(w1.reshape(NB_FILTERS))
    pp = pp.at[r_fin, 1].set(b1[0])
    return pp


# ----------------------------------- main -----------------------------------------
if __name__ == "__main__":
    params = init_params(0)
    x = jax.random.normal(jax.random.PRNGKey(0), (2, 1, 16, 16), jnp.float32)
    fwd = jax.jit(lambda inp: unet_forward(inp, params))
    y = jax.block_until_ready(fwd(x))
    assert y.shape == (2, 1, 16, 16), y.shape
    assert bool(jnp.all(jnp.isfinite(y)))
    print("KERNEL_OK")
</pallas_src>

<mosaic_0001>
module attributes {stable_mosaic.version = 11 : i64} {
  func.func @_unet_kernel(%arg0: memref<1x512xf32, #tpu.memory_space<vmem>>, %arg1: memref<64x147xf32, #tpu.memory_space<vmem>>, %arg2: memref<1x512xf32, #tpu.memory_space<vmem>>) attributes {dimension_semantics = [], scalar_prefetch = 0 : i64, scratch_operands = 0 : i64, tpu.core_type = #tpu.core_type<tc>} {
    %0 = tpu.iota {dimensions = array<i32: 1>} : vector<1x512xi32>
    %c15_i32 = arith.constant 15 : i32
    %1 = vector.broadcast %c15_i32 : i32 to vector<1x512xi32>
    %2 = arith.andi %0, %1 : vector<1x512xi32>
    %c4_i32 = arith.constant 4 : i32
    %3 = vector.broadcast %c4_i32 : i32 to vector<1x512xi32>
    %4 = arith.shrsi %0, %3 : vector<1x512xi32>
    %c15_i32_0 = arith.constant 15 : i32
    %5 = vector.broadcast %c15_i32_0 : i32 to vector<1x512xi32>
    %6 = arith.andi %4, %5 : vector<1x512xi32>
    %c0 = arith.constant 0 : index
    %c0_1 = arith.constant 0 : index
    %7 = vector.load %arg0[%c0, %c0_1] : memref<1x512xf32, #tpu.memory_space<vmem>>, vector<1x512xf32>
    %c17_i32 = arith.constant 17 : i32
    %8 = tpu.dynamic_rotate %7 by %c17_i32 dim 1 : vector<1x512xf32>, i32 -> vector<1x512xf32>
    %c1_i32 = arith.constant 1 : i32
    %9 = vector.broadcast %c1_i32 : i32 to vector<1x512xi32>
    %10 = arith.cmpi sge, %6, %9 : vector<1x512xi32>
    %c1_i32_2 = arith.constant 1 : i32
    %11 = vector.broadcast %c1_i32_2 : i32 to vector<1x512xi32>
    %12 = arith.cmpi sge, %2, %11 : vector<1x512xi32>
    %13 = arith.andi %10, %12 : vector<1x512xi1>
    %cst = arith.constant 0.000000e+00 : f32
    %14 = vector.broadcast %cst : f32 to vector<1x512xf32>
    %15 = arith.select %13, %8, %14 : vector<1x512xi1>, vector<1x512xf32>
    %c0_3 = arith.constant 0 : index
    %c0_4 = arith.constant 0 : index
    %16 = vector.load %arg1[%c0_3, %c0_4] : memref<64x147xf32, #tpu.memory_space<vmem>>, vector<8x1xf32>
    %17 = vector.broadcast %16 : vector<8x1xf32> to vector<8x512xf32>
    %18 = vector.broadcast %15 : vector<1x512xf32> to vector<8x512xf32>
    %19 = arith.mulf %17, %18 : vector<8x512xf32>
    %c16_i32 = arith.constant 16 : i32
    %20 = tpu.dynamic_rotate %7 by %c16_i32 dim 1 : vector<1x512xf32>, i32 -> vector<1x512xf32>
    %c1_i32_5 = arith.constant 1 : i32
    %21 = vector.broadcast %c1_i32_5 : i32 to vector<1x512xi32>
    %22 = arith.cmpi sge, %6, %21 : vector<1x512xi32>
    %cst_6 = arith.constant 0.000000e+00 : f32
    %23 = vector.broadcast %cst_6 : f32 to vector<1x512xf32>
    %24 = arith.select %22, %20, %23 : vector<1x512xi1>, vector<1x512xf32>
    %c0_7 = arith.constant 0 : index
    %c1 = arith.constant 1 : index
    %25 = vector.load %arg1[%c0_7, %c1] : memref<64x147xf32, #tpu.memory_space<vmem>>, vector<8x1xf32>
    %26 = vector.broadcast %25 : vector<8x1xf32> to vector<8x512xf32>
    %27 = vector.broadcast %24 : vector<1x512xf32> to vector<8x512xf32>
    %28 = arith.mulf %26, %27 : vector<8x512xf32>
    %29 = arith.addf %19, %28 : vector<8x512xf32>
    %c15_i32_8 = arith.constant 15 : i32
    %30 = tpu.dynamic_rotate %7 by %c15_i32_8 dim 1 : vector<1x512xf32>, i32 -> vector<1x512xf32>
    %c1_i32_9 = arith.constant 1 : i32
    %31 = vector.broadcast %c1_i32_9 : i32 to vector<1x512xi32>
    %32 = arith.cmpi sge, %6, %31 : vector<1x512xi32>
    %c15_i32_10 = arith.constant 15 : i32
    %33 = vector.broadcast %c15_i32_10 : i32 to vector<1x512xi32>
    %34 = arith.cmpi slt, %2, %33 : vector<1x512xi32>
    %35 = arith.andi %32, %34 : vector<1x512xi1>
    %cst_11 = arith.constant 0.000000e+00 : f32
    %36 = vector.broadcast %cst_11 : f32 to vector<1x512xf32>
    %37 = arith.select %35, %30, %36 : vector<1x512xi1>, vector<1x512xf32>
    %c0_12 = arith.constant 0 : index
    %c2 = arith.constant 2 : index
    %38 = vector.load %arg1[%c0_12, %c2] : memref<64x147xf32, #tpu.memory_space<vmem>>, vector<8x1xf32>
    %39 = vector.broadcast %38 : vector<8x1xf32> to vector<8x512xf32>
    %40 = vector.broadcast %37 : vector<1x512xf32> to vector<8x512xf32>
    %41 = arith.mulf %39, %40 : vector<8x512xf32>
    %42 = arith.addf %29, %41 : vector<8x512xf32>
    %c1_i32_13 = arith.constant 1 : i32
    %43 = tpu.dynamic_rotate %7 by %c1_i32_13 dim 1 : vector<1x512xf32>, i32 -> vector<1x512xf32>
    %c1_i32_14 = arith.constant 1 : i32
    %44 = vector.broadcast %c1_i32_14 : i32 to vector<1x512xi32>
    %45 = arith.cmpi sge, %2, %44 : vector<1x512xi32>
    %cst_15 = arith.constant 0.000000e+00 : f32
    %46 = vector.broadcast %cst_15 : f32 to vector<1x512xf32>
    %47 = arith.select %45, %43, %46 : vector<1x512xi1>, vector<1x512xf32>
    %c0_16 = arith.constant 0 : index
    %c3 = arith.constant 3 : index
    %48 = vector.load %arg1[%c0_16, %c3] : memref<64x147xf32, #tpu.memory_space<vmem>>, vector<8x1xf32>
    %49 = vector.broadcast %48 : vector<8x1xf32> to vector<8x512xf32>
    %50 = vector.broadcast %47 : vector<1x512xf32> to vector<8x512xf32>
    %51 = arith.mulf %49, %50 : vector<8x512xf32>
    %52 = arith.addf %42, %51 : vector<8x512xf32>
    %c0_17 = arith.constant 0 : index
    %c4 = arith.constant 4 : index
    %53 = vector.load %arg1[%c0_17, %c4] : memref<64x147xf32, #tpu.memory_space<vmem>>, vector<8x1xf32>
    %54 = vector.broadcast %53 : vector<8x1xf32> to vector<8x512xf32>
    %55 = vector.broadcast %7 : vector<1x512xf32> to vector<8x512xf32>
    %56 = arith.mulf %54, %55 : vector<8x512xf32>
    %57 = arith.addf %52, %56 : vector<8x512xf32>
    %c511_i32 = arith.constant 511 : i32
    %58 = tpu.dynamic_rotate %7 by %c511_i32 dim 1 : vector<1x512xf32>, i32 -> vector<1x512xf32>
    %c15_i32_18 = arith.constant 15 : i32
    %59 = vector.broadcast %c15_i32_18 : i32 to vector<1x512xi32>
    %60 = arith.cmpi slt, %2, %59 : vector<1x512xi32>
    %cst_19 = arith.constant 0.000000e+00 : f32
    %61 = vector.broadcast %cst_19 : f32 to vector<1x512xf32>
    %62 = arith.select %60, %58, %61 : vector<1x512xi1>, vector<1x512xf32>
    %c0_20 = arith.constant 0 : index
    %c5 = arith.constant 5 : index
    %63 = vector.load %arg1[%c0_20, %c5] : memref<64x147xf32, #tpu.memory_space<vmem>>, vector<8x1xf32>
    %64 = vector.broadcast %63 : vector<8x1xf32> to vector<8x512xf32>
    %65 = vector.broadcast %62 : vector<1x512xf32> to vector<8x512xf32>
    %66 = arith.mulf %64, %65 : vector<8x512xf32>
    %67 = arith.addf %57, %66 : vector<8x512xf32>
    %c497_i32 = arith.constant 497 : i32
    %68 = tpu.dynamic_rotate %7 by %c497_i32 dim 1 : vector<1x512xf32>, i32 -> vector<1x512xf32>
    %c15_i32_21 = arith.constant 15 : i32
    %69 = vector.broadcast %c15_i32_21 : i32 to vector<1x512xi32>
    %70 = arith.cmpi slt, %6, %69 : vector<1x512xi32>
    %c1_i32_22 = arith.constant 1 : i32
    %71 = vector.broadcast %c1_i32_22 : i32 to vector<1x512xi32>
    %72 = arith.cmpi sge, %2, %71 : vector<1x512xi32>
    %73 = arith.andi %70, %72 : vector<1x512xi1>
    %cst_23 = arith.constant 0.000000e+00 : f32
    %74 = vector.broadcast %cst_23 : f32 to vector<1x512xf32>
    %75 = arith.select %73, %68, %74 : vector<1x512xi1>, vector<1x512xf32>
    %c0_24 = arith.constant 0 : index
    %c6 = arith.constant 6 : index
    %76 = vector.load %arg1[%c0_24, %c6] : memref<64x147xf32, #tpu.memory_space<vmem>>, vector<8x1xf32>
    %77 = vector.broadcast %76 : vector<8x1xf32> to vector<8x512xf32>
    %78 = vector.broadcast %75 : vector<1x512xf32> to vector<8x512xf32>
    %79 = arith.mulf %77, %78 : vector<8x512xf32>
    %80 = arith.addf %67, %79 : vector<8x512xf32>
    %c496_i32 = arith.constant 496 : i32
    %81 = tpu.dynamic_rotate %7 by %c496_i32 dim 1 : vector<1x512xf32>, i32 -> vector<1x512xf32>
    %c15_i32_25 = arith.constant 15 : i32
    %82 = vector.broadcast %c15_i32_25 : i32 to vector<1x512xi32>
    %83 = arith.cmpi slt, %6, %82 : vector<1x512xi32>
    %cst_26 = arith.constant 0.000000e+00 : f32
    %84 = vector.broadcast %cst_26 : f32 to vector<1x512xf32>
    %85 = arith.select %83, %81, %84 : vector<1x512xi1>, vector<1x512xf32>
    %c0_27 = arith.constant 0 : index
    %c7 = arith.constant 7 : index
    %86 = vector.load %arg1[%c0_27, %c7] : memref<64x147xf32, #tpu.memory_space<vmem>>, vector<8x1xf32>
    %87 = vector.broadcast %86 : vector<8x1xf32> to vector<8x512xf32>
    %88 = vector.broadcast %85 : vector<1x512xf32> to vector<8x512xf32>
    %89 = arith.mulf %87, %88 : vector<8x512xf32>
    %90 = arith.addf %80, %89 : vector<8x512xf32>
    %c495_i32 = arith.constant 495 : i32
    %91 = tpu.dynamic_rotate %7 by %c495_i32 dim 1 : vector<1x512xf32>, i32 -> vector<1x512xf32>
    %c15_i32_28 = arith.constant 15 : i32
    %92 = vector.broadcast %c15_i32_28 : i32 to vector<1x512xi32>
    %93 = arith.cmpi slt, %6, %92 : vector<1x512xi32>
    %c15_i32_29 = arith.constant 15 : i32
    %94 = vector.broadcast %c15_i32_29 : i32 to vector<1x512xi32>
    %95 = arith.cmpi slt, %2, %94 : vector<1x512xi32>
    %96 = arith.andi %93, %95 : vector<1x512xi1>
    %cst_30 = arith.constant 0.000000e+00 : f32
    %97 = vector.broadcast %cst_30 : f32 to vector<1x512xf32>
    %98 = arith.select %96, %91, %97 : vector<1x512xi1>, vector<1x512xf32>
    %c0_31 = arith.constant 0 : index
    %c8 = arith.constant 8 : index
    %99 = vector.load %arg1[%c0_31, %c8] : memref<64x147xf32, #tpu.memory_space<vmem>>, vector<8x1xf32>
    %100 = vector.broadcast %99 : vector<8x1xf32> to vector<8x512xf32>
    %101 = vector.broadcast %98 : vector<1x512xf32> to vector<8x512xf32>
    %102 = arith.mulf %100, %101 : vector<8x512xf32>
    %103 = arith.addf %90, %102 : vector<8x512xf32>
    %c0_32 = arith.constant 0 : index
    %c9 = arith.constant 9 : index
    %104 = vector.load %arg1[%c0_32, %c9] : memref<64x147xf32, #tpu.memory_space<vmem>>, vector<8x1xf32>
    %c0_33 = arith.constant 0 : index
    %c10 = arith.constant 10 : index
    %105 = vector.load %arg1[%c0_33, %c10] : memref<64x147xf32, #tpu.memory_space<vmem>>, vector<8x1xf32>
    %c0_34 = arith.constant 0 : index
    %c11 = arith.constant 11 : index
    %106 = vector.load %arg1[%c0_34, %c11] : memref<64x147xf32, #tpu.memory_space<vmem>>, vector<8x1xf32>
    %107 = vector.broadcast %104 : vector<8x1xf32> to vector<8x512xf32>
    %108 = arith.addf %103, %107 : vector<8x512xf32>
    %cst_35 = arith.constant dense<0.000000e+00> : vector<8xf32>
    %109 = vector.multi_reduction <add>, %108, %cst_35 [1] : vector<8x512xf32> to vector<8xf32>
    %110 = vector.shape_cast %109 : vector<8xf32> to vector<8x1xf32>
    %cst_36 = arith.constant 0.001953125 : f32
    %111 = vector.broadcast %cst_36 : f32 to vector<8x1xf32>
    %112 = arith.mulf %110, %111 : vector<8x1xf32>
    %113 = vector.broadcast %112 : vector<8x1xf32> to vector<8x512xf32>
    %114 = arith.subf %108, %113 : vector<8x512xf32>
    %115 = arith.mulf %114, %114 : vector<8x512xf32>
    %cst_37 = arith.constant dense<0.000000e+00> : vector<8xf32>
    %116 = vector.multi_reduction <add>, %115, %cst_37 [1] : vector<8x512xf32> to vector<8xf32>
    %117 = vector.shape_cast %116 : vector<8xf32> to vector<8x1xf32>
    %cst_38 = arith.constant 0.001953125 : f32
    %118 = vector.broadcast %cst_38 : f32 to vector<8x1xf32>
    %119 = arith.mulf %117, %118 : vector<8x1xf32>
    %cst_39 = arith.constant 9.99999974E-6 : f32
    %120 = vector.broadcast %cst_39 : f32 to vector<8x1xf32>
    %121 = arith.addf %119, %120 : vector<8x1xf32>
    %122 = math.rsqrt %121 : vector<8x1xf32>
    %123 = vector.broadcast %122 : vector<8x1xf32> to vector<8x512xf32>
    %124 = arith.mulf %114, %123 : vector<8x512xf32>
    %125 = vector.broadcast %105 : vector<8x1xf32> to vector<8x512xf32>
    %126 = arith.mulf %124, %125 : vector<8x512xf32>
    %127 = vector.broadcast %106 : vector<8x1xf32> to vector<8x512xf32>
    %128 = arith.addf %126, %127 : vector<8x512xf32>
    %cst_40 = arith.constant 0.000000e+00 : f32
    %129 = vector.broadcast %cst_40 : f32 to vector<8x512xf32>
    %130 = arith.maximumf %128, %129 : vector<8x512xf32>
    %c17_i32_41 = arith.constant 17 : i32
    %131 = tpu.dynamic_rotate %130 by %c17_i32_41 dim 1 : vector<8x512xf32>, i32 -> vector<8x512xf32>
    %c1_i32_42 = arith.constant 1 : i32
    %132 = vector.broadcast %c1_i32_42 : i32 to vector<1x512xi32>
    %133 = arith.cmpi sge, %6, %132 : vector<1x512xi32>
    %c1_i32_43 = arith.constant 1 : i32
    %134 = vector.broadcast %c1_i32_43 : i32 to vector<1x512xi32>
    %135 = arith.cmpi sge, %2, %134 : vector<1x512xi32>
    %136 = arith.andi %133, %135 : vector<1x512xi1>
    %cst_44 = arith.constant 0.000000e+00 : f32
    %137 = vector.shape_cast %136 : vector<1x512xi1> to vector<1x512xi1>
    %138 = vector.broadcast %137 : vector<1x512xi1> to vector<8x512xi1>
    %139 = vector.broadcast %cst_44 : f32 to vector<8x512xf32>
    %140 = arith.select %138, %131, %139 : vector<8x512xi1>, vector<8x512xf32>
    %c16_i32_45 = arith.constant 16 : i32
    %141 = tpu.dynamic_rotate %130 by %c16_i32_45 dim 1 : vector<8x512xf32>, i32 -> vector<8x512xf32>
    %c1_i32_46 = arith.constant 1 : i32
    %142 = vector.broadcast %c1_i32_46 : i32 to vector<1x512xi32>
    %143 = arith.cmpi sge, %6, %142 : vector<1x512xi32>
    %cst_47 = arith.constant 0.000000e+00 : f32
    %144 = vector.shape_cast %143 : vector<1x512xi1> to vector<1x512xi1>
    %145 = vector.broadcast %144 : vector<1x512xi1> to vector<8x512xi1>
    %146 = vector.broadcast %cst_47 : f32 to vector<8x512xf32>
    %147 = arith.select %145, %141, %146 : vector<8x512xi1>, vector<8x512xf32>
    %c15_i32_48 = arith.constant 15 : i32
    %148 = tpu.dynamic_rotate %130 by %c15_i32_48 dim 1 : vector<8x512xf32>, i32 -> vector<8x512xf32>
    %c1_i32_49 = arith.constant 1 : i32
    %149 = vector.broadcast %c1_i32_49 : i32 to vector<1x512xi32>
    %150 = arith.cmpi sge, %6, %149 : vector<1x512xi32>
    %c15_i32_50 = arith.constant 15 : i32
    %151 = vector.broadcast %c15_i32_50 : i32 to vector<1x512xi32>
    %152 = arith.cmpi slt, %2, %151 : vector<1x512xi32>
    %153 = arith.andi %150, %152 : vector<1x512xi1>
    %cst_51 = arith.constant 0.000000e+00 : f32
    %154 = vector.shape_cast %153 : vector<1x512xi1> to vector<1x512xi1>
    %155 = vector.broadcast %154 : vector<1x512xi1> to vector<8x512xi1>
    %156 = vector.broadcast %cst_51 : f32 to vector<8x512xf32>
    %157 = arith.select %155, %148, %156 : vector<8x512xi1>, vector<8x512xf32>
    %c1_i32_52 = arith.constant 1 : i32
    %158 = tpu.dynamic_rotate %130 by %c1_i32_52 dim 1 : vector<8x512xf32>, i32 -> vector<8x512xf32>
    %c1_i32_53 = arith.constant 1 : i32
    %159 = vector.broadcast %c1_i32_53 : i32 to vector<1x512xi32>
    %160 = arith.cmpi sge, %2, %159 : vector<1x512xi32>
    %cst_54 = arith.constant 0.000000e+00 : f32
    %161 = vector.shape_cast %160 : vector<1x512xi1> to vector<1x512xi1>
    %162 = vector.broadcast %161 : vector<1x512xi1> to vector<8x512xi1>
    %163 = vector.broadcast %cst_54 : f32 to vector<8x512xf32>
    %164 = arith.select %162, %158, %163 : vector<8x512xi1>, vector<8x512xf32>
    %c511_i32_55 = arith.constant 511 : i32
    %165 = tpu.dynamic_rotate %130 by %c511_i32_55 dim 1 : vector<8x512xf32>, i32 -> vector<8x512xf32>
    %c15_i32_56 = arith.constant 15 : i32
    %166 = vector.broadcast %c15_i32_56 : i32 to vector<1x512xi32>
    %167 = arith.cmpi slt, %2, %166 : vector<1x512xi32>
    %cst_57 = arith.constant 0.000000e+00 : f32
    %168 = vector.shape_cast %167 : vector<1x512xi1> to vector<1x512xi1>
    %169 = vector.broadcast %168 : vector<1x512xi1> to vector<8x512xi1>
    %170 = vector.broadcast %cst_57 : f32 to vector<8x512xf32>
    %171 = arith.select %169, %165, %170 : vector<8x512xi1>, vector<8x512xf32>
    %c497_i32_58 = arith.constant 497 : i32
    %172 = tpu.dynamic_rotate %130 by %c497_i32_58 dim 1 : vector<8x512xf32>, i32 -> vector<8x512xf32>
    %c15_i32_59 = arith.constant 15 : i32
    %173 = vector.broadcast %c15_i32_59 : i32 to vector<1x512xi32>
    %174 = arith.cmpi slt, %6, %173 : vector<1x512xi32>
    %c1_i32_60 = arith.constant 1 : i32
    %175 = vector.broadcast %c1_i32_60 : i32 to vector<1x512xi32>
    %176 = arith.cmpi sge, %2, %175 : vector<1x512xi32>
    %177 = arith.andi %174, %176 : vector<1x512xi1>
    %cst_61 = arith.constant 0.000000e+00 : f32
    %178 = vector.shape_cast %177 : vector<1x512xi1> to vector<1x512xi1>
    %179 = vector.broadcast %178 : vector<1x512xi1> to vector<8x512xi1>
    %180 = vector.broadcast %cst_61 : f32 to vector<8x512xf32>
    %181 = arith.select %179, %172, %180 : vector<8x512xi1>, vector<8x512xf32>
    %c496_i32_62 = arith.constant 496 : i32
    %182 = tpu.dynamic_rotate %130 by %c496_i32_62 dim 1 : vector<8x512xf32>, i32 -> vector<8x512xf32>
    %c15_i32_63 = arith.constant 15 : i32
    %183 = vector.broadcast %c15_i32_63 : i32 to vector<1x512xi32>
    %184 = arith.cmpi slt, %6, %183 : vector<1x512xi32>
    %cst_64 = arith.constant 0.000000e+00 : f32
    %185 = vector.shape_cast %184 : vector<1x512xi1> to vector<1x512xi1>
    %186 = vector.broadcast %185 : vector<1x512xi1> to vector<8x512xi1>
    %187 = vector.broadcast %cst_64 : f32 to vector<8x512xf32>
    %188 = arith.select %186, %182, %187 : vector<8x512xi1>, vector<8x512xf32>
    %c495_i32_65 = arith.constant 495 : i32
    %189 = tpu.dynamic_rotate %130 by %c495_i32_65 dim 1 : vector<8x512xf32>, i32 -> vector<8x512xf32>
    %c15_i32_66 = arith.constant 15 : i32
    %190 = vector.broadcast %c15_i32_66 : i32 to vector<1x512xi32>
    %191 = arith.cmpi slt, %6, %190 : vector<1x512xi32>
    %c15_i32_67 = arith.constant 15 : i32
    %192 = vector.broadcast %c15_i32_67 : i32 to vector<1x512xi32>
    %193 = arith.cmpi slt, %2, %192 : vector<1x512xi32>
    %194 = arith.andi %191, %193 : vector<1x512xi1>
    %cst_68 = arith.constant 0.000000e+00 : f32
    %195 = vector.shape_cast %194 : vector<1x512xi1> to vector<1x512xi1>
    %196 = vector.broadcast %195 : vector<1x512xi1> to vector<8x512xi1>
    %197 = vector.broadcast %cst_68 : f32 to vector<8x512xf32>
    %198 = arith.select %196, %189, %197 : vector<8x512xi1>, vector<8x512xf32>
    %199 = tpu.concatenate %140, %147, %157, %164, %130, %171, %181, %188, %198 in 0 : vector<8x512xf32>, vector<8x512xf32>, vector<8x512xf32>, vector<8x512xf32>, vector<8x512xf32>, vector<8x512xf32>, vector<8x512xf32>, vector<8x512xf32>, vector<8x512xf32> -> vector<72x512xf32>
    %c8_69 = arith.constant 8 : index
    %c0_70 = arith.constant 0 : index
    %200 = vector.load %arg1[%c8_69, %c0_70] : memref<64x147xf32, #tpu.memory_space<vmem>>, vector<8x72xf32>
    %cst_71 = arith.constant dense<0.000000e+00> : vector<8x512xf32>
    %201 = tpu.matmul %200, %199, %cst_71 {dimension_numbers = #tpu.dot_dimension_numbers<[1], [0], [0], [1], [0, 0, 1, 1], [], []>} : vector<8x72xf32>, vector<72x512xf32>, vector<8x512xf32> -> vector<8x512xf32>
    %c8_72 = arith.constant 8 : index
    %c72 = arith.constant 72 : index
    %202 = vector.load %arg1[%c8_72, %c72] : memref<64x147xf32, #tpu.memory_space<vmem>>, vector<8x1xf32>
    %c8_73 = arith.constant 8 : index
    %c73 = arith.constant 73 : index
    %203 = vector.load %arg1[%c8_73, %c73] : memref<64x147xf32, #tpu.memory_space<vmem>>, vector<8x1xf32>
    %c8_74 = arith.constant 8 : index
    %c74 = arith.constant 74 : index
    %204 = vector.load %arg1[%c8_74, %c74] : memref<64x147xf32, #tpu.memory_space<vmem>>, vector<8x1xf32>
    %205 = vector.broadcast %202 : vector<8x1xf32> to vector<8x512xf32>
    %206 = arith.addf %201, %205 : vector<8x512xf32>
    %cst_75 = arith.constant dense<0.000000e+00> : vector<8xf32>
    %207 = vector.multi_reduction <add>, %206, %cst_75 [1] : vector<8x512xf32> to vector<8xf32>
    %208 = vector.shape_cast %207 : vector<8xf32> to vector<8x1xf32>
    %cst_76 = arith.constant 0.001953125 : f32
    %209 = vector.broadcast %cst_76 : f32 to vector<8x1xf32>
    %210 = arith.mulf %208, %209 : vector<8x1xf32>
    %211 = vector.broadcast %210 : vector<8x1xf32> to vector<8x512xf32>
    %212 = arith.subf %206, %211 : vector<8x512xf32>
    %213 = arith.mulf %212, %212 : vector<8x512xf32>
    %cst_77 = arith.constant dense<0.000000e+00> : vector<8xf32>
    %214 = vector.multi_reduction <add>, %213, %cst_77 [1] : vector<8x512xf32> to vector<8xf32>
    %215 = vector.shape_cast %214 : vector<8xf32> to vector<8x1xf32>
    %cst_78 = arith.constant 0.001953125 : f32
    %216 = vector.broadcast %cst_78 : f32 to vector<8x1xf32>
    %217 = arith.mulf %215, %216 : vector<8x1xf32>
    %cst_79 = arith.constant 9.99999974E-6 : f32
    %218 = vector.broadcast %cst_79 : f32 to vector<8x1xf32>
    %219 = arith.addf %217, %218 : vector<8x1xf32>
    %220 = math.rsqrt %219 : vector<8x1xf32>
    %221 = vector.broadcast %220 : vector<8x1xf32> to vector<8x512xf32>
    %222 = arith.mulf %212, %221 : vector<8x512xf32>
    %223 = vector.broadcast %203 : vector<8x1xf32> to vector<8x512xf32>
    %224 = arith.mulf %222, %223 : vector<8x512xf32>
    %225 = vector.broadcast %204 : vector<8x1xf32> to vector<8x512xf32>
    %226 = arith.addf %224, %225 : vector<8x512xf32>
    %cst_80 = arith.constant 0.000000e+00 : f32
    %227 = vector.broadcast %cst_80 : f32 to vector<8x512xf32>
    %228 = arith.maximumf %226, %227 : vector<8x512xf32>
    %c511_i32_81 = arith.constant 511 : i32
    %229 = tpu.dynamic_rotate %228 by %c511_i32_81 dim 1 : vector<8x512xf32>, i32 -> vector<8x512xf32>
    %230 = arith.maximumf %228, %229 : vector<8x512xf32>
    %c496_i32_82 = arith.constant 496 : i32
    %231 = tpu.dynamic_rotate %230 by %c496_i32_82 dim 1 : vector<8x512xf32>, i32 -> vector<8x512xf32>
    %232 = arith.maximumf %230, %231 : vector<8x512xf32>
    %c34_i32 = arith.constant 34 : i32
    %233 = tpu.dynamic_rotate %232 by %c34_i32 dim 1 : vector<8x512xf32>, i32 -> vector<8x512xf32>
    %c2_i32 = arith.constant 2 : i32
    %234 = vector.broadcast %c2_i32 : i32 to vector<1x512xi32>
    %235 = arith.cmpi sge, %6, %234 : vector<1x512xi32>
    %c2_i32_83 = arith.constant 2 : i32
    %236 = vector.broadcast %c2_i32_83 : i32 to vector<1x512xi32>
    %237 = arith.cmpi sge, %2, %236 : vector<1x512xi32>
    %238 = arith.andi %235, %237 : vector<1x512xi1>
    %cst_84 = arith.constant 0.000000e+00 : f32
    %239 = vector.shape_cast %238 : vector<1x512xi1> to vector<1x512xi1>
    %240 = vector.broadcast %239 : vector<1x512xi1> to vector<8x512xi1>
    %241 = vector.broadcast %cst_84 : f32 to vector<8x512xf32>
    %242 = arith.select %240, %233, %241 : vector<8x512xi1>, vector<8x512xf32>
    %c32_i32 = arith.constant 32 : i32
    %243 = tpu.dynamic_rotate %232 by %c32_i32 dim 1 : vector<8x512xf32>, i32 -> vector<8x512xf32>
    %c2_i32_85 = arith.constant 2 : i32
    %244 = vector.broadcast %c2_i32_85 : i32 to vector<1x512xi32>
    %245 = arith.cmpi sge, %6, %244 : vector<1x512xi32>
    %cst_86 = arith.constant 0.000000e+00 : f32
    %246 = vector.shape_cast %245 : vector<1x512xi1> to vector<1x512xi1>
    %247 = vector.broadcast %246 : vector<1x512xi1> to vector<8x512xi1>
    %248 = vector.broadcast %cst_86 : f32 to vector<8x512xf32>
    %249 = arith.select %247, %243, %248 : vector<8x512xi1>, vector<8x512xf32>
    %c30_i32 = arith.constant 30 : i32
    %250 = tpu.dynamic_rotate %232 by %c30_i32 dim 1 : vector<8x512xf32>, i32 -> vector<8x512xf32>
    %c2_i32_87 = arith.constant 2 : i32
    %251 = vector.broadcast %c2_i32_87 : i32 to vector<1x512xi32>
    %252 = arith.cmpi sge, %6, %251 : vector<1x512xi32>
    %c14_i32 = arith.constant 14 : i32
    %253 = vector.broadcast %c14_i32 : i32 to vector<1x512xi32>
    %254 = arith.cmpi slt, %2, %253 : vector<1x512xi32>
    %255 = arith.andi %252, %254 : vector<1x512xi1>
    %cst_88 = arith.constant 0.000000e+00 : f32
    %256 = vector.shape_cast %255 : vector<1x512xi1> to vector<1x512xi1>
    %257 = vector.broadcast %256 : vector<1x512xi1> to vector<8x512xi1>
    %258 = vector.broadcast %cst_88 : f32 to vector<8x512xf32>
    %259 = arith.select %257, %250, %258 : vector<8x512xi1>, vector<8x512xf32>
    %c2_i32_89 = arith.constant 2 : i32
    %260 = tpu.dynamic_rotate %232 by %c2_i32_89 dim 1 : vector<8x512xf32>, i32 -> vector<8x512xf32>
    %c2_i32_90 = arith.constant 2 : i32
    %261 = vector.broadcast %c2_i32_90 : i32 to vector<1x512xi32>
    %262 = arith.cmpi sge, %2, %261 : vector<1x512xi32>
    %cst_91 = arith.constant 0.000000e+00 : f32
    %263 = vector.shape_cast %262 : vector<1x512xi1> to vector<1x512xi1>
    %264 = vector.broadcast %263 : vector<1x512xi1> to vector<8x512xi1>
    %265 = vector.broadcast %cst_91 : f32 to vector<8x512xf32>
    %266 = arith.select %264, %260, %265 : vector<8x512xi1>, vector<8x512xf32>
    %c510_i32 = arith.constant 510 : i32
    %267 = tpu.dynamic_rotate %232 by %c510_i32 dim 1 : vector<8x512xf32>, i32 -> vector<8x512xf32>
    %c14_i32_92 = arith.constant 14 : i32
    %268 = vector.broadcast %c14_i32_92 : i32 to vector<1x512xi32>
    %269 = arith.cmpi slt, %2, %268 : vector<1x512xi32>
    %cst_93 = arith.constant 0.000000e+00 : f32
    %270 = vector.shape_cast %269 : vector<1x512xi1> to vector<1x512xi1>
    %271 = vector.broadcast %270 : vector<1x512xi1> to vector<8x512xi1>
    %272 = vector.broadcast %cst_93 : f32 to vector<8x512xf32>
    %273 = arith.select %271, %267, %272 : vector<8x512xi1>, vector<8x512xf32>
    %c482_i32 = arith.constant 482 : i32
    %274 = tpu.dynamic_rotate %232 by %c482_i32 dim 1 : vector<8x512xf32>, i32 -> vector<8x512xf32>
    %c14_i32_94 = arith.constant 14 : i32
    %275 = vector.broadcast %c14_i32_94 : i32 to vector<1x512xi32>
    %276 = arith.cmpi slt, %6, %275 : vector<1x512xi32>
    %c2_i32_95 = arith.constant 2 : i32
    %277 = vector.broadcast %c2_i32_95 : i32 to vector<1x512xi32>
    %278 = arith.cmpi sge, %2, %277 : vector<1x512xi32>
    %279 = arith.andi %276, %278 : vector<1x512xi1>
    %cst_96 = arith.constant 0.000000e+00 : f32
    %280 = vector.shape_cast %279 : vector<1x512xi1> to vector<1x512xi1>
    %281 = vector.broadcast %280 : vector<1x512xi1> to vector<8x512xi1>
    %282 = vector.broadcast %cst_96 : f32 to vector<8x512xf32>
    %283 = arith.select %281, %274, %282 : vector<8x512xi1>, vector<8x512xf32>
    %c480_i32 = arith.constant 480 : i32
    %284 = tpu.dynamic_rotate %232 by %c480_i32 dim 1 : vector<8x512xf32>, i32 -> vector<8x512xf32>
    %c14_i32_97 = arith.constant 14 : i32
    %285 = vector.broadcast %c14_i32_97 : i32 to vector<1x512xi32>
    %286 = arith.cmpi slt, %6, %285 : vector<1x512xi32>
    %cst_98 = arith.constant 0.000000e+00 : f32
    %287 = vector.shape_cast %286 : vector<1x512xi1> to vector<1x512xi1>
    %288 = vector.broadcast %287 : vector<1x512xi1> to vector<8x512xi1>
    %289 = vector.broadcast %cst_98 : f32 to vector<8x512xf32>
    %290 = arith.select %288, %284, %289 : vector<8x512xi1>, vector<8x512xf32>
    %c478_i32 = arith.constant 478 : i32
    %291 = tpu.dynamic_rotate %232 by %c478_i32 dim 1 : vector<8x512xf32>, i32 -> vector<8x512xf32>
    %c14_i32_99 = arith.constant 14 : i32
    %292 = vector.broadcast %c14_i32_99 : i32 to vector<1x512xi32>
    %293 = arith.cmpi slt, %6, %292 : vector<1x512xi32>
    %c14_i32_100 = arith.constant 14 : i32
    %294 = vector.broadcast %c14_i32_100 : i32 to vector<1x512xi32>
    %295 = arith.cmpi slt, %2, %294 : vector<1x512xi32>
    %296 = arith.andi %293, %295 : vector<1x512xi1>
    %cst_101 = arith.constant 0.000000e+00 : f32
    %297 = vector.shape_cast %296 : vector<1x512xi1> to vector<1x512xi1>
    %298 = vector.broadcast %297 : vector<1x512xi1> to vector<8x512xi1>
    %299 = vector.broadcast %cst_101 : f32 to vector<8x512xf32>
    %300 = arith.select %298, %291, %299 : vector<8x512xi1>, vector<8x512xf32>
    %301 = tpu.concatenate %242, %249, %259, %266, %232, %273, %283, %290, %300 in 0 : vector<8x512xf32>, vector<8x512xf32>, vector<8x512xf32>, vector<8x512xf32>, vector<8x512xf32>, vector<8x512xf32>, vector<8x512xf32>, vector<8x512xf32>, vector<8x512xf32> -> vector<72x512xf32>
    %c16 = arith.constant 16 : index
    %c0_102 = arith.constant 0 : index
    %302 = vector.load %arg1[%c16, %c0_102] : memref<64x147xf32, #tpu.memory_space<vmem>>, vector<16x72xf32>
    %cst_103 = arith.constant dense<0.000000e+00> : vector<16x512xf32>
    %303 = tpu.matmul %302, %301, %cst_103 {dimension_numbers = #tpu.dot_dimension_numbers<[1], [0], [0], [1], [0, 0, 1, 1], [], []>} : vector<16x72xf32>, vector<72x512xf32>, vector<16x512xf32> -> vector<16x512xf32>
    %c16_104 = arith.constant 16 : index
    %c72_105 = arith.constant 72 : index
    %304 = vector.load %arg1[%c16_104, %c72_105] : memref<64x147xf32, #tpu.memory_space<vmem>>, vector<16x1xf32>
    %c16_106 = arith.constant 16 : index
    %c73_107 = arith.constant 73 : index
    %305 = vector.load %arg1[%c16_106, %c73_107] : memref<64x147xf32, #tpu.memory_space<vmem>>, vector<16x1xf32>
    %c16_108 = arith.constant 16 : index
    %c74_109 = arith.constant 74 : index
    %306 = vector.load %arg1[%c16_108, %c74_109] : memref<64x147xf32, #tpu.memory_space<vmem>>, vector<16x1xf32>
    %307 = vector.broadcast %304 : vector<16x1xf32> to vector<16x512xf32>
    %308 = arith.addf %303, %307 : vector<16x512xf32>
    %c1_i32_110 = arith.constant 1 : i32
    %309 = vector.broadcast %c1_i32_110 : i32 to vector<1x512xi32>
    %310 = arith.andi %2, %309 : vector<1x512xi32>
    %c0_i32 = arith.constant 0 : i32
    %311 = vector.broadcast %c0_i32 : i32 to vector<1x512xi32>
    %312 = arith.cmpi eq, %310, %311 : vector<1x512xi32>
    %c1_i32_111 = arith.constant 1 : i32
    %313 = vector.broadcast %c1_i32_111 : i32 to vector<1x512xi32>
    %314 = arith.andi %6, %313 : vector<1x512xi32>
    %c0_i32_112 = arith.constant 0 : i32
    %315 = vector.broadcast %c0_i32_112 : i32 to vector<1x512xi32>
    %316 = arith.cmpi eq, %314, %315 : vector<1x512xi32>
    %317 = arith.andi %312, %316 : vector<1x512xi1>
    %cst_113 = arith.constant 0.000000e+00 : f32
    %318 = vector.shape_cast %317 : vector<1x512xi1> to vector<1x512xi1>
    %319 = vector.broadcast %318 : vector<1x512xi1> to vector<16x512xi1>
    %320 = vector.broadcast %cst_113 : f32 to vector<16x512xf32>
    %321 = arith.select %319, %308, %320 : vector<16x512xi1>, vector<16x512xf32>
    %cst_114 = arith.constant dense<0.000000e+00> : vector<16xf32>
    %322 = vector.multi_reduction <add>, %321, %cst_114 [1] : vector<16x512xf32> to vector<16xf32>
    %323 = vector.shape_cast %322 : vector<16xf32> to vector<16x1xf32>
    %cst_115 = arith.constant 7.812500e-03 : f32
    %324 = vector.broadcast %cst_115 : f32 to vector<16x1xf32>
    %325 = arith.mulf %323, %324 : vector<16x1xf32>
    %326 = vector.broadcast %325 : vector<16x1xf32> to vector<16x512xf32>
    %327 = arith.subf %308, %326 : vector<16x512xf32>
    %328 = arith.mulf %327, %327 : vector<16x512xf32>
    %cst_116 = arith.constant 0.000000e+00 : f32
    %329 = vector.shape_cast %317 : vector<1x512xi1> to vector<1x512xi1>
    %330 = vector.broadcast %329 : vector<1x512xi1> to vector<16x512xi1>
    %331 = vector.broadcast %cst_116 : f32 to vector<16x512xf32>
    %332 = arith.select %330, %328, %331 : vector<16x512xi1>, vector<16x512xf32>
    %cst_117 = arith.constant dense<0.000000e+00> : vector<16xf32>
    %333 = vector.multi_reduction <add>, %332, %cst_117 [1] : vector<16x512xf32> to vector<16xf32>
    %334 = vector.shape_cast %333 : vector<16xf32> to vector<16x1xf32>
    %cst_118 = arith.constant 7.812500e-03 : f32
    %335 = vector.broadcast %cst_118 : f32 to vector<16x1xf32>
    %336 = arith.mulf %334, %335 : vector<16x1xf32>
    %cst_119 = arith.constant 9.99999974E-6 : f32
    %337 = vector.broadcast %cst_119 : f32 to vector<16x1xf32>
    %338 = arith.addf %336, %337 : vector<16x1xf32>
    %339 = math.rsqrt %338 : vector<16x1xf32>
    %340 = vector.broadcast %339 : vector<16x1xf32> to vector<16x512xf32>
    %341 = arith.mulf %327, %340 : vector<16x512xf32>
    %342 = vector.broadcast %305 : vector<16x1xf32> to vector<16x512xf32>
    %343 = arith.mulf %341, %342 : vector<16x512xf32>
    %344 = vector.broadcast %306 : vector<16x1xf32> to vector<16x512xf32>
    %345 = arith.addf %343, %344 : vector<16x512xf32>
    %cst_120 = arith.constant 0.000000e+00 : f32
    %346 = vector.broadcast %cst_120 : f32 to vector<16x512xf32>
    %347 = arith.maximumf %345, %346 : vector<16x512xf32>
    %c510_i32_121 = arith.constant 510 : i32
    %348 = tpu.dynamic_rotate %347 by %c510_i32_121 dim 1 : vector<16x512xf32>, i32 -> vector<16x512xf32>
    %349 = arith.maximumf %347, %348 : vector<16x512xf32>
    %c480_i32_122 = arith.constant 480 : i32
    %350 = tpu.dynamic_rotate %349 by %c480_i32_122 dim 1 : vector<16x512xf32>, i32 -> vector<16x512xf32>
    %351 = arith.maximumf %349, %350 : vector<16x512xf32>
    %c68_i32 = arith.constant 68 : i32
    %352 = tpu.dynamic_rotate %351 by %c68_i32 dim 1 : vector<16x512xf32>, i32 -> vector<16x512xf32>
    %c4_i32_123 = arith.constant 4 : i32
    %353 = vector.broadcast %c4_i32_123 : i32 to vector<1x512xi32>
    %354 = arith.cmpi sge, %6, %353 : vector<1x512xi32>
    %c4_i32_124 = arith.constant 4 : i32
    %355 = vector.broadcast %c4_i32_124 : i32 to vector<1x512xi32>
    %356 = arith.cmpi sge, %2, %355 : vector<1x512xi32>
    %357 = arith.andi %354, %356 : vector<1x512xi1>
    %cst_125 = arith.constant 0.000000e+00 : f32
    %358 = vector.shape_cast %357 : vector<1x512xi1> to vector<1x512xi1>
    %359 = vector.broadcast %358 : vector<1x512xi1> to vector<16x512xi1>
    %360 = vector.broadcast %cst_125 : f32 to vector<16x512xf32>
    %361 = arith.select %359, %352, %360 : vector<16x512xi1>, vector<16x512xf32>
    %c64_i32 = arith.constant 64 : i32
    %362 = tpu.dynamic_rotate %351 by %c64_i32 dim 1 : vector<16x512xf32>, i32 -> vector<16x512xf32>
    %c4_i32_126 = arith.constant 4 : i32
    %363 = vector.broadcast %c4_i32_126 : i32 to vector<1x512xi32>
    %364 = arith.cmpi sge, %6, %363 : vector<1x512xi32>
    %cst_127 = arith.constant 0.000000e+00 : f32
    %365 = vector.shape_cast %364 : vector<1x512xi1> to vector<1x512xi1>
    %366 = vector.broadcast %365 : vector<1x512xi1> to vector<16x512xi1>
    %367 = vector.broadcast %cst_127 : f32 to vector<16x512xf32>
    %368 = arith.select %366, %362, %367 : vector<16x512xi1>, vector<16x512xf32>
    %c60_i32 = arith.constant 60 : i32
    %369 = tpu.dynamic_rotate %351 by %c60_i32 dim 1 : vector<16x512xf32>, i32 -> vector<16x512xf32>
    %c4_i32_128 = arith.constant 4 : i32
    %370 = vector.broadcast %c4_i32_128 : i32 to vector<1x512xi32>
    %371 = arith.cmpi sge, %6, %370 : vector<1x512xi32>
    %c12_i32 = arith.constant 12 : i32
    %372 = vector.broadcast %c12_i32 : i32 to vector<1x512xi32>
    %373 = arith.cmpi slt, %2, %372 : vector<1x512xi32>
    %374 = arith.andi %371, %373 : vector<1x512xi1>
    %cst_129 = arith.constant 0.000000e+00 : f32
    %375 = vector.shape_cast %374 : vector<1x512xi1> to vector<1x512xi1>
    %376 = vector.broadcast %375 : vector<1x512xi1> to vector<16x512xi1>
    %377 = vector.broadcast %cst_129 : f32 to vector<16x512xf32>
    %378 = arith.select %376, %369, %377 : vector<16x512xi1>, vector<16x512xf32>
    %c4_i32_130 = arith.constant 4 : i32
    %379 = tpu.dynamic_rotate %351 by %c4_i32_130 dim 1 : vector<16x512xf32>, i32 -> vector<16x512xf32>
    %c4_i32_131 = arith.constant 4 : i32
    %380 = vector.broadcast %c4_i32_131 : i32 to vector<1x512xi32>
    %381 = arith.cmpi sge, %2, %380 : vector<1x512xi32>
    %cst_132 = arith.constant 0.000000e+00 : f32
    %382 = vector.shape_cast %381 : vector<1x512xi1> to vector<1x512xi1>
    %383 = vector.broadcast %382 : vector<1x512xi1> to vector<16x512xi1>
    %384 = vector.broadcast %cst_132 : f32 to vector<16x512xf32>
    %385 = arith.select %383, %379, %384 : vector<16x512xi1>, vector<16x512xf32>
    %c508_i32 = arith.constant 508 : i32
    %386 = tpu.dynamic_rotate %351 by %c508_i32 dim 1 : vector<16x512xf32>, i32 -> vector<16x512xf32>
    %c12_i32_133 = arith.constant 12 : i32
    %387 = vector.broadcast %c12_i32_133 : i32 to vector<1x512xi32>
    %388 = arith.cmpi slt, %2, %387 : vector<1x512xi32>
    %cst_134 = arith.constant 0.000000e+00 : f32
    %389 = vector.shape_cast %388 : vector<1x512xi1> to vector<1x512xi1>
    %390 = vector.broadcast %389 : vector<1x512xi1> to vector<16x512xi1>
    %391 = vector.broadcast %cst_134 : f32 to vector<16x512xf32>
    %392 = arith.select %390, %386, %391 : vector<16x512xi1>, vector<16x512xf32>
    %c452_i32 = arith.constant 452 : i32
    %393 = tpu.dynamic_rotate %351 by %c452_i32 dim 1 : vector<16x512xf32>, i32 -> vector<16x512xf32>
    %c12_i32_135 = arith.constant 12 : i32
    %394 = vector.broadcast %c12_i32_135 : i32 to vector<1x512xi32>
    %395 = arith.cmpi slt, %6, %394 : vector<1x512xi32>
    %c4_i32_136 = arith.constant 4 : i32
    %396 = vector.broadcast %c4_i32_136 : i32 to vector<1x512xi32>
    %397 = arith.cmpi sge, %2, %396 : vector<1x512xi32>
    %398 = arith.andi %395, %397 : vector<1x512xi1>
    %cst_137 = arith.constant 0.000000e+00 : f32
    %399 = vector.shape_cast %398 : vector<1x512xi1> to vector<1x512xi1>
    %400 = vector.broadcast %399 : vector<1x512xi1> to vector<16x512xi1>
    %401 = vector.broadcast %cst_137 : f32 to vector<16x512xf32>
    %402 = arith.select %400, %393, %401 : vector<16x512xi1>, vector<16x512xf32>
    %c448_i32 = arith.constant 448 : i32
    %403 = tpu.dynamic_rotate %351 by %c448_i32 dim 1 : vector<16x512xf32>, i32 -> vector<16x512xf32>
    %c12_i32_138 = arith.constant 12 : i32
    %404 = vector.broadcast %c12_i32_138 : i32 to vector<1x512xi32>
    %405 = arith.cmpi slt, %6, %404 : vector<1x512xi32>
    %cst_139 = arith.constant 0.000000e+00 : f32
    %406 = vector.shape_cast %405 : vector<1x512xi1> to vector<1x512xi1>
    %407 = vector.broadcast %406 : vector<1x512xi1> to vector<16x512xi1>
    %408 = vector.broadcast %cst_139 : f32 to vector<16x512xf32>
    %409 = arith.select %407, %403, %408 : vector<16x512xi1>, vector<16x512xf32>
    %c444_i32 = arith.constant 444 : i32
    %410 = tpu.dynamic_rotate %351 by %c444_i32 dim 1 : vector<16x512xf32>, i32 -> vector<16x512xf32>
    %c12_i32_140 = arith.constant 12 : i32
    %411 = vector.broadcast %c12_i32_140 : i32 to vector<1x512xi32>
    %412 = arith.cmpi slt, %6, %411 : vector<1x512xi32>
    %c12_i32_141 = arith.constant 12 : i32
    %413 = vector.broadcast %c12_i32_141 : i32 to vector<1x512xi32>
    %414 = arith.cmpi slt, %2, %413 : vector<1x512xi32>
    %415 = arith.andi %412, %414 : vector<1x512xi1>
    %cst_142 = arith.constant 0.000000e+00 : f32
    %416 = vector.shape_cast %415 : vector<1x512xi1> to vector<1x512xi1>
    %417 = vector.broadcast %416 : vector<1x512xi1> to vector<16x512xi1>
    %418 = vector.broadcast %cst_142 : f32 to vector<16x512xf32>
    %419 = arith.select %417, %410, %418 : vector<16x512xi1>, vector<16x512xf32>
    %420 = tpu.concatenate %361, %368, %378, %385, %351, %392, %402, %409, %419 in 0 : vector<16x512xf32>, vector<16x512xf32>, vector<16x512xf32>, vector<16x512xf32>, vector<16x512xf32>, vector<16x512xf32>, vector<16x512xf32>, vector<16x512xf32>, vector<16x512xf32> -> vector<144x512xf32>
    %c32 = arith.constant 32 : index
    %c0_143 = arith.constant 0 : index
    %421 = vector.load %arg1[%c32, %c0_143] : memref<64x147xf32, #tpu.memory_space<vmem>>, vector<8x144xf32>
    %cst_144 = arith.constant dense<0.000000e+00> : vector<8x512xf32>
    %422 = tpu.matmul %421, %420, %cst_144 {dimension_numbers = #tpu.dot_dimension_numbers<[1], [0], [0], [1], [0, 0, 1, 1], [], []>} : vector<8x144xf32>, vector<144x512xf32>, vector<8x512xf32> -> vector<8x512xf32>
    %c32_145 = arith.constant 32 : index
    %c144 = arith.constant 144 : index
    %423 = vector.load %arg1[%c32_145, %c144] : memref<64x147xf32, #tpu.memory_space<vmem>>, vector<8x1xf32>
    %c32_146 = arith.constant 32 : index
    %c145 = arith.constant 145 : index
    %424 = vector.load %arg1[%c32_146, %c145] : memref<64x147xf32, #tpu.memory_space<vmem>>, vector<8x1xf32>
    %c32_147 = arith.constant 32 : index
    %c146 = arith.constant 146 : index
    %425 = vector.load %arg1[%c32_147, %c146] : memref<64x147xf32, #tpu.memory_space<vmem>>, vector<8x1xf32>
    %426 = vector.broadcast %423 : vector<8x1xf32> to vector<8x512xf32>
    %427 = arith.addf %422, %426 : vector<8x512xf32>
    %c3_i32 = arith.constant 3 : i32
    %428 = vector.broadcast %c3_i32 : i32 to vector<1x512xi32>
    %429 = arith.andi %2, %428 : vector<1x512xi32>
    %c0_i32_148 = arith.constant 0 : i32
    %430 = vector.broadcast %c0_i32_148 : i32 to vector<1x512xi32>
    %431 = arith.cmpi eq, %429, %430 : vector<1x512xi32>
    %c3_i32_149 = arith.constant 3 : i32
    %432 = vector.broadcast %c3_i32_149 : i32 to vector<1x512xi32>
    %433 = arith.andi %6, %432 : vector<1x512xi32>
    %c0_i32_150 = arith.constant 0 : i32
    %434 = vector.broadcast %c0_i32_150 : i32 to vector<1x512xi32>
    %435 = arith.cmpi eq, %433, %434 : vector<1x512xi32>
    %436 = arith.andi %431, %435 : vector<1x512xi1>
    %cst_151 = arith.constant 0.000000e+00 : f32
    %437 = vector.shape_cast %436 : vector<1x512xi1> to vector<1x512xi1>
    %438 = vector.broadcast %437 : vector<1x512xi1> to vector<8x512xi1>
    %439 = vector.broadcast %cst_151 : f32 to vector<8x512xf32>
    %440 = arith.select %438, %427, %439 : vector<8x512xi1>, vector<8x512xf32>
    %cst_152 = arith.constant dense<0.000000e+00> : vector<8xf32>
    %441 = vector.multi_reduction <add>, %440, %cst_152 [1] : vector<8x512xf32> to vector<8xf32>
    %442 = vector.shape_cast %441 : vector<8xf32> to vector<8x1xf32>
    %cst_153 = arith.constant 3.125000e-02 : f32
    %443 = vector.broadcast %cst_153 : f32 to vector<8x1xf32>
    %444 = arith.mulf %442, %443 : vector<8x1xf32>
    %445 = vector.broadcast %444 : vector<8x1xf32> to vector<8x512xf32>
    %446 = arith.subf %427, %445 : vector<8x512xf32>
    %447 = arith.mulf %446, %446 : vector<8x512xf32>
    %cst_154 = arith.constant 0.000000e+00 : f32
    %448 = vector.shape_cast %436 : vector<1x512xi1> to vector<1x512xi1>
    %449 = vector.broadcast %448 : vector<1x512xi1> to vector<8x512xi1>
    %450 = vector.broadcast %cst_154 : f32 to vector<8x512xf32>
    %451 = arith.select %449, %447, %450 : vector<8x512xi1>, vector<8x512xf32>
    %cst_155 = arith.constant dense<0.000000e+00> : vector<8xf32>
    %452 = vector.multi_reduction <add>, %451, %cst_155 [1] : vector<8x512xf32> to vector<8xf32>
    %453 = vector.shape_cast %452 : vector<8xf32> to vector<8x1xf32>
    %cst_156 = arith.constant 3.125000e-02 : f32
    %454 = vector.broadcast %cst_156 : f32 to vector<8x1xf32>
    %455 = arith.mulf %453, %454 : vector<8x1xf32>
    %cst_157 = arith.constant 9.99999974E-6 : f32
    %456 = vector.broadcast %cst_157 : f32 to vector<8x1xf32>
    %457 = arith.addf %455, %456 : vector<8x1xf32>
    %458 = math.rsqrt %457 : vector<8x1xf32>
    %459 = vector.broadcast %458 : vector<8x1xf32> to vector<8x512xf32>
    %460 = arith.mulf %446, %459 : vector<8x512xf32>
    %461 = vector.broadcast %424 : vector<8x1xf32> to vector<8x512xf32>
    %462 = arith.mulf %460, %461 : vector<8x512xf32>
    %463 = vector.broadcast %425 : vector<8x1xf32> to vector<8x512xf32>
    %464 = arith.addf %462, %463 : vector<8x512xf32>
    %cst_158 = arith.constant 0.000000e+00 : f32
    %465 = vector.broadcast %cst_158 : f32 to vector<8x512xf32>
    %466 = arith.maximumf %464, %465 : vector<8x512xf32>
    %c2_i32_159 = arith.constant 2 : i32
    %467 = vector.broadcast %c2_i32_159 : i32 to vector<1x512xi32>
    %468 = arith.andi %2, %467 : vector<1x512xi32>
    %c0_i32_160 = arith.constant 0 : i32
    %469 = vector.broadcast %c0_i32_160 : i32 to vector<1x512xi32>
    %470 = arith.cmpi ne, %468, %469 : vector<1x512xi32>
    %c2_i32_161 = arith.constant 2 : i32
    %471 = tpu.dynamic_rotate %466 by %c2_i32_161 dim 1 : vector<8x512xf32>, i32 -> vector<8x512xf32>
    %472 = vector.shape_cast %470 : vector<1x512xi1> to vector<1x512xi1>
    %473 = vector.broadcast %472 : vector<1x512xi1> to vector<8x512xi1>
    %474 = arith.select %473, %471, %466 : vector<8x512xi1>, vector<8x512xf32>
    %c2_i32_162 = arith.constant 2 : i32
    %475 = vector.broadcast %c2_i32_162 : i32 to vector<1x512xi32>
    %476 = arith.andi %6, %475 : vector<1x512xi32>
    %c0_i32_163 = arith.constant 0 : i32
    %477 = vector.broadcast %c0_i32_163 : i32 to vector<1x512xi32>
    %478 = arith.cmpi ne, %476, %477 : vector<1x512xi32>
    %c32_i32_164 = arith.constant 32 : i32
    %479 = tpu.dynamic_rotate %474 by %c32_i32_164 dim 1 : vector<8x512xf32>, i32 -> vector<8x512xf32>
    %480 = vector.shape_cast %478 : vector<1x512xi1> to vector<1x512xi1>
    %481 = vector.broadcast %480 : vector<1x512xi1> to vector<8x512xi1>
    %482 = arith.select %481, %479, %474 : vector<8x512xi1>, vector<8x512xf32>
    %483 = arith.addf %482, %232 : vector<8x512xf32>
    %c34_i32_165 = arith.constant 34 : i32
    %484 = tpu.dynamic_rotate %483 by %c34_i32_165 dim 1 : vector<8x512xf32>, i32 -> vector<8x512xf32>
    %c2_i32_166 = arith.constant 2 : i32
    %485 = vector.broadcast %c2_i32_166 : i32 to vector<1x512xi32>
    %486 = arith.cmpi sge, %6, %485 : vector<1x512xi32>
    %c2_i32_167 = arith.constant 2 : i32
    %487 = vector.broadcast %c2_i32_167 : i32 to vector<1x512xi32>
    %488 = arith.cmpi sge, %2, %487 : vector<1x512xi32>
    %489 = arith.andi %486, %488 : vector<1x512xi1>
    %cst_168 = arith.constant 0.000000e+00 : f32
    %490 = vector.shape_cast %489 : vector<1x512xi1> to vector<1x512xi1>
    %491 = vector.broadcast %490 : vector<1x512xi1> to vector<8x512xi1>
    %492 = vector.broadcast %cst_168 : f32 to vector<8x512xf32>
    %493 = arith.select %491, %484, %492 : vector<8x512xi1>, vector<8x512xf32>
    %c32_i32_169 = arith.constant 32 : i32
    %494 = tpu.dynamic_rotate %483 by %c32_i32_169 dim 1 : vector<8x512xf32>, i32 -> vector<8x512xf32>
    %c2_i32_170 = arith.constant 2 : i32
    %495 = vector.broadcast %c2_i32_170 : i32 to vector<1x512xi32>
    %496 = arith.cmpi sge, %6, %495 : vector<1x512xi32>
    %cst_171 = arith.constant 0.000000e+00 : f32
    %497 = vector.shape_cast %496 : vector<1x512xi1> to vector<1x512xi1>
    %498 = vector.broadcast %497 : vector<1x512xi1> to vector<8x512xi1>
    %499 = vector.broadcast %cst_171 : f32 to vector<8x512xf32>
    %500 = arith.select %498, %494, %499 : vector<8x512xi1>, vector<8x512xf32>
    %c30_i32_172 = arith.constant 30 : i32
    %501 = tpu.dynamic_rotate %483 by %c30_i32_172 dim 1 : vector<8x512xf32>, i32 -> vector<8x512xf32>
    %c2_i32_173 = arith.constant 2 : i32
    %502 = vector.broadcast %c2_i32_173 : i32 to vector<1x512xi32>
    %503 = arith.cmpi sge, %6, %502 : vector<1x512xi32>
    %c14_i32_174 = arith.constant 14 : i32
    %504 = vector.broadcast %c14_i32_174 : i32 to vector<1x512xi32>
    %505 = arith.cmpi slt, %2, %504 : vector<1x512xi32>
    %506 = arith.andi %503, %505 : vector<1x512xi1>
    %cst_175 = arith.constant 0.000000e+00 : f32
    %507 = vector.shape_cast %506 : vector<1x512xi1> to vector<1x512xi1>
    %508 = vector.broadcast %507 : vector<1x512xi1> to vector<8x512xi1>
    %509 = vector.broadcast %cst_175 : f32 to vector<8x512xf32>
    %510 = arith.select %508, %501, %509 : vector<8x512xi1>, vector<8x512xf32>
    %c2_i32_176 = arith.constant 2 : i32
    %511 = tpu.dynamic_rotate %483 by %c2_i32_176 dim 1 : vector<8x512xf32>, i32 -> vector<8x512xf32>
    %c2_i32_177 = arith.constant 2 : i32
    %512 = vector.broadcast %c2_i32_177 : i32 to vector<1x512xi32>
    %513 = arith.cmpi sge, %2, %512 : vector<1x512xi32>
    %cst_178 = arith.constant 0.000000e+00 : f32
    %514 = vector.shape_cast %513 : vector<1x512xi1> to vector<1x512xi1>
    %515 = vector.broadcast %514 : vector<1x512xi1> to vector<8x512xi1>
    %516 = vector.broadcast %cst_178 : f32 to vector<8x512xf32>
    %517 = arith.select %515, %511, %516 : vector<8x512xi1>, vector<8x512xf32>
    %c510_i32_179 = arith.constant 510 : i32
    %518 = tpu.dynamic_rotate %483 by %c510_i32_179 dim 1 : vector<8x512xf32>, i32 -> vector<8x512xf32>
    %c14_i32_180 = arith.constant 14 : i32
    %519 = vector.broadcast %c14_i32_180 : i32 to vector<1x512xi32>
    %520 = arith.cmpi slt, %2, %519 : vector<1x512xi32>
    %cst_181 = arith.constant 0.000000e+00 : f32
    %521 = vector.shape_cast %520 : vector<1x512xi1> to vector<1x512xi1>
    %522 = vector.broadcast %521 : vector<1x512xi1> to vector<8x512xi1>
    %523 = vector.broadcast %cst_181 : f32 to vector<8x512xf32>
    %524 = arith.select %522, %518, %523 : vector<8x512xi1>, vector<8x512xf32>
    %c482_i32_182 = arith.constant 482 : i32
    %525 = tpu.dynamic_rotate %483 by %c482_i32_182 dim 1 : vector<8x512xf32>, i32 -> vector<8x512xf32>
    %c14_i32_183 = arith.constant 14 : i32
    %526 = vector.broadcast %c14_i32_183 : i32 to vector<1x512xi32>
    %527 = arith.cmpi slt, %6, %526 : vector<1x512xi32>
    %c2_i32_184 = arith.constant 2 : i32
    %528 = vector.broadcast %c2_i32_184 : i32 to vector<1x512xi32>
    %529 = arith.cmpi sge, %2, %528 : vector<1x512xi32>
    %530 = arith.andi %527, %529 : vector<1x512xi1>
    %cst_185 = arith.constant 0.000000e+00 : f32
    %531 = vector.shape_cast %530 : vector<1x512xi1> to vector<1x512xi1>
    %532 = vector.broadcast %531 : vector<1x512xi1> to vector<8x512xi1>
    %533 = vector.broadcast %cst_185 : f32 to vector<8x512xf32>
    %534 = arith.select %532, %525, %533 : vector<8x512xi1>, vector<8x512xf32>
    %c480_i32_186 = arith.constant 480 : i32
    %535 = tpu.dynamic_rotate %483 by %c480_i32_186 dim 1 : vector<8x512xf32>, i32 -> vector<8x512xf32>
    %c14_i32_187 = arith.constant 14 : i32
    %536 = vector.broadcast %c14_i32_187 : i32 to vector<1x512xi32>
    %537 = arith.cmpi slt, %6, %536 : vector<1x512xi32>
    %cst_188 = arith.constant 0.000000e+00 : f32
    %538 = vector.shape_cast %537 : vector<1x512xi1> to vector<1x512xi1>
    %539 = vector.broadcast %538 : vector<1x512xi1> to vector<8x512xi1>
    %540 = vector.broadcast %cst_188 : f32 to vector<8x512xf32>
    %541 = arith.select %539, %535, %540 : vector<8x512xi1>, vector<8x512xf32>
    %c478_i32_189 = arith.constant 478 : i32
    %542 = tpu.dynamic_rotate %483 by %c478_i32_189 dim 1 : vector<8x512xf32>, i32 -> vector<8x512xf32>
    %c14_i32_190 = arith.constant 14 : i32
    %543 = vector.broadcast %c14_i32_190 : i32 to vector<1x512xi32>
    %544 = arith.cmpi slt, %6, %543 : vector<1x512xi32>
    %c14_i32_191 = arith.constant 14 : i32
    %545 = vector.broadcast %c14_i32_191 : i32 to vector<1x512xi32>
    %546 = arith.cmpi slt, %2, %545 : vector<1x512xi32>
    %547 = arith.andi %544, %546 : vector<1x512xi1>
    %cst_192 = arith.constant 0.000000e+00 : f32
    %548 = vector.shape_cast %547 : vector<1x512xi1> to vector<1x512xi1>
    %549 = vector.broadcast %548 : vector<1x512xi1> to vector<8x512xi1>
    %550 = vector.broadcast %cst_192 : f32 to vector<8x512xf32>
    %551 = arith.select %549, %542, %550 : vector<8x512xi1>, vector<8x512xf32>
    %552 = tpu.concatenate %493, %500, %510, %517, %483, %524, %534, %541, %551 in 0 : vector<8x512xf32>, vector<8x512xf32>, vector<8x512xf32>, vector<8x512xf32>, vector<8x512xf32>, vector<8x512xf32>, vector<8x512xf32>, vector<8x512xf32>, vector<8x512xf32> -> vector<72x512xf32>
    %c40 = arith.constant 40 : index
    %c0_193 = arith.constant 0 : index
    %553 = vector.load %arg1[%c40, %c0_193] : memref<64x147xf32, #tpu.memory_space<vmem>>, vector<8x72xf32>
    %cst_194 = arith.constant dense<0.000000e+00> : vector<8x512xf32>
    %554 = tpu.matmul %553, %552, %cst_194 {dimension_numbers = #tpu.dot_dimension_numbers<[1], [0], [0], [1], [0, 0, 1, 1], [], []>} : vector<8x72xf32>, vector<72x512xf32>, vector<8x512xf32> -> vector<8x512xf32>
    %c40_195 = arith.constant 40 : index
    %c72_196 = arith.constant 72 : index
    %555 = vector.load %arg1[%c40_195, %c72_196] : memref<64x147xf32, #tpu.memory_space<vmem>>, vector<8x1xf32>
    %c40_197 = arith.constant 40 : index
    %c73_198 = arith.constant 73 : index
    %556 = vector.load %arg1[%c40_197, %c73_198] : memref<64x147xf32, #tpu.memory_space<vmem>>, vector<8x1xf32>
    %c40_199 = arith.constant 40 : index
    %c74_200 = arith.constant 74 : index
    %557 = vector.load %arg1[%c40_199, %c74_200] : memref<64x147xf32, #tpu.memory_space<vmem>>, vector<8x1xf32>
    %558 = vector.broadcast %555 : vector<8x1xf32> to vector<8x512xf32>
    %559 = arith.addf %554, %558 : vector<8x512xf32>
    %c1_i32_201 = arith.constant 1 : i32
    %560 = vector.broadcast %c1_i32_201 : i32 to vector<1x512xi32>
    %561 = arith.andi %2, %560 : vector<1x512xi32>
    %c0_i32_202 = arith.constant 0 : i32
    %562 = vector.broadcast %c0_i32_202 : i32 to vector<1x512xi32>
    %563 = arith.cmpi eq, %561, %562 : vector<1x512xi32>
    %c1_i32_203 = arith.constant 1 : i32
    %564 = vector.broadcast %c1_i32_203 : i32 to vector<1x512xi32>
    %565 = arith.andi %6, %564 : vector<1x512xi32>
    %c0_i32_204 = arith.constant 0 : i32
    %566 = vector.broadcast %c0_i32_204 : i32 to vector<1x512xi32>
    %567 = arith.cmpi eq, %565, %566 : vector<1x512xi32>
    %568 = arith.andi %563, %567 : vector<1x512xi1>
    %cst_205 = arith.constant 0.000000e+00 : f32
    %569 = vector.shape_cast %568 : vector<1x512xi1> to vector<1x512xi1>
    %570 = vector.broadcast %569 : vector<1x512xi1> to vector<8x512xi1>
    %571 = vector.broadcast %cst_205 : f32 to vector<8x512xf32>
    %572 = arith.select %570, %559, %571 : vector<8x512xi1>, vector<8x512xf32>
    %cst_206 = arith.constant dense<0.000000e+00> : vector<8xf32>
    %573 = vector.multi_reduction <add>, %572, %cst_206 [1] : vector<8x512xf32> to vector<8xf32>
    %574 = vector.shape_cast %573 : vector<8xf32> to vector<8x1xf32>
    %cst_207 = arith.constant 7.812500e-03 : f32
    %575 = vector.broadcast %cst_207 : f32 to vector<8x1xf32>
    %576 = arith.mulf %574, %575 : vector<8x1xf32>
    %577 = vector.broadcast %576 : vector<8x1xf32> to vector<8x512xf32>
    %578 = arith.subf %559, %577 : vector<8x512xf32>
    %579 = arith.mulf %578, %578 : vector<8x512xf32>
    %cst_208 = arith.constant 0.000000e+00 : f32
    %580 = vector.shape_cast %568 : vector<1x512xi1> to vector<1x512xi1>
    %581 = vector.broadcast %580 : vector<1x512xi1> to vector<8x512xi1>
    %582 = vector.broadcast %cst_208 : f32 to vector<8x512xf32>
    %583 = arith.select %581, %579, %582 : vector<8x512xi1>, vector<8x512xf32>
    %cst_209 = arith.constant dense<0.000000e+00> : vector<8xf32>
    %584 = vector.multi_reduction <add>, %583, %cst_209 [1] : vector<8x512xf32> to vector<8xf32>
    %585 = vector.shape_cast %584 : vector<8xf32> to vector<8x1xf32>
    %cst_210 = arith.constant 7.812500e-03 : f32
    %586 = vector.broadcast %cst_210 : f32 to vector<8x1xf32>
    %587 = arith.mulf %585, %586 : vector<8x1xf32>
    %cst_211 = arith.constant 9.99999974E-6 : f32
    %588 = vector.broadcast %cst_211 : f32 to vector<8x1xf32>
    %589 = arith.addf %587, %588 : vector<8x1xf32>
    %590 = math.rsqrt %589 : vector<8x1xf32>
    %591 = vector.broadcast %590 : vector<8x1xf32> to vector<8x512xf32>
    %592 = arith.mulf %578, %591 : vector<8x512xf32>
    %593 = vector.broadcast %556 : vector<8x1xf32> to vector<8x512xf32>
    %594 = arith.mulf %592, %593 : vector<8x512xf32>
    %595 = vector.broadcast %557 : vector<8x1xf32> to vector<8x512xf32>
    %596 = arith.addf %594, %595 : vector<8x512xf32>
    %cst_212 = arith.constant 0.000000e+00 : f32
    %597 = vector.broadcast %cst_212 : f32 to vector<8x512xf32>
    %598 = arith.maximumf %596, %597 : vector<8x512xf32>
    %c34_i32_213 = arith.constant 34 : i32
    %599 = tpu.dynamic_rotate %598 by %c34_i32_213 dim 1 : vector<8x512xf32>, i32 -> vector<8x512xf32>
    %c2_i32_214 = arith.constant 2 : i32
    %600 = vector.broadcast %c2_i32_214 : i32 to vector<1x512xi32>
    %601 = arith.cmpi sge, %6, %600 : vector<1x512xi32>
    %c2_i32_215 = arith.constant 2 : i32
    %602 = vector.broadcast %c2_i32_215 : i32 to vector<1x512xi32>
    %603 = arith.cmpi sge, %2, %602 : vector<1x512xi32>
    %604 = arith.andi %601, %603 : vector<1x512xi1>
    %cst_216 = arith.constant 0.000000e+00 : f32
    %605 = vector.shape_cast %604 : vector<1x512xi1> to vector<1x512xi1>
    %606 = vector.broadcast %605 : vector<1x512xi1> to vector<8x512xi1>
    %607 = vector.broadcast %cst_216 : f32 to vector<8x512xf32>
    %608 = arith.select %606, %599, %607 : vector<8x512xi1>, vector<8x512xf32>
    %c32_i32_217 = arith.constant 32 : i32
    %609 = tpu.dynamic_rotate %598 by %c32_i32_217 dim 1 : vector<8x512xf32>, i32 -> vector<8x512xf32>
    %c2_i32_218 = arith.constant 2 : i32
    %610 = vector.broadcast %c2_i32_218 : i32 to vector<1x512xi32>
    %611 = arith.cmpi sge, %6, %610 : vector<1x512xi32>
    %cst_219 = arith.constant 0.000000e+00 : f32
    %612 = vector.shape_cast %611 : vector<1x512xi1> to vector<1x512xi1>
    %613 = vector.broadcast %612 : vector<1x512xi1> to vector<8x512xi1>
    %614 = vector.broadcast %cst_219 : f32 to vector<8x512xf32>
    %615 = arith.select %613, %609, %614 : vector<8x512xi1>, vector<8x512xf32>
    %c30_i32_220 = arith.constant 30 : i32
    %616 = tpu.dynamic_rotate %598 by %c30_i32_220 dim 1 : vector<8x512xf32>, i32 -> vector<8x512xf32>
    %c2_i32_221 = arith.constant 2 : i32
    %617 = vector.broadcast %c2_i32_221 : i32 to vector<1x512xi32>
    %618 = arith.cmpi sge, %6, %617 : vector<1x512xi32>
    %c14_i32_222 = arith.constant 14 : i32
    %619 = vector.broadcast %c14_i32_222 : i32 to vector<1x512xi32>
    %620 = arith.cmpi slt, %2, %619 : vector<1x512xi32>
    %621 = arith.andi %618, %620 : vector<1x512xi1>
    %cst_223 = arith.constant 0.000000e+00 : f32
    %622 = vector.shape_cast %621 : vector<1x512xi1> to vector<1x512xi1>
    %623 = vector.broadcast %622 : vector<1x512xi1> to vector<8x512xi1>
    %624 = vector.broadcast %cst_223 : f32 to vector<8x512xf32>
    %625 = arith.select %623, %616, %624 : vector<8x512xi1>, vector<8x512xf32>
    %c2_i32_224 = arith.constant 2 : i32
    %626 = tpu.dynamic_rotate %598 by %c2_i32_224 dim 1 : vector<8x512xf32>, i32 -> vector<8x512xf32>
    %c2_i32_225 = arith.constant 2 : i32
    %627 = vector.broadcast %c2_i32_225 : i32 to vector<1x512xi32>
    %628 = arith.cmpi sge, %2, %627 : vector<1x512xi32>
    %cst_226 = arith.constant 0.000000e+00 : f32
    %629 = vector.shape_cast %628 : vector<1x512xi1> to vector<1x512xi1>
    %630 = vector.broadcast %629 : vector<1x512xi1> to vector<8x512xi1>
    %631 = vector.broadcast %cst_226 : f32 to vector<8x512xf32>
    %632 = arith.select %630, %626, %631 : vector<8x512xi1>, vector<8x512xf32>
    %c510_i32_227 = arith.constant 510 : i32
    %633 = tpu.dynamic_rotate %598 by %c510_i32_227 dim 1 : vector<8x512xf32>, i32 -> vector<8x512xf32>
    %c14_i32_228 = arith.constant 14 : i32
    %634 = vector.broadcast %c14_i32_228 : i32 to vector<1x512xi32>
    %635 = arith.cmpi slt, %2, %634 : vector<1x512xi32>
    %cst_229 = arith.constant 0.000000e+00 : f32
    %636 = vector.shape_cast %635 : vector<1x512xi1> to vector<1x512xi1>
    %637 = vector.broadcast %636 : vector<1x512xi1> to vector<8x512xi1>
    %638 = vector.broadcast %cst_229 : f32 to vector<8x512xf32>
    %639 = arith.select %637, %633, %638 : vector<8x512xi1>, vector<8x512xf32>
    %c482_i32_230 = arith.constant 482 : i32
    %640 = tpu.dynamic_rotate %598 by %c482_i32_230 dim 1 : vector<8x512xf32>, i32 -> vector<8x512xf32>
    %c14_i32_231 = arith.constant 14 : i32
    %641 = vector.broadcast %c14_i32_231 : i32 to vector<1x512xi32>
    %642 = arith.cmpi slt, %6, %641 : vector<1x512xi32>
    %c2_i32_232 = arith.constant 2 : i32
    %643 = vector.broadcast %c2_i32_232 : i32 to vector<1x512xi32>
    %644 = arith.cmpi sge, %2, %643 : vector<1x512xi32>
    %645 = arith.andi %642, %644 : vector<1x512xi1>
    %cst_233 = arith.constant 0.000000e+00 : f32
    %646 = vector.shape_cast %645 : vector<1x512xi1> to vector<1x512xi1>
    %647 = vector.broadcast %646 : vector<1x512xi1> to vector<8x512xi1>
    %648 = vector.broadcast %cst_233 : f32 to vector<8x512xf32>
    %649 = arith.select %647, %640, %648 : vector<8x512xi1>, vector<8x512xf32>
    %c480_i32_234 = arith.constant 480 : i32
    %650 = tpu.dynamic_rotate %598 by %c480_i32_234 dim 1 : vector<8x512xf32>, i32 -> vector<8x512xf32>
    %c14_i32_235 = arith.constant 14 : i32
    %651 = vector.broadcast %c14_i32_235 : i32 to vector<1x512xi32>
    %652 = arith.cmpi slt, %6, %651 : vector<1x512xi32>
    %cst_236 = arith.constant 0.000000e+00 : f32
    %653 = vector.shape_cast %652 : vector<1x512xi1> to vector<1x512xi1>
    %654 = vector.broadcast %653 : vector<1x512xi1> to vector<8x512xi1>
    %655 = vector.broadcast %cst_236 : f32 to vector<8x512xf32>
    %656 = arith.select %654, %650, %655 : vector<8x512xi1>, vector<8x512xf32>
    %c478_i32_237 = arith.constant 478 : i32
    %657 = tpu.dynamic_rotate %598 by %c478_i32_237 dim 1 : vector<8x512xf32>, i32 -> vector<8x512xf32>
    %c14_i32_238 = arith.constant 14 : i32
    %658 = vector.broadcast %c14_i32_238 : i32 to vector<1x512xi32>
    %659 = arith.cmpi slt, %6, %658 : vector<1x512xi32>
    %c14_i32_239 = arith.constant 14 : i32
    %660 = vector.broadcast %c14_i32_239 : i32 to vector<1x512xi32>
    %661 = arith.cmpi slt, %2, %660 : vector<1x512xi32>
    %662 = arith.andi %659, %661 : vector<1x512xi1>
    %cst_240 = arith.constant 0.000000e+00 : f32
    %663 = vector.shape_cast %662 : vector<1x512xi1> to vector<1x512xi1>
    %664 = vector.broadcast %663 : vector<1x512xi1> to vector<8x512xi1>
    %665 = vector.broadcast %cst_240 : f32 to vector<8x512xf32>
    %666 = arith.select %664, %657, %665 : vector<8x512xi1>, vector<8x512xf32>
    %667 = tpu.concatenate %608, %615, %625, %632, %598, %639, %649, %656, %666 in 0 : vector<8x512xf32>, vector<8x512xf32>, vector<8x512xf32>, vector<8x512xf32>, vector<8x512xf32>, vector<8x512xf32>, vector<8x512xf32>, vector<8x512xf32>, vector<8x512xf32> -> vector<72x512xf32>
    %c40_241 = arith.constant 40 : index
    %c0_242 = arith.constant 0 : index
    %668 = vector.load %arg1[%c40_241, %c0_242] : memref<64x147xf32, #tpu.memory_space<vmem>>, vector<8x72xf32>
    %cst_243 = arith.constant dense<0.000000e+00> : vector<8x512xf32>
    %669 = tpu.matmul %668, %667, %cst_243 {dimension_numbers = #tpu.dot_dimension_numbers<[1], [0], [0], [1], [0, 0, 1, 1], [], []>} : vector<8x72xf32>, vector<72x512xf32>, vector<8x512xf32> -> vector<8x512xf32>
    %c40_244 = arith.constant 40 : index
    %c72_245 = arith.constant 72 : index
    %670 = vector.load %arg1[%c40_244, %c72_245] : memref<64x147xf32, #tpu.memory_space<vmem>>, vector<8x1xf32>
    %c40_246 = arith.constant 40 : index
    %c73_247 = arith.constant 73 : index
    %671 = vector.load %arg1[%c40_246, %c73_247] : memref<64x147xf32, #tpu.memory_space<vmem>>, vector<8x1xf32>
    %c40_248 = arith.constant 40 : index
    %c74_249 = arith.constant 74 : index
    %672 = vector.load %arg1[%c40_248, %c74_249] : memref<64x147xf32, #tpu.memory_space<vmem>>, vector<8x1xf32>
    %673 = vector.broadcast %670 : vector<8x1xf32> to vector<8x512xf32>
    %674 = arith.addf %669, %673 : vector<8x512xf32>
    %c1_i32_250 = arith.constant 1 : i32
    %675 = vector.broadcast %c1_i32_250 : i32 to vector<1x512xi32>
    %676 = arith.andi %2, %675 : vector<1x512xi32>
    %c0_i32_251 = arith.constant 0 : i32
    %677 = vector.broadcast %c0_i32_251 : i32 to vector<1x512xi32>
    %678 = arith.cmpi eq, %676, %677 : vector<1x512xi32>
    %c1_i32_252 = arith.constant 1 : i32
    %679 = vector.broadcast %c1_i32_252 : i32 to vector<1x512xi32>
    %680 = arith.andi %6, %679 : vector<1x512xi32>
    %c0_i32_253 = arith.constant 0 : i32
    %681 = vector.broadcast %c0_i32_253 : i32 to vector<1x512xi32>
    %682 = arith.cmpi eq, %680, %681 : vector<1x512xi32>
    %683 = arith.andi %678, %682 : vector<1x512xi1>
    %cst_254 = arith.constant 0.000000e+00 : f32
    %684 = vector.shape_cast %683 : vector<1x512xi1> to vector<1x512xi1>
    %685 = vector.broadcast %684 : vector<1x512xi1> to vector<8x512xi1>
    %686 = vector.broadcast %cst_254 : f32 to vector<8x512xf32>
    %687 = arith.select %685, %674, %686 : vector<8x512xi1>, vector<8x512xf32>
    %cst_255 = arith.constant dense<0.000000e+00> : vector<8xf32>
    %688 = vector.multi_reduction <add>, %687, %cst_255 [1] : vector<8x512xf32> to vector<8xf32>
    %689 = vector.shape_cast %688 : vector<8xf32> to vector<8x1xf32>
    %cst_256 = arith.constant 7.812500e-03 : f32
    %690 = vector.broadcast %cst_256 : f32 to vector<8x1xf32>
    %691 = arith.mulf %689, %690 : vector<8x1xf32>
    %692 = vector.broadcast %691 : vector<8x1xf32> to vector<8x512xf32>
    %693 = arith.subf %674, %692 : vector<8x512xf32>
    %694 = arith.mulf %693, %693 : vector<8x512xf32>
    %cst_257 = arith.constant 0.000000e+00 : f32
    %695 = vector.shape_cast %683 : vector<1x512xi1> to vector<1x512xi1>
    %696 = vector.broadcast %695 : vector<1x512xi1> to vector<8x512xi1>
    %697 = vector.broadcast %cst_257 : f32 to vector<8x512xf32>
    %698 = arith.select %696, %694, %697 : vector<8x512xi1>, vector<8x512xf32>
    %cst_258 = arith.constant dense<0.000000e+00> : vector<8xf32>
    %699 = vector.multi_reduction <add>, %698, %cst_258 [1] : vector<8x512xf32> to vector<8xf32>
    %700 = vector.shape_cast %699 : vector<8xf32> to vector<8x1xf32>
    %cst_259 = arith.constant 7.812500e-03 : f32
    %701 = vector.broadcast %cst_259 : f32 to vector<8x1xf32>
    %702 = arith.mulf %700, %701 : vector<8x1xf32>
    %cst_260 = arith.constant 9.99999974E-6 : f32
    %703 = vector.broadcast %cst_260 : f32 to vector<8x1xf32>
    %704 = arith.addf %702, %703 : vector<8x1xf32>
    %705 = math.rsqrt %704 : vector<8x1xf32>
    %706 = vector.broadcast %705 : vector<8x1xf32> to vector<8x512xf32>
    %707 = arith.mulf %693, %706 : vector<8x512xf32>
    %708 = vector.broadcast %671 : vector<8x1xf32> to vector<8x512xf32>
    %709 = arith.mulf %707, %708 : vector<8x512xf32>
    %710 = vector.broadcast %672 : vector<8x1xf32> to vector<8x512xf32>
    %711 = arith.addf %709, %710 : vector<8x512xf32>
    %cst_261 = arith.constant 0.000000e+00 : f32
    %712 = vector.broadcast %cst_261 : f32 to vector<8x512xf32>
    %713 = arith.maximumf %711, %712 : vector<8x512xf32>
    %c1_i32_262 = arith.constant 1 : i32
    %714 = vector.broadcast %c1_i32_262 : i32 to vector<1x512xi32>
    %715 = arith.andi %2, %714 : vector<1x512xi32>
    %c0_i32_263 = arith.constant 0 : i32
    %716 = vector.broadcast %c0_i32_263 : i32 to vector<1x512xi32>
    %717 = arith.cmpi ne, %715, %716 : vector<1x512xi32>
    %c1_i32_264 = arith.constant 1 : i32
    %718 = tpu.dynamic_rotate %713 by %c1_i32_264 dim 1 : vector<8x512xf32>, i32 -> vector<8x512xf32>
    %719 = vector.shape_cast %717 : vector<1x512xi1> to vector<1x512xi1>
    %720 = vector.broadcast %719 : vector<1x512xi1> to vector<8x512xi1>
    %721 = arith.select %720, %718, %713 : vector<8x512xi1>, vector<8x512xf32>
    %c1_i32_265 = arith.constant 1 : i32
    %722 = vector.broadcast %c1_i32_265 : i32 to vector<1x512xi32>
    %723 = arith.andi %6, %722 : vector<1x512xi32>
    %c0_i32_266 = arith.constant 0 : i32
    %724 = vector.broadcast %c0_i32_266 : i32 to vector<1x512xi32>
    %725 = arith.cmpi ne, %723, %724 : vector<1x512xi32>
    %c16_i32_267 = arith.constant 16 : i32
    %726 = tpu.dynamic_rotate %721 by %c16_i32_267 dim 1 : vector<8x512xf32>, i32 -> vector<8x512xf32>
    %727 = vector.shape_cast %725 : vector<1x512xi1> to vector<1x512xi1>
    %728 = vector.broadcast %727 : vector<1x512xi1> to vector<8x512xi1>
    %729 = arith.select %728, %726, %721 : vector<8x512xi1>, vector<8x512xf32>
    %730 = vector.broadcast %7 : vector<1x512xf32> to vector<8x512xf32>
    %731 = arith.addf %729, %730 : vector<8x512xf32>
    %c17_i32_268 = arith.constant 17 : i32
    %732 = tpu.dynamic_rotate %731 by %c17_i32_268 dim 1 : vector<8x512xf32>, i32 -> vector<8x512xf32>
    %c1_i32_269 = arith.constant 1 : i32
    %733 = vector.broadcast %c1_i32_269 : i32 to vector<1x512xi32>
    %734 = arith.cmpi sge, %6, %733 : vector<1x512xi32>
    %c1_i32_270 = arith.constant 1 : i32
    %735 = vector.broadcast %c1_i32_270 : i32 to vector<1x512xi32>
    %736 = arith.cmpi sge, %2, %735 : vector<1x512xi32>
    %737 = arith.andi %734, %736 : vector<1x512xi1>
    %cst_271 = arith.constant 0.000000e+00 : f32
    %738 = vector.shape_cast %737 : vector<1x512xi1> to vector<1x512xi1>
    %739 = vector.broadcast %738 : vector<1x512xi1> to vector<8x512xi1>
    %740 = vector.broadcast %cst_271 : f32 to vector<8x512xf32>
    %741 = arith.select %739, %732, %740 : vector<8x512xi1>, vector<8x512xf32>
    %c16_i32_272 = arith.constant 16 : i32
    %742 = tpu.dynamic_rotate %731 by %c16_i32_272 dim 1 : vector<8x512xf32>, i32 -> vector<8x512xf32>
    %c1_i32_273 = arith.constant 1 : i32
    %743 = vector.broadcast %c1_i32_273 : i32 to vector<1x512xi32>
    %744 = arith.cmpi sge, %6, %743 : vector<1x512xi32>
    %cst_274 = arith.constant 0.000000e+00 : f32
    %745 = vector.shape_cast %744 : vector<1x512xi1> to vector<1x512xi1>
    %746 = vector.broadcast %745 : vector<1x512xi1> to vector<8x512xi1>
    %747 = vector.broadcast %cst_274 : f32 to vector<8x512xf32>
    %748 = arith.select %746, %742, %747 : vector<8x512xi1>, vector<8x512xf32>
    %c15_i32_275 = arith.constant 15 : i32
    %749 = tpu.dynamic_rotate %731 by %c15_i32_275 dim 1 : vector<8x512xf32>, i32 -> vector<8x512xf32>
    %c1_i32_276 = arith.constant 1 : i32
    %750 = vector.broadcast %c1_i32_276 : i32 to vector<1x512xi32>
    %751 = arith.cmpi sge, %6, %750 : vector<1x512xi32>
    %c15_i32_277 = arith.constant 15 : i32
    %752 = vector.broadcast %c15_i32_277 : i32 to vector<1x512xi32>
    %753 = arith.cmpi slt, %2, %752 : vector<1x512xi32>
    %754 = arith.andi %751, %753 : vector<1x512xi1>
    %cst_278 = arith.constant 0.000000e+00 : f32
    %755 = vector.shape_cast %754 : vector<1x512xi1> to vector<1x512xi1>
    %756 = vector.broadcast %755 : vector<1x512xi1> to vector<8x512xi1>
    %757 = vector.broadcast %cst_278 : f32 to vector<8x512xf32>
    %758 = arith.select %756, %749, %757 : vector<8x512xi1>, vector<8x512xf32>
    %c1_i32_279 = arith.constant 1 : i32
    %759 = tpu.dynamic_rotate %731 by %c1_i32_279 dim 1 : vector<8x512xf32>, i32 -> vector<8x512xf32>
    %c1_i32_280 = arith.constant 1 : i32
    %760 = vector.broadcast %c1_i32_280 : i32 to vector<1x512xi32>
    %761 = arith.cmpi sge, %2, %760 : vector<1x512xi32>
    %cst_281 = arith.constant 0.000000e+00 : f32
    %762 = vector.shape_cast %761 : vector<1x512xi1> to vector<1x512xi1>
    %763 = vector.broadcast %762 : vector<1x512xi1> to vector<8x512xi1>
    %764 = vector.broadcast %cst_281 : f32 to vector<8x512xf32>
    %765 = arith.select %763, %759, %764 : vector<8x512xi1>, vector<8x512xf32>
    %c511_i32_282 = arith.constant 511 : i32
    %766 = tpu.dynamic_rotate %731 by %c511_i32_282 dim 1 : vector<8x512xf32>, i32 -> vector<8x512xf32>
    %c15_i32_283 = arith.constant 15 : i32
    %767 = vector.broadcast %c15_i32_283 : i32 to vector<1x512xi32>
    %768 = arith.cmpi slt, %2, %767 : vector<1x512xi32>
    %cst_284 = arith.constant 0.000000e+00 : f32
    %769 = vector.shape_cast %768 : vector<1x512xi1> to vector<1x512xi1>
    %770 = vector.broadcast %769 : vector<1x512xi1> to vector<8x512xi1>
    %771 = vector.broadcast %cst_284 : f32 to vector<8x512xf32>
    %772 = arith.select %770, %766, %771 : vector<8x512xi1>, vector<8x512xf32>
    %c497_i32_285 = arith.constant 497 : i32
    %773 = tpu.dynamic_rotate %731 by %c497_i32_285 dim 1 : vector<8x512xf32>, i32 -> vector<8x512xf32>
    %c15_i32_286 = arith.constant 15 : i32
    %774 = vector.broadcast %c15_i32_286 : i32 to vector<1x512xi32>
    %775 = arith.cmpi slt, %6, %774 : vector<1x512xi32>
    %c1_i32_287 = arith.constant 1 : i32
    %776 = vector.broadcast %c1_i32_287 : i32 to vector<1x512xi32>
    %777 = arith.cmpi sge, %2, %776 : vector<1x512xi32>
    %778 = arith.andi %775, %777 : vector<1x512xi1>
    %cst_288 = arith.constant 0.000000e+00 : f32
    %779 = vector.shape_cast %778 : vector<1x512xi1> to vector<1x512xi1>
    %780 = vector.broadcast %779 : vector<1x512xi1> to vector<8x512xi1>
    %781 = vector.broadcast %cst_288 : f32 to vector<8x512xf32>
    %782 = arith.select %780, %773, %781 : vector<8x512xi1>, vector<8x512xf32>
    %c496_i32_289 = arith.constant 496 : i32
    %783 = tpu.dynamic_rotate %731 by %c496_i32_289 dim 1 : vector<8x512xf32>, i32 -> vector<8x512xf32>
    %c15_i32_290 = arith.constant 15 : i32
    %784 = vector.broadcast %c15_i32_290 : i32 to vector<1x512xi32>
    %785 = arith.cmpi slt, %6, %784 : vector<1x512xi32>
    %cst_291 = arith.constant 0.000000e+00 : f32
    %786 = vector.shape_cast %785 : vector<1x512xi1> to vector<1x512xi1>
    %787 = vector.broadcast %786 : vector<1x512xi1> to vector<8x512xi1>
    %788 = vector.broadcast %cst_291 : f32 to vector<8x512xf32>
    %789 = arith.select %787, %783, %788 : vector<8x512xi1>, vector<8x512xf32>
    %c495_i32_292 = arith.constant 495 : i32
    %790 = tpu.dynamic_rotate %731 by %c495_i32_292 dim 1 : vector<8x512xf32>, i32 -> vector<8x512xf32>
    %c15_i32_293 = arith.constant 15 : i32
    %791 = vector.broadcast %c15_i32_293 : i32 to vector<1x512xi32>
    %792 = arith.cmpi slt, %6, %791 : vector<1x512xi32>
    %c15_i32_294 = arith.constant 15 : i32
    %793 = vector.broadcast %c15_i32_294 : i32 to vector<1x512xi32>
    %794 = arith.cmpi slt, %2, %793 : vector<1x512xi32>
    %795 = arith.andi %792, %794 : vector<1x512xi1>
    %cst_295 = arith.constant 0.000000e+00 : f32
    %796 = vector.shape_cast %795 : vector<1x512xi1> to vector<1x512xi1>
    %797 = vector.broadcast %796 : vector<1x512xi1> to vector<8x512xi1>
    %798 = vector.broadcast %cst_295 : f32 to vector<8x512xf32>
    %799 = arith.select %797, %790, %798 : vector<8x512xi1>, vector<8x512xf32>
    %800 = tpu.concatenate %741, %748, %758, %765, %731, %772, %782, %789, %799 in 0 : vector<8x512xf32>, vector<8x512xf32>, vector<8x512xf32>, vector<8x512xf32>, vector<8x512xf32>, vector<8x512xf32>, vector<8x512xf32>, vector<8x512xf32>, vector<8x512xf32> -> vector<72x512xf32>
    %c48 = arith.constant 48 : index
    %c0_296 = arith.constant 0 : index
    %801 = vector.load %arg1[%c48, %c0_296] : memref<64x147xf32, #tpu.memory_space<vmem>>, vector<8x72xf32>
    %cst_297 = arith.constant dense<0.000000e+00> : vector<8x512xf32>
    %802 = tpu.matmul %801, %800, %cst_297 {dimension_numbers = #tpu.dot_dimension_numbers<[1], [0], [0], [1], [0, 0, 1, 1], [], []>} : vector<8x72xf32>, vector<72x512xf32>, vector<8x512xf32> -> vector<8x512xf32>
    %c48_298 = arith.constant 48 : index
    %c72_299 = arith.constant 72 : index
    %803 = vector.load %arg1[%c48_298, %c72_299] : memref<64x147xf32, #tpu.memory_space<vmem>>, vector<8x1xf32>
    %c48_300 = arith.constant 48 : index
    %c73_301 = arith.constant 73 : index
    %804 = vector.load %arg1[%c48_300, %c73_301] : memref<64x147xf32, #tpu.memory_space<vmem>>, vector<8x1xf32>
    %c48_302 = arith.constant 48 : index
    %c74_303 = arith.constant 74 : index
    %805 = vector.load %arg1[%c48_302, %c74_303] : memref<64x147xf32, #tpu.memory_space<vmem>>, vector<8x1xf32>
    %806 = vector.broadcast %803 : vector<8x1xf32> to vector<8x512xf32>
    %807 = arith.addf %802, %806 : vector<8x512xf32>
    %cst_304 = arith.constant dense<0.000000e+00> : vector<8xf32>
    %808 = vector.multi_reduction <add>, %807, %cst_304 [1] : vector<8x512xf32> to vector<8xf32>
    %809 = vector.shape_cast %808 : vector<8xf32> to vector<8x1xf32>
    %cst_305 = arith.constant 0.001953125 : f32
    %810 = vector.broadcast %cst_305 : f32 to vector<8x1xf32>
    %811 = arith.mulf %809, %810 : vector<8x1xf32>
    %812 = vector.broadcast %811 : vector<8x1xf32> to vector<8x512xf32>
    %813 = arith.subf %807, %812 : vector<8x512xf32>
    %814 = arith.mulf %813, %813 : vector<8x512xf32>
    %cst_306 = arith.constant dense<0.000000e+00> : vector<8xf32>
    %815 = vector.multi_reduction <add>, %814, %cst_306 [1] : vector<8x512xf32> to vector<8xf32>
    %816 = vector.shape_cast %815 : vector<8xf32> to vector<8x1xf32>
    %cst_307 = arith.constant 0.001953125 : f32
    %817 = vector.broadcast %cst_307 : f32 to vector<8x1xf32>
    %818 = arith.mulf %816, %817 : vector<8x1xf32>
    %cst_308 = arith.constant 9.99999974E-6 : f32
    %819 = vector.broadcast %cst_308 : f32 to vector<8x1xf32>
    %820 = arith.addf %818, %819 : vector<8x1xf32>
    %821 = math.rsqrt %820 : vector<8x1xf32>
    %822 = vector.broadcast %821 : vector<8x1xf32> to vector<8x512xf32>
    %823 = arith.mulf %813, %822 : vector<8x512xf32>
    %824 = vector.broadcast %804 : vector<8x1xf32> to vector<8x512xf32>
    %825 = arith.mulf %823, %824 : vector<8x512xf32>
    %826 = vector.broadcast %805 : vector<8x1xf32> to vector<8x512xf32>
    %827 = arith.addf %825, %826 : vector<8x512xf32>
    %cst_309 = arith.constant 0.000000e+00 : f32
    %828 = vector.broadcast %cst_309 : f32 to vector<8x512xf32>
    %829 = arith.maximumf %827, %828 : vector<8x512xf32>
    %c17_i32_310 = arith.constant 17 : i32
    %830 = tpu.dynamic_rotate %829 by %c17_i32_310 dim 1 : vector<8x512xf32>, i32 -> vector<8x512xf32>
    %c1_i32_311 = arith.constant 1 : i32
    %831 = vector.broadcast %c1_i32_311 : i32 to vector<1x512xi32>
    %832 = arith.cmpi sge, %6, %831 : vector<1x512xi32>
    %c1_i32_312 = arith.constant 1 : i32
    %833 = vector.broadcast %c1_i32_312 : i32 to vector<1x512xi32>
    %834 = arith.cmpi sge, %2, %833 : vector<1x512xi32>
    %835 = arith.andi %832, %834 : vector<1x512xi1>
    %cst_313 = arith.constant 0.000000e+00 : f32
    %836 = vector.shape_cast %835 : vector<1x512xi1> to vector<1x512xi1>
    %837 = vector.broadcast %836 : vector<1x512xi1> to vector<8x512xi1>
    %838 = vector.broadcast %cst_313 : f32 to vector<8x512xf32>
    %839 = arith.select %837, %830, %838 : vector<8x512xi1>, vector<8x512xf32>
    %c16_i32_314 = arith.constant 16 : i32
    %840 = tpu.dynamic_rotate %829 by %c16_i32_314 dim 1 : vector<8x512xf32>, i32 -> vector<8x512xf32>
    %c1_i32_315 = arith.constant 1 : i32
    %841 = vector.broadcast %c1_i32_315 : i32 to vector<1x512xi32>
    %842 = arith.cmpi sge, %6, %841 : vector<1x512xi32>
    %cst_316 = arith.constant 0.000000e+00 : f32
    %843 = vector.shape_cast %842 : vector<1x512xi1> to vector<1x512xi1>
    %844 = vector.broadcast %843 : vector<1x512xi1> to vector<8x512xi1>
    %845 = vector.broadcast %cst_316 : f32 to vector<8x512xf32>
    %846 = arith.select %844, %840, %845 : vector<8x512xi1>, vector<8x512xf32>
    %c15_i32_317 = arith.constant 15 : i32
    %847 = tpu.dynamic_rotate %829 by %c15_i32_317 dim 1 : vector<8x512xf32>, i32 -> vector<8x512xf32>
    %c1_i32_318 = arith.constant 1 : i32
    %848 = vector.broadcast %c1_i32_318 : i32 to vector<1x512xi32>
    %849 = arith.cmpi sge, %6, %848 : vector<1x512xi32>
    %c15_i32_319 = arith.constant 15 : i32
    %850 = vector.broadcast %c15_i32_319 : i32 to vector<1x512xi32>
    %851 = arith.cmpi slt, %2, %850 : vector<1x512xi32>
    %852 = arith.andi %849, %851 : vector<1x512xi1>
    %cst_320 = arith.constant 0.000000e+00 : f32
    %853 = vector.shape_cast %852 : vector<1x512xi1> to vector<1x512xi1>
    %854 = vector.broadcast %853 : vector<1x512xi1> to vector<8x512xi1>
    %855 = vector.broadcast %cst_320 : f32 to vector<8x512xf32>
    %856 = arith.select %854, %847, %855 : vector<8x512xi1>, vector<8x512xf32>
    %c1_i32_321 = arith.constant 1 : i32
    %857 = tpu.dynamic_rotate %829 by %c1_i32_321 dim 1 : vector<8x512xf32>, i32 -> vector<8x512xf32>
    %c1_i32_322 = arith.constant 1 : i32
    %858 = vector.broadcast %c1_i32_322 : i32 to vector<1x512xi32>
    %859 = arith.cmpi sge, %2, %858 : vector<1x512xi32>
    %cst_323 = arith.constant 0.000000e+00 : f32
    %860 = vector.shape_cast %859 : vector<1x512xi1> to vector<1x512xi1>
    %861 = vector.broadcast %860 : vector<1x512xi1> to vector<8x512xi1>
    %862 = vector.broadcast %cst_323 : f32 to vector<8x512xf32>
    %863 = arith.select %861, %857, %862 : vector<8x512xi1>, vector<8x512xf32>
    %c511_i32_324 = arith.constant 511 : i32
    %864 = tpu.dynamic_rotate %829 by %c511_i32_324 dim 1 : vector<8x512xf32>, i32 -> vector<8x512xf32>
    %c15_i32_325 = arith.constant 15 : i32
    %865 = vector.broadcast %c15_i32_325 : i32 to vector<1x512xi32>
    %866 = arith.cmpi slt, %2, %865 : vector<1x512xi32>
    %cst_326 = arith.constant 0.000000e+00 : f32
    %867 = vector.shape_cast %866 : vector<1x512xi1> to vector<1x512xi1>
    %868 = vector.broadcast %867 : vector<1x512xi1> to vector<8x512xi1>
    %869 = vector.broadcast %cst_326 : f32 to vector<8x512xf32>
    %870 = arith.select %868, %864, %869 : vector<8x512xi1>, vector<8x512xf32>
    %c497_i32_327 = arith.constant 497 : i32
    %871 = tpu.dynamic_rotate %829 by %c497_i32_327 dim 1 : vector<8x512xf32>, i32 -> vector<8x512xf32>
    %c15_i32_328 = arith.constant 15 : i32
    %872 = vector.broadcast %c15_i32_328 : i32 to vector<1x512xi32>
    %873 = arith.cmpi slt, %6, %872 : vector<1x512xi32>
    %c1_i32_329 = arith.constant 1 : i32
    %874 = vector.broadcast %c1_i32_329 : i32 to vector<1x512xi32>
    %875 = arith.cmpi sge, %2, %874 : vector<1x512xi32>
    %876 = arith.andi %873, %875 : vector<1x512xi1>
    %cst_330 = arith.constant 0.000000e+00 : f32
    %877 = vector.shape_cast %876 : vector<1x512xi1> to vector<1x512xi1>
    %878 = vector.broadcast %877 : vector<1x512xi1> to vector<8x512xi1>
    %879 = vector.broadcast %cst_330 : f32 to vector<8x512xf32>
    %880 = arith.select %878, %871, %879 : vector<8x512xi1>, vector<8x512xf32>
    %c496_i32_331 = arith.constant 496 : i32
    %881 = tpu.dynamic_rotate %829 by %c496_i32_331 dim 1 : vector<8x512xf32>, i32 -> vector<8x512xf32>
    %c15_i32_332 = arith.constant 15 : i32
    %882 = vector.broadcast %c15_i32_332 : i32 to vector<1x512xi32>
    %883 = arith.cmpi slt, %6, %882 : vector<1x512xi32>
    %cst_333 = arith.constant 0.000000e+00 : f32
    %884 = vector.shape_cast %883 : vector<1x512xi1> to vector<1x512xi1>
    %885 = vector.broadcast %884 : vector<1x512xi1> to vector<8x512xi1>
    %886 = vector.broadcast %cst_333 : f32 to vector<8x512xf32>
    %887 = arith.select %885, %881, %886 : vector<8x512xi1>, vector<8x512xf32>
    %c495_i32_334 = arith.constant 495 : i32
    %888 = tpu.dynamic_rotate %829 by %c495_i32_334 dim 1 : vector<8x512xf32>, i32 -> vector<8x512xf32>
    %c15_i32_335 = arith.constant 15 : i32
    %889 = vector.broadcast %c15_i32_335 : i32 to vector<1x512xi32>
    %890 = arith.cmpi slt, %6, %889 : vector<1x512xi32>
    %c15_i32_336 = arith.constant 15 : i32
    %891 = vector.broadcast %c15_i32_336 : i32 to vector<1x512xi32>
    %892 = arith.cmpi slt, %2, %891 : vector<1x512xi32>
    %893 = arith.andi %890, %892 : vector<1x512xi1>
    %cst_337 = arith.constant 0.000000e+00 : f32
    %894 = vector.shape_cast %893 : vector<1x512xi1> to vector<1x512xi1>
    %895 = vector.broadcast %894 : vector<1x512xi1> to vector<8x512xi1>
    %896 = vector.broadcast %cst_337 : f32 to vector<8x512xf32>
    %897 = arith.select %895, %888, %896 : vector<8x512xi1>, vector<8x512xf32>
    %898 = tpu.concatenate %839, %846, %856, %863, %829, %870, %880, %887, %897 in 0 : vector<8x512xf32>, vector<8x512xf32>, vector<8x512xf32>, vector<8x512xf32>, vector<8x512xf32>, vector<8x512xf32>, vector<8x512xf32>, vector<8x512xf32>, vector<8x512xf32> -> vector<72x512xf32>
    %c48_338 = arith.constant 48 : index
    %c0_339 = arith.constant 0 : index
    %899 = vector.load %arg1[%c48_338, %c0_339] : memref<64x147xf32, #tpu.memory_space<vmem>>, vector<8x72xf32>
    %cst_340 = arith.constant dense<0.000000e+00> : vector<8x512xf32>
    %900 = tpu.matmul %899, %898, %cst_340 {dimension_numbers = #tpu.dot_dimension_numbers<[1], [0], [0], [1], [0, 0, 1, 1], [], []>} : vector<8x72xf32>, vector<72x512xf32>, vector<8x512xf32> -> vector<8x512xf32>
    %c48_341 = arith.constant 48 : index
    %c72_342 = arith.constant 72 : index
    %901 = vector.load %arg1[%c48_341, %c72_342] : memref<64x147xf32, #tpu.memory_space<vmem>>, vector<8x1xf32>
    %c48_343 = arith.constant 48 : index
    %c73_344 = arith.constant 73 : index
    %902 = vector.load %arg1[%c48_343, %c73_344] : memref<64x147xf32, #tpu.memory_space<vmem>>, vector<8x1xf32>
    %c48_345 = arith.constant 48 : index
    %c74_346 = arith.constant 74 : index
    %903 = vector.load %arg1[%c48_345, %c74_346] : memref<64x147xf32, #tpu.memory_space<vmem>>, vector<8x1xf32>
    %904 = vector.broadcast %901 : vector<8x1xf32> to vector<8x512xf32>
    %905 = arith.addf %900, %904 : vector<8x512xf32>
    %cst_347 = arith.constant dense<0.000000e+00> : vector<8xf32>
    %906 = vector.multi_reduction <add>, %905, %cst_347 [1] : vector<8x512xf32> to vector<8xf32>
    %907 = vector.shape_cast %906 : vector<8xf32> to vector<8x1xf32>
    %cst_348 = arith.constant 0.001953125 : f32
    %908 = vector.broadcast %cst_348 : f32 to vector<8x1xf32>
    %909 = arith.mulf %907, %908 : vector<8x1xf32>
    %910 = vector.broadcast %909 : vector<8x1xf32> to vector<8x512xf32>
    %911 = arith.subf %905, %910 : vector<8x512xf32>
    %912 = arith.mulf %911, %911 : vector<8x512xf32>
    %cst_349 = arith.constant dense<0.000000e+00> : vector<8xf32>
    %913 = vector.multi_reduction <add>, %912, %cst_349 [1] : vector<8x512xf32> to vector<8xf32>
    %914 = vector.shape_cast %913 : vector<8xf32> to vector<8x1xf32>
    %cst_350 = arith.constant 0.001953125 : f32
    %915 = vector.broadcast %cst_350 : f32 to vector<8x1xf32>
    %916 = arith.mulf %914, %915 : vector<8x1xf32>
    %cst_351 = arith.constant 9.99999974E-6 : f32
    %917 = vector.broadcast %cst_351 : f32 to vector<8x1xf32>
    %918 = arith.addf %916, %917 : vector<8x1xf32>
    %919 = math.rsqrt %918 : vector<8x1xf32>
    %920 = vector.broadcast %919 : vector<8x1xf32> to vector<8x512xf32>
    %921 = arith.mulf %911, %920 : vector<8x512xf32>
    %922 = vector.broadcast %902 : vector<8x1xf32> to vector<8x512xf32>
    %923 = arith.mulf %921, %922 : vector<8x512xf32>
    %924 = vector.broadcast %903 : vector<8x1xf32> to vector<8x512xf32>
    %925 = arith.addf %923, %924 : vector<8x512xf32>
    %cst_352 = arith.constant 0.000000e+00 : f32
    %926 = vector.broadcast %cst_352 : f32 to vector<8x512xf32>
    %927 = arith.maximumf %925, %926 : vector<8x512xf32>
    %c56 = arith.constant 56 : index
    %c0_353 = arith.constant 0 : index
    %928 = vector.load %arg1[%c56, %c0_353] : memref<64x147xf32, #tpu.memory_space<vmem>>, vector<8x1xf32>
    %c56_354 = arith.constant 56 : index
    %c1_355 = arith.constant 1 : index
    %929 = vector.load %arg1[%c56_354, %c1_355] : memref<64x147xf32, #tpu.memory_space<vmem>>, vector<1x1xf32>
    %930 = vector.broadcast %928 : vector<8x1xf32> to vector<8x512xf32>
    %931 = arith.mulf %927, %930 : vector<8x512xf32>
    %cst_356 = arith.constant dense<0.000000e+00> : vector<512xf32>
    %932 = vector.multi_reduction <add>, %931, %cst_356 [0] : vector<8x512xf32> to vector<512xf32>
    %933 = vector.shape_cast %932 : vector<512xf32> to vector<1x512xf32>
    %934 = vector.broadcast %929 : vector<1x1xf32> to vector<1x512xf32>
    %935 = arith.addf %933, %934 : vector<1x512xf32>
    %c0_357 = arith.constant 0 : index
    %c0_358 = arith.constant 0 : index
    %936 = vector.load %arg2[%c0_357, %c0_358] : memref<1x512xf32, #tpu.memory_space<vmem>>, vector<1x512xf32>
    tpu.vector_store %arg2[%c0_357, %c0_358], %935 {strides = array<i32>} : memref<1x512xf32, #tpu.memory_space<vmem>>, vector<1x512xf32>,
    return
  }
}

</mosaic_0001>

<llo_original>
// kernel: _lambda_.1
$region0: #{_lambda_.1}
  #allocation0 [shape = 'u32[]', space=smem, size = 0x4, offset = 0x4, fixed_abs, tag = 'smem constant byte address 0x4 - core index']
  #allocation1 [shape = 'u32[144,128]{1,0:T(1,128)}', space=vmem, size = 0x12000, scoped, tag = 'internal scratch']
  %s0 = inlined_call_operand.vmem [shape: f32[1,512], index: 0, kind: input, shape index: {}]
  %s1 = inlined_call_operand.hbm [shape: f32[64,147], index: 1, kind: input, shape index: {}]
  %s2 = inlined_call_operand.vmem [shape: f32[1,512], index: 2, kind: output, shape index: {}]
  %s3 = sld [smem:[#allocation0]]
  $region22: #{_lambda_.1} parent=0
    _
  %s5 = ssub.s32 1, %s3
  %s6 = scalar_select 0, %s5, %s3
  $region1: #{_lambda_.1} parent=0
    #allocation2 [shape = 'u8[65536]{0}', space=vmem, size = 0x10000, scoped, tag = 'input window, operand 1, single buffered']
    #allocation3 [shape = 's32[1]{0}', space=sflag, size = 0x4, scoped, tag = 'scoped memory for _lambda_.1']
    %7 = vsyncpa [#allocation3], 0
    // Predicated region
    $region2: #{_lambda_.1} parent=1 // pred_check
      _
    $region3: #{_lambda_.1} parent=1 // pred_check_branch
      %9 = sbr.rel (0) target = $region5
    $region4: #{_lambda_.1} parent=1 // pred_region
      _
    $region5: #{_lambda_.1} parent=1 // pred_fallthru
      _
    // Predicated region
    $region6: #{_lambda_.1} parent=1 // pred_check
      _
    $region7: #{_lambda_.1} parent=1 // pred_check_branch
      %11 = sbr.rel (0) target = $region9
    $region8: #{_lambda_.1} parent=1 // pred_region
      %s13 = ssub.s32 2048, 2048
      %14 = vsyncadd [#allocation3], %s13
      %s15 = sshll.u32 [#allocation2], 4
      %s16 = int_to_ptr.vmem [resolvable:$true] %s15
      %21 = dma.hbm_to_vmem [thread:$0]  %s1, 2048, %s16, [#allocation3], 256, 256, 16
    $region9: #{_lambda_.1} parent=1 // pred_fallthru
      _
    // Predicated region
    $region10: #{_lambda_.1} parent=1 // pred_check
      _
    $region11: #{_lambda_.1} parent=1 // pred_check_branch
      %23 = sbr.rel (0) target = $region13
    $region12: #{_lambda_.1} parent=1 // pred_region
      %24 = dma.done [#allocation3], 2048
    $region13: #{_lambda_.1} parent=1 // pred_fallthru
      _
    %v25 = vlaneseq
    %v26 = vand.u32 %v25, 127
    %v27 = vadd.s32 %v26, 128
    %v28 = vadd.s32 %v26, 256
    %v29 = vadd.s32 %v26, 384
    %v30 = vand.u32 %v26, 15
    %v31 = vand.u32 %v27, 15
    %v32 = vand.u32 %v28, 15
    %v33 = vand.u32 %v29, 15
    %v34 = vshra.s32 %v26, 4
    %v35 = vshra.s32 %v27, 4
    %v36 = vshra.s32 %v28, 4
    %v37 = vshra.s32 %v29, 4
    %v38 = vand.u32 %v34, 15
    %v39 = vand.u32 %v35, 15
    %v40 = vand.u32 %v36, 15
    %v41 = vand.u32 %v37, 15
    %v42 = vld [vmem:[%s0] sm:$0xf]
    %v44 = vlaneseq
    %v45 = vshrl.u32 %v44, 7
    %v46 = vsub.s32 0, %v45
    %v47 = vrot.slane %v42, %v46
    %v48 = vlaneseq
    %v49 = vshrl.u32 %v48, 7
    %v50 = vsub.s32 1, %v49
    %v51 = vrot.slane %v42, %v50
    %v52 = vlaneseq
    %v53 = vshrl.u32 %v52, 7
    %v54 = vsub.s32 2, %v53
    %v55 = vrot.slane %v42, %v54
    %v56 = vlaneseq
    %v57 = vshrl.u32 %v56, 7
    %v58 = vsub.s32 3, %v57
    %v59 = vrot.slane %v42, %v58
    %64 = vrot.lane.b32.xlu0 %v47, 17
    %v65 = vpop.permute.xlu0 %64
    %66 = vrot.lane.b32.xlu0 %v51, 17
    %v67 = vpop.permute.xlu0 %66
    %68 = vrot.lane.b32.xlu0 %v55, 17
    %v69 = vpop.permute.xlu0 %68
    %70 = vrot.lane.b32.xlu0 %v59, 17
    %v71 = vpop.permute.xlu0 %70
    %vm72 = vcmp.lt.s32.totalorder %v26, 17
    %v73 = vsel %vm72, %v69, %v71
    %v74 = vsel %vm72, %v67, %v69
    %v75 = vsel %vm72, %v65, %v67
    %v76 = vsel %vm72, %v71, %v65
    %vm77 = vcmp.ge.s32.totalorder %v38, 1
    %vm78 = vcmp.ge.s32.totalorder %v39, 1
    %vm79 = vcmp.ge.s32.totalorder %v40, 1
    %vm80 = vcmp.ge.s32.totalorder %v41, 1
    %vm81 = vcmp.ge.s32.totalorder %v30, 1
    %vm82 = vcmp.ge.s32.totalorder %v31, 1
    %vm83 = vcmp.ge.s32.totalorder %v32, 1
    %vm84 = vcmp.ge.s32.totalorder %v33, 1
    %vm85 = vmand %vm77, %vm81
    %vm86 = vmand %vm78, %vm82
    %vm87 = vmand %vm79, %vm83
    %vm88 = vmand %vm80, %vm84
    %v89 = vsel %vm85, %v76, 0.0
    %v90 = vsel %vm86, %v75, 0.0
    %v91 = vsel %vm87, %v74, 0.0
    %v92 = vsel %vm88, %v73, 0.0
    %v93 = vld [vmem:[#allocation2] sm:$0xff]
    %95 = vset.pattern.permute.xlu0 0
    %96 = vperm.xlu0 %95, %v93
    %v97 = vpop.permute.xlu0 %96
    %v99 = vlaneseq
    %v100 = vshrl.u32 %v99, 7
    %v101 = vsub.s32 0, %v100
    %v102 = vrot.slane %v89, %v101
    %v103 = vlaneseq
    %v104 = vshrl.u32 %v103, 7
    %v105 = vsub.s32 0, %v104
    %v106 = vrot.slane %v90, %v105
    %v107 = vlaneseq
    %v108 = vshrl.u32 %v107, 7
    %v109 = vsub.s32 0, %v108
    %v110 = vrot.slane %v91, %v109
    %v111 = vlaneseq
    %v112 = vshrl.u32 %v111, 7
    %v113 = vsub.s32 0, %v112
    %v114 = vrot.slane %v92, %v113
    %v115 = vmul.f32 %v97, %v102
    %v116 = vmul.f32 %v97, %v106
    %v117 = vmul.f32 %v97, %v110
    %v118 = vmul.f32 %v97, %v114
    %119 = vrot.lane.b32.xlu0 %v47, 16
    %v120 = vpop.permute.xlu0 %119
    %121 = vrot.lane.b32.xlu0 %v51, 16
    %v122 = vpop.permute.xlu0 %121
    %123 = vrot.lane.b32.xlu0 %v55, 16
    %v124 = vpop.permute.xlu0 %123
    %125 = vrot.lane.b32.xlu0 %v59, 16
    %v126 = vpop.permute.xlu0 %125
    %vm127 = vcmp.lt.s32.totalorder %v26, 16
    %v128 = vsel %vm127, %v124, %v126
    %v129 = vsel %vm127, %v122, %v124
    %v130 = vsel %vm127, %v120, %v122
    %v131 = vsel %vm127, %v126, %v120
    %v132 = vsel %vm77, %v131, 0.0
    %v133 = vsel %vm78, %v130, 0.0
    %v134 = vsel %vm79, %v129, 0.0
    %v135 = vsel %vm80, %v128, 0.0
    %136 = vset.pattern.permute.xlu0 1
    %137 = vperm.xlu0 %136, %v93
    %v138 = vpop.permute.xlu0 %137
    %v140 = vlaneseq
    %v141 = vshrl.u32 %v140, 7
    %v142 = vsub.s32 0, %v141
    %v143 = vrot.slane %v132, %v142
    %v144 = vlaneseq
    %v145 = vshrl.u32 %v144, 7
    %v146 = vsub.s32 0, %v145
    %v147 = vrot.slane %v133, %v146
    %v148 = vlaneseq
    %v149 = vshrl.u32 %v148, 7
    %v150 = vsub.s32 0, %v149
    %v151 = vrot.slane %v134, %v150
    %v152 = vlaneseq
    %v153 = vshrl.u32 %v152, 7
    %v154 = vsub.s32 0, %v153
    %v155 = vrot.slane %v135, %v154
    %v156 = vmul.f32 %v138, %v143
    %v157 = vmul.f32 %v138, %v147
    %v158 = vmul.f32 %v138, %v151
    %v159 = vmul.f32 %v138, %v155
    %v160 = vadd.f32 %v115, %v156
    %v161 = vadd.f32 %v116, %v157
    %v162 = vadd.f32 %v117, %v158
    %v163 = vadd.f32 %v118, %v159
    %164 = vrot.lane.b32.xlu0 %v47, 15
    %v165 = vpop.permute.xlu0 %164
    %166 = vrot.lane.b32.xlu0 %v51, 15
    %v167 = vpop.permute.xlu0 %166
    %168 = vrot.lane.b32.xlu0 %v55, 15
    %v169 = vpop.permute.xlu0 %168
    %170 = vrot.lane.b32.xlu0 %v59, 15
    %v171 = vpop.permute.xlu0 %170
    %vm172 = vcmp.lt.s32.totalorder %v26, 15
    %v173 = vsel %vm172, %v169, %v171
    %v174 = vsel %vm172, %v167, %v169
    %v175 = vsel %vm172, %v165, %v167
    %v176 = vsel %vm172, %v171, %v165
    %vm177 = vcmp.lt.s32.totalorder %v30, 15
    %vm178 = vcmp.lt.s32.totalorder %v31, 15
    %vm179 = vcmp.lt.s32.totalorder %v32, 15
    %vm180 = vcmp.lt.s32.totalorder %v33, 15
    %vm181 = vmand %vm77, %vm177
    %vm182 = vmand %vm78, %vm178
    %vm183 = vmand %vm79, %vm179
    %vm184 = vmand %vm80, %vm180
    %v185 = vsel %vm181, %v176, 0.0
    %v186 = vsel %vm182, %v175, 0.0
    %v187 = vsel %vm183, %v174, 0.0
    %v188 = vsel %vm184, %v173, 0.0
    %189 = vset.pattern.permute.xlu0 2
    %190 = vperm.xlu0 %189, %v93
    %v191 = vpop.permute.xlu0 %190
    %v193 = vlaneseq
    %v194 = vshrl.u32 %v193, 7
    %v195 = vsub.s32 0, %v194
    %v196 = vrot.slane %v185, %v195
    %v197 = vlaneseq
    %v198 = vshrl.u32 %v197, 7
    %v199 = vsub.s32 0, %v198
    %v200 = vrot.slane %v186, %v199
    %v201 = vlaneseq
    %v202 = vshrl.u32 %v201, 7
    %v203 = vsub.s32 0, %v202
    %v204 = vrot.slane %v187, %v203
    %v205 = vlaneseq
    %v206 = vshrl.u32 %v205, 7
    %v207 = vsub.s32 0, %v206
    %v208 = vrot.slane %v188, %v207
    %v209 = vmul.f32 %v191, %v196
    %v210 = vmul.f32 %v191, %v200
    %v211 = vmul.f32 %v191, %v204
    %v212 = vmul.f32 %v191, %v208
    %v213 = vadd.f32 %v160, %v209
    %v214 = vadd.f32 %v161, %v210
    %v215 = vadd.f32 %v162, %v211
    %v216 = vadd.f32 %v163, %v212
    %217 = vrot.lane.b32.xlu0 %v47, 1
    %v218 = vpop.permute.xlu0 %217
    %219 = vrot.lane.b32.xlu0 %v51, 1
    %v220 = vpop.permute.xlu0 %219
    %221 = vrot.lane.b32.xlu0 %v55, 1
    %v222 = vpop.permute.xlu0 %221
    %223 = vrot.lane.b32.xlu0 %v59, 1
    %v224 = vpop.permute.xlu0 %223
    %vm225 = vcmp.lt.s32.totalorder %v26, 1
    %v226 = vsel %vm225, %v222, %v224
    %v227 = vsel %vm225, %v220, %v222
    %v228 = vsel %vm225, %v218, %v220
    %v229 = vsel %vm225, %v224, %v218
    %v230 = vsel %vm81, %v229, 0.0
    %v231 = vsel %vm82, %v228, 0.0
    %v232 = vsel %vm83, %v227, 0.0
    %v233 = vsel %vm84, %v226, 0.0
    %234 = vset.pattern.permute.xlu0 3
    %235 = vperm.xlu0 %234, %v93
    %v236 = vpop.permute.xlu0 %235
    %v238 = vlaneseq
    %v239 = vshrl.u32 %v238, 7
    %v240 = vsub.s32 0, %v239
    %v241 = vrot.slane %v230, %v240
    %v242 = vlaneseq
    %v243 = vshrl.u32 %v242, 7
    %v244 = vsub.s32 0, %v243
    %v245 = vrot.slane %v231, %v244
    %v246 = vlaneseq
    %v247 = vshrl.u32 %v246, 7
    %v248 = vsub.s32 0, %v247
    %v249 = vrot.slane %v232, %v248
    %v250 = vlaneseq
    %v251 = vshrl.u32 %v250, 7
    %v252 = vsub.s32 0, %v251
    %v253 = vrot.slane %v233, %v252
    %v254 = vmul.f32 %v236, %v241
    %v255 = vmul.f32 %v236, %v245
    %v256 = vmul.f32 %v236, %v249
    %v257 = vmul.f32 %v236, %v253
    %v258 = vadd.f32 %v213, %v254
    %v259 = vadd.f32 %v214, %v255
    %v260 = vadd.f32 %v215, %v256
    %v261 = vadd.f32 %v216, %v257
    %262 = vset.pattern.permute.xlu0 4
    %263 = vperm.xlu0 %262, %v93
    %v264 = vpop.permute.xlu0 %263
    %v266 = vmul.f32 %v264, %v47
    %v267 = vmul.f32 %v264, %v51
    %v268 = vmul.f32 %v264, %v55
    %v269 = vmul.f32 %v264, %v59
    %v270 = vadd.f32 %v258, %v266
    %v271 = vadd.f32 %v259, %v267
    %v272 = vadd.f32 %v260, %v268
    %v273 = vadd.f32 %v261, %v269
    %274 = vrot.lane.b32.xlu0 %v47, 127
    %v275 = vpop.permute.xlu0 %274
    %276 = vrot.lane.b32.xlu0 %v51, 127
    %v277 = vpop.permute.xlu0 %276
    %278 = vrot.lane.b32.xlu0 %v55, 127
    %v279 = vpop.permute.xlu0 %278
    %280 = vrot.lane.b32.xlu0 %v59, 127
    %v281 = vpop.permute.xlu0 %280
    %vm282 = vcmp.lt.s32.totalorder %v26, 127
    %v283 = vsel %vm282, %v279, %v281
    %v284 = vsel %vm282, %v277, %v279
    %v285 = vsel %vm282, %v275, %v277
    %v286 = vsel %vm282, %v281, %v275
    %v287 = vsel %vm177, %v285, 0.0
    %v288 = vsel %vm178, %v284, 0.0
    %v289 = vsel %vm179, %v283, 0.0
    %v290 = vsel %vm180, %v286, 0.0
    %291 = vset.pattern.permute.xlu0 5
    %292 = vperm.xlu0 %291, %v93
    %v293 = vpop.permute.xlu0 %292
    %v295 = vlaneseq
    %v296 = vshrl.u32 %v295, 7
    %v297 = vsub.s32 0, %v296
    %v298 = vrot.slane %v287, %v297
    %v299 = vlaneseq
    %v300 = vshrl.u32 %v299, 7
    %v301 = vsub.s32 0, %v300
    %v302 = vrot.slane %v288, %v301
    %v303 = vlaneseq
    %v304 = vshrl.u32 %v303, 7
    %v305 = vsub.s32 0, %v304
    %v306 = vrot.slane %v289, %v305
    %v307 = vlaneseq
    %v308 = vshrl.u32 %v307, 7
    %v309 = vsub.s32 0, %v308
    %v310 = vrot.slane %v290, %v309
    %v311 = vmul.f32 %v293, %v298
    %v312 = vmul.f32 %v293, %v302
    %v313 = vmul.f32 %v293, %v306
    %v314 = vmul.f32 %v293, %v310
    %v315 = vadd.f32 %v270, %v311
    %v316 = vadd.f32 %v271, %v312
    %v317 = vadd.f32 %v272, %v313
    %v318 = vadd.f32 %v273, %v314
    %319 = vrot.lane.b32.xlu0 %v47, 113
    %v320 = vpop.permute.xlu0 %319
    %321 = vrot.lane.b32.xlu0 %v51, 113
    %v322 = vpop.permute.xlu0 %321
    %323 = vrot.lane.b32.xlu0 %v55, 113
    %v324 = vpop.permute.xlu0 %323
    %325 = vrot.lane.b32.xlu0 %v59, 113
    %v326 = vpop.permute.xlu0 %325
    %vm327 = vcmp.lt.s32.totalorder %v26, 113
    %v328 = vsel %vm327, %v324, %v326
    %v329 = vsel %vm327, %v322, %v324
    %v330 = vsel %vm327, %v320, %v322
    %v331 = vsel %vm327, %v326, %v320
    %vm332 = vcmp.lt.s32.totalorder %v38, 15
    %vm333 = vcmp.lt.s32.totalorder %v39, 15
    %vm334 = vcmp.lt.s32.totalorder %v40, 15
    %vm335 = vcmp.lt.s32.totalorder %v41, 15
    %vm336 = vmand %vm332, %vm81
    %vm337 = vmand %vm333, %vm82
    %vm338 = vmand %vm334, %vm83
    %vm339 = vmand %vm335, %vm84
    %v340 = vsel %vm336, %v330, 0.0
    %v341 = vsel %vm337, %v329, 0.0
    %v342 = vsel %vm338, %v328, 0.0
    %v343 = vsel %vm339, %v331, 0.0
    %344 = vset.pattern.permute.xlu0 6
    %345 = vperm.xlu0 %344, %v93
    %v346 = vpop.permute.xlu0 %345
    %v348 = vlaneseq
    %v349 = vshrl.u32 %v348, 7
    %v350 = vsub.s32 0, %v349
    %v351 = vrot.slane %v340, %v350
    %v352 = vlaneseq
    %v353 = vshrl.u32 %v352, 7
    %v354 = vsub.s32 0, %v353
    %v355 = vrot.slane %v341, %v354
    %v356 = vlaneseq
    %v357 = vshrl.u32 %v356, 7
    %v358 = vsub.s32 0, %v357
    %v359 = vrot.slane %v342, %v358
    %v360 = vlaneseq
    %v361 = vshrl.u32 %v360, 7
    %v362 = vsub.s32 0, %v361
    %v363 = vrot.slane %v343, %v362
    %v364 = vmul.f32 %v346, %v351
    %v365 = vmul.f32 %v346, %v355
    %v366 = vmul.f32 %v346, %v359
    %v367 = vmul.f32 %v346, %v363
    %v368 = vadd.f32 %v315, %v364
    %v369 = vadd.f32 %v316, %v365
    %v370 = vadd.f32 %v317, %v366
    %v371 = vadd.f32 %v318, %v367
    %372 = vrot.lane.b32.xlu0 %v47, 112
    %v373 = vpop.permute.xlu0 %372
    %374 = vrot.lane.b32.xlu0 %v51, 112
    %v375 = vpop.permute.xlu0 %374
    %376 = vrot.lane.b32.xlu0 %v55, 112
    %v377 = vpop.permute.xlu0 %376
    %378 = vrot.lane.b32.xlu0 %v59, 112
    %v379 = vpop.permute.xlu0 %378
    %vm380 = vcmp.lt.s32.totalorder %v26, 112
    %v381 = vsel %vm380, %v377, %v379
    %v382 = vsel %vm380, %v375, %v377
    %v383 = vsel %vm380, %v373, %v375
    %v384 = vsel %vm380, %v379, %v373
    %v385 = vsel %vm332, %v383, 0.0
    %v386 = vsel %vm333, %v382, 0.0
    %v387 = vsel %vm334, %v381, 0.0
    %v388 = vsel %vm335, %v384, 0.0
    %389 = vset.pattern.permute.xlu0 7
    %390 = vperm.xlu0 %389, %v93
    %v391 = vpop.permute.xlu0 %390
    %v393 = vlaneseq
    %v394 = vshrl.u32 %v393, 7
    %v395 = vsub.s32 0, %v394
    %v396 = vrot.slane %v385, %v395
    %v397 = vlaneseq
    %v398 = vshrl.u32 %v397, 7
    %v399 = vsub.s32 0, %v398
    %v400 = vrot.slane %v386, %v399
    %v401 = vlaneseq
    %v402 = vshrl.u32 %v401, 7
    %v403 = vsub.s32 0, %v402
    %v404 = vrot.slane %v387, %v403
    %v405 = vlaneseq
    %v406 = vshrl.u32 %v405, 7
    %v407 = vsub.s32 0, %v406
    %v408 = vrot.slane %v388, %v407
    %v409 = vmul.f32 %v391, %v396
    %v410 = vmul.f32 %v391, %v400
    %v411 = vmul.f32 %v391, %v404
    %v412 = vmul.f32 %v391, %v408
    %v413 = vadd.f32 %v368, %v409
    %v414 = vadd.f32 %v369, %v410
    %v415 = vadd.f32 %v370, %v411
    %v416 = vadd.f32 %v371, %v412
    %417 = vrot.lane.b32.xlu0 %v47, 111
    %v418 = vpop.permute.xlu0 %417
    %419 = vrot.lane.b32.xlu0 %v51, 111
    %v420 = vpop.permute.xlu0 %419
    %421 = vrot.lane.b32.xlu0 %v55, 111
    %v422 = vpop.permute.xlu0 %421
    %423 = vrot.lane.b32.xlu0 %v59, 111
    %v424 = vpop.permute.xlu0 %423
    %vm425 = vcmp.lt.s32.totalorder %v26, 111
    %v426 = vsel %vm425, %v422, %v424
    %v427 = vsel %vm425, %v420, %v422
    %v428 = vsel %vm425, %v418, %v420
    %v429 = vsel %vm425, %v424, %v418
    %vm430 = vmand %vm332, %vm177
    %vm431 = vmand %vm333, %vm178
    %vm432 = vmand %vm334, %vm179
    %vm433 = vmand %vm335, %vm180
    %v434 = vsel %vm430, %v428, 0.0
    %v435 = vsel %vm431, %v427, 0.0
    %v436 = vsel %vm432, %v426, 0.0
    %v437 = vsel %vm433, %v429, 0.0
    %438 = vset.pattern.permute.xlu0 8
    %439 = vperm.xlu0 %438, %v93
    %v440 = vpop.permute.xlu0 %439
    %v442 = vlaneseq
    %v443 = vshrl.u32 %v442, 7
    %v444 = vsub.s32 0, %v443
    %v445 = vrot.slane %v434, %v444
    %v446 = vlaneseq
    %v447 = vshrl.u32 %v446, 7
    %v448 = vsub.s32 0, %v447
    %v449 = vrot.slane %v435, %v448
    %v450 = vlaneseq
    %v451 = vshrl.u32 %v450, 7
    %v452 = vsub.s32 0, %v451
    %v453 = vrot.slane %v436, %v452
    %v454 = vlaneseq
    %v455 = vshrl.u32 %v454, 7
    %v456 = vsub.s32 0, %v455
    %v457 = vrot.slane %v437, %v456
    %v458 = vmul.f32 %v440, %v445
    %v459 = vmul.f32 %v440, %v449
    %v460 = vmul.f32 %v440, %v453
    %v461 = vmul.f32 %v440, %v457
    %v462 = vadd.f32 %v413, %v458
    %v463 = vadd.f32 %v414, %v459
    %v464 = vadd.f32 %v415, %v460
    %v465 = vadd.f32 %v416, %v461
    %466 = vset.pattern.permute.xlu0 9
    %467 = vperm.xlu0 %466, %v93
    %v468 = vpop.permute.xlu0 %467
    %v470 = vadd.f32 %v462, %v468
    %v471 = vadd.f32 %v463, %v468
    %v472 = vadd.f32 %v464, %v468
    %v473 = vadd.f32 %v465, %v468
    %v474 = vadd.f32 %v470, %v471
    %v475 = vadd.f32 %v474, %v472
    %v476 = vadd.f32 %v475, %v473
    %477 = vadd.xlane.f32.xlu0 %v476
    %v478 = vpop.xlane.xlu0 %477
    %v479 = vmul.f32 %v478, 0.001953125
    %v480 = vsub.f32 %v470, %v479
    %v481 = vsub.f32 %v471, %v479
    %v482 = vsub.f32 %v472, %v479
    %v483 = vsub.f32 %v473, %v479
    %v484 = vmul.f32 %v480, %v480
    %v485 = vmul.f32 %v481, %v481
    %v486 = vmul.f32 %v482, %v482
    %v487 = vmul.f32 %v483, %v483
    %v488 = vadd.f32 %v484, %v485
    %v489 = vadd.f32 %v488, %v486
    %v490 = vadd.f32 %v489, %v487
    %491 = vadd.xlane.f32.xlu0 %v490
    %v492 = vpop.xlane.xlu0 %491
    %v493 = vmul.f32 %v492, 0.001953125
    %v494 = vadd.f32 %v493, 1e-05
    %v495 = vrsqrt.pop %v494
    %v496 = vmul.f32 %v480, %v495
    %v497 = vmul.f32 %v481, %v495
    %v498 = vmul.f32 %v482, %v495
    %v499 = vmul.f32 %v483, %v495
    %500 = vset.pattern.permute.xlu0 10
    %501 = vperm.xlu0 %500, %v93
    %v502 = vpop.permute.xlu0 %501
    %v504 = vmul.f32 %v496, %v502
    %v505 = vmul.f32 %v497, %v502
    %v506 = vmul.f32 %v498, %v502
    %v507 = vmul.f32 %v499, %v502
    %508 = vset.pattern.permute.xlu0 11
    %509 = vperm.xlu0 %508, %v93
    %v510 = vpop.permute.xlu0 %509
    %v512 = vadd.f32 %v504, %v510
    %v513 = vadd.f32 %v505, %v510
    %v514 = vadd.f32 %v506, %v510
    %v515 = vadd.f32 %v507, %v510
    %v516 = vmax.f32 %v512, 0.0
    %v517 = vmax.f32 %v513, 0.0
    %v518 = vmax.f32 %v514, 0.0
    %v519 = vmax.f32 %v515, 0.0
    %520 = vrot.lane.b32.xlu0 %v516, 17
    %v521 = vpop.permute.xlu0 %520
    %522 = vrot.lane.b32.xlu0 %v517, 17
    %v523 = vpop.permute.xlu0 %522
    %524 = vrot.lane.b32.xlu0 %v518, 17
    %v525 = vpop.permute.xlu0 %524
    %526 = vrot.lane.b32.xlu0 %v519, 17
    %v527 = vpop.permute.xlu0 %526
    %v528 = vsel %vm72, %v525, %v527
    %v529 = vsel %vm72, %v523, %v525
    %v530 = vsel %vm72, %v521, %v523
    %v531 = vsel %vm72, %v527, %v521
    %v532 = vsel %vm85, 1, 0
    %v533 = vsel %vm86, 1, 0
    %v534 = vsel %vm87, 1, 0
    %v535 = vsel %vm88, 1, 0
    %vm536 = vcmp.eq.s32.totalorder %v532, 1
    %vm537 = vcmp.eq.s32.totalorder %v533, 1
    %vm538 = vcmp.eq.s32.totalorder %v534, 1
    %vm539 = vcmp.eq.s32.totalorder %v535, 1
    %v540 = vsel %vm536, %v531, 0.0
    %v541 = vsel %vm537, %v530, 0.0
    %v542 = vsel %vm538, %v529, 0.0
    %v543 = vsel %vm539, %v528, 0.0
    %544 = vrot.lane.b32.xlu0 %v516, 16
    %v545 = vpop.permute.xlu0 %544
    %546 = vrot.lane.b32.xlu0 %v517, 16
    %v547 = vpop.permute.xlu0 %546
    %548 = vrot.lane.b32.xlu0 %v518, 16
    %v549 = vpop.permute.xlu0 %548
    %550 = vrot.lane.b32.xlu0 %v519, 16
    %v551 = vpop.permute.xlu0 %550
    %v552 = vsel %vm127, %v549, %v551
    %v553 = vsel %vm127, %v547, %v549
    %v554 = vsel %vm127, %v545, %v547
    %v555 = vsel %vm127, %v551, %v545
    %v556 = vsel %vm77, 1, 0
    %v557 = vsel %vm78, 1, 0
    %v558 = vsel %vm79, 1, 0
    %v559 = vsel %vm80, 1, 0
    %vm560 = vcmp.eq.s32.totalorder %v556, 1
    %vm561 = vcmp.eq.s32.totalorder %v557, 1
    %vm562 = vcmp.eq.s32.totalorder %v558, 1
    %vm563 = vcmp.eq.s32.totalorder %v559, 1
    %v564 = vsel %vm560, %v555, 0.0
    %v565 = vsel %vm561, %v554, 0.0
    %v566 = vsel %vm562, %v553, 0.0
    %v567 = vsel %vm563, %v552, 0.0
    %568 = vrot.lane.b32.xlu0 %v516, 15
    %v569 = vpop.permute.xlu0 %568
    %570 = vrot.lane.b32.xlu0 %v517, 15
    %v571 = vpop.permute.xlu0 %570
    %572 = vrot.lane.b32.xlu0 %v518, 15
    %v573 = vpop.permute.xlu0 %572
    %574 = vrot.lane.b32.xlu0 %v519, 15
    %v575 = vpop.permute.xlu0 %574
    %v576 = vsel %vm172, %v573, %v575
    %v577 = vsel %vm172, %v571, %v573
    %v578 = vsel %vm172, %v569, %v571
    %v579 = vsel %vm172, %v575, %v569
    %v580 = vsel %vm181, 1, 0
    %v581 = vsel %vm182, 1, 0
    %v582 = vsel %vm183, 1, 0
    %v583 = vsel %vm184, 1, 0
    %vm584 = vcmp.eq.s32.totalorder %v580, 1
    %vm585 = vcmp.eq.s32.totalorder %v581, 1
    %vm586 = vcmp.eq.s32.totalorder %v582, 1
    %vm587 = vcmp.eq.s32.totalorder %v583, 1
    %v588 = vsel %vm584, %v579, 0.0
    %v589 = vsel %vm585, %v578, 0.0
    %v590 = vsel %vm586, %v577, 0.0
    %v591 = vsel %vm587, %v576, 0.0
    %592 = vrot.lane.b32.xlu0 %v516, 1
    %v593 = vpop.permute.xlu0 %592
    %594 = vrot.lane.b32.xlu0 %v517, 1
    %v595 = vpop.permute.xlu0 %594
    %596 = vrot.lane.b32.xlu0 %v518, 1
    %v597 = vpop.permute.xlu0 %596
    %598 = vrot.lane.b32.xlu0 %v519, 1
    %v599 = vpop.permute.xlu0 %598
    %v600 = vsel %vm225, %v597, %v599
    %v601 = vsel %vm225, %v595, %v597
    %v602 = vsel %vm225, %v593, %v595
    %v603 = vsel %vm225, %v599, %v593
    %v604 = vsel %vm81, 1, 0
    %v605 = vsel %vm82, 1, 0
    %v606 = vsel %vm83, 1, 0
    %v607 = vsel %vm84, 1, 0
    %vm608 = vcmp.eq.s32.totalorder %v604, 1
    %vm609 = vcmp.eq.s32.totalorder %v605, 1
    %vm610 = vcmp.eq.s32.totalorder %v606, 1
    %vm611 = vcmp.eq.s32.totalorder %v607, 1
    %v612 = vsel %vm608, %v603, 0.0
    %v613 = vsel %vm609, %v602, 0.0
    %v614 = vsel %vm610, %v601, 0.0
    %v615 = vsel %vm611, %v600, 0.0
    %616 = vrot.lane.b32.xlu0 %v516, 127
    %v617 = vpop.permute.xlu0 %616
    %618 = vrot.lane.b32.xlu0 %v517, 127
    %v619 = vpop.permute.xlu0 %618
    %620 = vrot.lane.b32.xlu0 %v518, 127
    %v621 = vpop.permute.xlu0 %620
    %622 = vrot.lane.b32.xlu0 %v519, 127
    %v623 = vpop.permute.xlu0 %622
    %v624 = vsel %vm282, %v621, %v623
    %v625 = vsel %vm282, %v619, %v621
    %v626 = vsel %vm282, %v617, %v619
    %v627 = vsel %vm282, %v623, %v617
    %v628 = vsel %vm177, 1, 0
    %v629 = vsel %vm178, 1, 0
    %v630 = vsel %vm179, 1, 0
    %v631 = vsel %vm180, 1, 0
    %vm632 = vcmp.eq.s32.totalorder %v628, 1
    %vm633 = vcmp.eq.s32.totalorder %v629, 1
    %vm634 = vcmp.eq.s32.totalorder %v630, 1
    %vm635 = vcmp.eq.s32.totalorder %v631, 1
    %v636 = vsel %vm632, %v626, 0.0
    %v637 = vsel %vm633, %v625, 0.0
    %v638 = vsel %vm634, %v624, 0.0
    %v639 = vsel %vm635, %v627, 0.0
    %640 = vrot.lane.b32.xlu0 %v516, 113
    %v641 = vpop.permute.xlu0 %640
    %642 = vrot.lane.b32.xlu0 %v517, 113
    %v643 = vpop.permute.xlu0 %642
    %644 = vrot.lane.b32.xlu0 %v518, 113
    %v645 = vpop.permute.xlu0 %644
    %646 = vrot.lane.b32.xlu0 %v519, 113
    %v647 = vpop.permute.xlu0 %646
    %v648 = vsel %vm327, %v645, %v647
    %v649 = vsel %vm327, %v643, %v645
    %v650 = vsel %vm327, %v641, %v643
    %v651 = vsel %vm327, %v647, %v641
    %v652 = vsel %vm336, 1, 0
    %v653 = vsel %vm337, 1, 0
    %v654 = vsel %vm338, 1, 0
    %v655 = vsel %vm339, 1, 0
    %vm656 = vcmp.eq.s32.totalorder %v652, 1
    %vm657 = vcmp.eq.s32.totalorder %v653, 1
    %vm658 = vcmp.eq.s32.totalorder %v654, 1
    %vm659 = vcmp.eq.s32.totalorder %v655, 1
    %v660 = vsel %vm656, %v650, 0.0
    %v661 = vsel %vm657, %v649, 0.0
    %v662 = vsel %vm658, %v648, 0.0
    %v663 = vsel %vm659, %v651, 0.0
    %664 = vrot.lane.b32.xlu0 %v516, 112
    %v665 = vpop.permute.xlu0 %664
    %666 = vrot.lane.b32.xlu0 %v517, 112
    %v667 = vpop.permute.xlu0 %666
    %668 = vrot.lane.b32.xlu0 %v518, 112
    %v669 = vpop.permute.xlu0 %668
    %670 = vrot.lane.b32.xlu0 %v519, 112
    %v671 = vpop.permute.xlu0 %670
    %v672 = vsel %vm380, %v669, %v671
    %v673 = vsel %vm380, %v667, %v669
    %v674 = vsel %vm380, %v665, %v667
    %v675 = vsel %vm380, %v671, %v665
    %v676 = vsel %vm332, 1, 0
    %v677 = vsel %vm333, 1, 0
    %v678 = vsel %vm334, 1, 0
    %v679 = vsel %vm335, 1, 0
    %vm680 = vcmp.eq.s32.totalorder %v676, 1
    %vm681 = vcmp.eq.s32.totalorder %v677, 1
    %vm682 = vcmp.eq.s32.totalorder %v678, 1
    %vm683 = vcmp.eq.s32.totalorder %v679, 1
    %v684 = vsel %vm680, %v674, 0.0
    %v685 = vsel %vm681, %v673, 0.0
    %v686 = vsel %vm682, %v672, 0.0
    %v687 = vsel %vm683, %v675, 0.0
    %688 = vrot.lane.b32.xlu0 %v516, 111
    %v689 = vpop.permute.xlu0 %688
    %690 = vrot.lane.b32.xlu0 %v517, 111
    %v691 = vpop.permute.xlu0 %690
    %692 = vrot.lane.b32.xlu0 %v518, 111
    %v693 = vpop.permute.xlu0 %692
    %694 = vrot.lane.b32.xlu0 %v519, 111
    %v695 = vpop.permute.xlu0 %694
    %v696 = vsel %vm425, %v693, %v695
    %v697 = vsel %vm425, %v691, %v693
    %v698 = vsel %vm425, %v689, %v691
    %v699 = vsel %vm425, %v695, %v689
    %v700 = vsel %vm430, 1, 0
    %v701 = vsel %vm431, 1, 0
    %v702 = vsel %vm432, 1, 0
    %v703 = vsel %vm433, 1, 0
    %vm704 = vcmp.eq.s32.totalorder %v700, 1
    %vm705 = vcmp.eq.s32.totalorder %v701, 1
    %vm706 = vcmp.eq.s32.totalorder %v702, 1
    %vm707 = vcmp.eq.s32.totalorder %v703, 1
    %v708 = vsel %vm704, %v698, 0.0
    %v709 = vsel %vm705, %v697, 0.0
    %v710 = vsel %vm706, %v696, 0.0
    %v711 = vsel %vm707, %v699, 0.0
    %v712 = vld [vmem:[#allocation2 + $0x10] sm:$0xff]
    %714 = vset.pattern.permute.xlu0 72
    %715 = vperm.xlu0 %714, %v712
    %v716 = vpop.permute.xlu0 %715
    %vm718 = vcmask 588800
    %v719 = vsel %vm718, %v712, 0
    %721 = vmatprep.subr.mxu0 0.0
    %722 = vmatpush1.msra.mxu0 0.0
    %723 = vmatprep.subr.mxu0 0.0
    %724 = vmatpush1.msra.mxu0 0.0
    %725 = vmatprep.subr.mxu0 0.0
    %726 = vmatpush1.msra.mxu0 0.0
    %727 = vmatprep.subr.mxu0 0.0
    %728 = vmatpush1.msra.mxu0 0.0
    %729 = vmatprep.subr.mxu0 0.0
    %730 = vmatpush1.msra.mxu0 0.0
    %731 = vmatprep.subr.mxu0 0.0
    %732 = vmatpush1.msra.mxu0 0.0
    %733 = vmatprep.subr.mxu0 0.0
    %734 = vmatpush1.msra.mxu0 0.0
    %735 = vmatprep.subr.mxu0 %v709
    %736 = vmatpush1.msra.mxu0 %v708
    %737 = vmatprep.subr.mxu0 %v685
    %738 = vmatpush1.msra.mxu0 %v684
    %739 = vmatprep.subr.mxu0 %v661
    %740 = vmatpush1.msra.mxu0 %v660
    %741 = vmatprep.subr.mxu0 %v637
    %742 = vmatpush1.msra.mxu0 %v636
    %743 = vmatprep.subr.mxu0 %v517
    %744 = vmatpush1.msra.mxu0 %v516
    %745 = vmatprep.subr.mxu0 %v613
    %746 = vmatpush1.msra.mxu0 %v612
    %747 = vmatprep.subr.mxu0 %v589
    %748 = vmatpush1.msra.mxu0 %v588
    %749 = vmatprep.subr.mxu0 %v565
    %750 = vmatpush1.msra.mxu0 %v564
    %751 = vmatprep.subr.mxu0 %v541
    %752 = vmatpush1.msra.mxu0 %v540
    %753 = vmatprep.subr.mxu0 0.0
    %754 = vmatpush2.msra.mxu0 0.0
    %755 = vmatprep.subr.mxu0 0.0
    %756 = vmatpush2.msra.mxu0 0.0
    %757 = vmatprep.subr.mxu0 0.0
    %758 = vmatpush2.msra.mxu0 0.0
    %759 = vmatprep.subr.mxu0 0.0
    %760 = vmatpush2.msra.mxu0 0.0
    %761 = vmatprep.subr.mxu0 0.0
    %762 = vmatpush2.msra.mxu0 0.0
    %763 = vmatprep.subr.mxu0 0.0
    %764 = vmatpush2.msra.mxu0 0.0
    %765 = vmatprep.subr.mxu0 0.0
    %766 = vmatpush2.msra.mxu0 0.0
    %767 = vmatprep.subr.mxu0 0.0
    %768 = vmatpush2.msra.mxu0 0.0
    %769 = vmatprep.subr.mxu0 0.0
    %770 = vmatpush2.msra.mxu0 0.0
    %771 = vmatprep.subr.mxu0 0.0
    %772 = vmatpush2.msra.mxu0 0.0
    %773 = vmatprep.subr.mxu0 0.0
    %774 = vmatpush2.msra.mxu0 0.0
    %775 = vmatprep.subr.mxu0 0.0
    %776 = vmatpush2.msra.mxu0 0.0
    %777 = vmatprep.subr.mxu0 0.0
    %778 = vmatpush2.msra.mxu0 0.0
    %779 = vmatprep.subr.mxu0 0.0
    %780 = vmatpush2.msra.mxu0 0.0
    %781 = vmatprep.subr.mxu0 0.0
    %782 = vmatpush2.msra.mxu0 0.0
    %783 = vmatprep.subr.mxu0 0.0
    %784 = vmatpush2.msra.mxu0 0.0
    %785 = vmatprep.mubr.f32.mxu0 0.0
    %786 = vmatmul.mubr.f32.gmra.mxu0 %v719
    %v787 = vpop.f32.mrf.mxu0
    %v788 = vadd.f32 %v716, %v787
    %v789 = vpop.f32.mrf.mxu0
    %v790 = vadd.f32 %v716, %v789
    %791 = vdwg.mxu0
    %792 = vmatprep.subr.mxu0 0.0
    %793 = vmatpush1.msra.mxu0 0.0
    %794 = vmatprep.subr.mxu0 0.0
    %795 = vmatpush1.msra.mxu0 0.0
    %796 = vmatprep.subr.mxu0 0.0
    %797 = vmatpush1.msra.mxu0 0.0
    %798 = vmatprep.subr.mxu0 0.0
    %799 = vmatpush1.msra.mxu0 0.0
    %800 = vmatprep.subr.mxu0 0.0
    %801 = vmatpush1.msra.mxu0 0.0
    %802 = vmatprep.subr.mxu0 0.0
    %803 = vmatpush1.msra.mxu0 0.0
    %804 = vmatprep.subr.mxu0 0.0
    %805 = vmatpush1.msra.mxu0 0.0
    %806 = vmatprep.subr.mxu0 %v711
    %807 = vmatpush1.msra.mxu0 %v710
    %808 = vmatprep.subr.mxu0 %v687
    %809 = vmatpush1.msra.mxu0 %v686
    %810 = vmatprep.subr.mxu0 %v663
    %811 = vmatpush1.msra.mxu0 %v662
    %812 = vmatprep.subr.mxu0 %v639
    %813 = vmatpush1.msra.mxu0 %v638
    %814 = vmatprep.subr.mxu0 %v519
    %815 = vmatpush1.msra.mxu0 %v518
    %816 = vmatprep.subr.mxu0 %v615
    %817 = vmatpush1.msra.mxu0 %v614
    %818 = vmatprep.subr.mxu0 %v591
    %819 = vmatpush1.msra.mxu0 %v590
    %820 = vmatprep.subr.mxu0 %v567
    %821 = vmatpush1.msra.mxu0 %v566
    %822 = vmatprep.subr.mxu0 %v543
    %823 = vmatpush1.msra.mxu0 %v542
    %824 = vmatprep.subr.mxu0 0.0
    %825 = vmatpush2.msra.mxu0 0.0
    %826 = vmatprep.subr.mxu0 0.0
    %827 = vmatpush2.msra.mxu0 0.0
    %828 = vmatprep.subr.mxu0 0.0
    %829 = vmatpush2.msra.mxu0 0.0
    %830 = vmatprep.subr.mxu0 0.0
    %831 = vmatpush2.msra.mxu0 0.0
    %832 = vmatprep.subr.mxu0 0.0
    %833 = vmatpush2.msra.mxu0 0.0
    %834 = vmatprep.subr.mxu0 0.0
    %835 = vmatpush2.msra.mxu0 0.0
    %836 = vmatprep.subr.mxu0 0.0
    %837 = vmatpush2.msra.mxu0 0.0
    %838 = vmatprep.subr.mxu0 0.0
    %839 = vmatpush2.msra.mxu0 0.0
    %840 = vmatprep.subr.mxu0 0.0
    %841 = vmatpush2.msra.mxu0 0.0
    %842 = vmatprep.subr.mxu0 0.0
    %843 = vmatpush2.msra.mxu0 0.0
    %844 = vmatprep.subr.mxu0 0.0
    %845 = vmatpush2.msra.mxu0 0.0
    %846 = vmatprep.subr.mxu0 0.0
    %847 = vmatpush2.msra.mxu0 0.0
    %848 = vmatprep.subr.mxu0 0.0
    %849 = vmatpush2.msra.mxu0 0.0
    %850 = vmatprep.subr.mxu0 0.0
    %851 = vmatpush2.msra.mxu0 0.0
    %852 = vmatprep.subr.mxu0 0.0
    %853 = vmatpush2.msra.mxu0 0.0
    %854 = vmatprep.subr.mxu0 0.0
    %855 = vmatpush2.msra.mxu0 0.0
    %856 = vmatprep.mubr.f32.mxu0 0.0
    %857 = vmatmul.mubr.f32.gmra.mxu0 %v719
    %v858 = vpop.f32.mrf.mxu0
    %v859 = vadd.f32 %v716, %v858
    %v860 = vpop.f32.mrf.mxu0
    %v861 = vadd.f32 %v716, %v860
    %862 = vdwg.mxu0
    %v863 = vadd.f32 %v788, %v790
    %v864 = vadd.f32 %v863, %v859
    %v865 = vadd.f32 %v864, %v861
    %866 = vadd.xlane.f32.xlu0 %v865
    %v867 = vpop.xlane.xlu0 %866
    %v868 = vmul.f32 %v867, 0.001953125
    %v869 = vsub.f32 %v788, %v868
    %v870 = vsub.f32 %v790, %v868
    %v871 = vsub.f32 %v859, %v868
    %v872 = vsub.f32 %v861, %v868
    %v873 = vmul.f32 %v869, %v869
    %v874 = vmul.f32 %v870, %v870
    %v875 = vmul.f32 %v871, %v871
    %v876 = vmul.f32 %v872, %v872
    %v877 = vadd.f32 %v873, %v874
    %v878 = vadd.f32 %v877, %v875
    %v879 = vadd.f32 %v878, %v876
    %880 = vadd.xlane.f32.xlu0 %v879
    %v881 = vpop.xlane.xlu0 %880
    %v882 = vmul.f32 %v881, 0.001953125
    %v883 = vadd.f32 %v882, 1e-05
    %v884 = vrsqrt.pop %v883
    %v885 = vmul.f32 %v869, %v884
    %v886 = vmul.f32 %v870, %v884
    %v887 = vmul.f32 %v871, %v884
    %v888 = vmul.f32 %v872, %v884
    %889 = vset.pattern.permute.xlu0 73
    %890 = vperm.xlu0 %889, %v712
    %v891 = vpop.permute.xlu0 %890
    %v893 = vmul.f32 %v885, %v891
    %v894 = vmul.f32 %v886, %v891
    %v895 = vmul.f32 %v887, %v891
    %v896 = vmul.f32 %v888, %v891
    %897 = vset.pattern.permute.xlu0 74
    %898 = vperm.xlu0 %897, %v712
    %v899 = vpop.permute.xlu0 %898
    %v901 = vadd.f32 %v893, %v899
    %v902 = vadd.f32 %v894, %v899
    %v903 = vadd.f32 %v895, %v899
    %v904 = vadd.f32 %v896, %v899
    %v905 = vmax.f32 %v901, 0.0
    %v906 = vmax.f32 %v902, 0.0
    %v907 = vmax.f32 %v903, 0.0
    %v908 = vmax.f32 %v904, 0.0
    %909 = vrot.lane.b32.xlu0 %v905, 127
    %v910 = vpop.permute.xlu0 %909
    %911 = vrot.lane.b32.xlu0 %v906, 127
    %v912 = vpop.permute.xlu0 %911
    %913 = vrot.lane.b32.xlu0 %v907, 127
    %v914 = vpop.permute.xlu0 %913
    %915 = vrot.lane.b32.xlu0 %v908, 127
    %v916 = vpop.permute.xlu0 %915
    %v917 = vsel %vm282, %v914, %v916
    %v918 = vsel %vm282, %v912, %v914
    %v919 = vsel %vm282, %v910, %v912
    %v920 = vsel %vm282, %v916, %v910
    %v921 = vmax.f32 %v905, %v919
    %v922 = vmax.f32 %v906, %v918
    %v923 = vmax.f32 %v907, %v917
    %v924 = vmax.f32 %v908, %v920
    %925 = vrot.lane.b32.xlu0 %v921, 112
    %v926 = vpop.permute.xlu0 %925
    %927 = vrot.lane.b32.xlu0 %v922, 112
    %v928 = vpop.permute.xlu0 %927
    %929 = vrot.lane.b32.xlu0 %v923, 112
    %v930 = vpop.permute.xlu0 %929
    %931 = vrot.lane.b32.xlu0 %v924, 112
    %v932 = vpop.permute.xlu0 %931
    %v933 = vsel %vm380, %v930, %v932
    %v934 = vsel %vm380, %v928, %v930
    %v935 = vsel %vm380, %v926, %v928
    %v936 = vsel %vm380, %v932, %v926
    %v937 = vmax.f32 %v921, %v935
    %v938 = vmax.f32 %v922, %v934
    %v939 = vmax.f32 %v923, %v933
    %v940 = vmax.f32 %v924, %v936
    %941 = vrot.lane.b32.xlu0 %v937, 34
    %v942 = vpop.permute.xlu0 %941
    %943 = vrot.lane.b32.xlu0 %v938, 34
    %v944 = vpop.permute.xlu0 %943
    %945 = vrot.lane.b32.xlu0 %v939, 34
    %v946 = vpop.permute.xlu0 %945
    %947 = vrot.lane.b32.xlu0 %v940, 34
    %v948 = vpop.permute.xlu0 %947
    %vm949 = vcmp.lt.s32.totalorder %v26, 34
    %v950 = vsel %vm949, %v946, %v948
    %v951 = vsel %vm949, %v944, %v946
    %v952 = vsel %vm949, %v942, %v944
    %v953 = vsel %vm949, %v948, %v942
    %vm954 = vcmp.ge.s32.totalorder %v38, 2
    %vm955 = vcmp.ge.s32.totalorder %v39, 2
    %vm956 = vcmp.ge.s32.totalorder %v40, 2
    %vm957 = vcmp.ge.s32.totalorder %v41, 2
    %vm958 = vcmp.ge.s32.totalorder %v30, 2
    %vm959 = vcmp.ge.s32.totalorder %v31, 2
    %vm960 = vcmp.ge.s32.totalorder %v32, 2
    %vm961 = vcmp.ge.s32.totalorder %v33, 2
    %vm962 = vmand %vm954, %vm958
    %vm963 = vmand %vm955, %vm959
    %vm964 = vmand %vm956, %vm960
    %vm965 = vmand %vm957, %vm961
    %v966 = vsel %vm962, 1, 0
    %v967 = vsel %vm963, 1, 0
    %v968 = vsel %vm964, 1, 0
    %v969 = vsel %vm965, 1, 0
    %vm970 = vcmp.eq.s32.totalorder %v966, 1
    %vm971 = vcmp.eq.s32.totalorder %v967, 1
    %vm972 = vcmp.eq.s32.totalorder %v968, 1
    %vm973 = vcmp.eq.s32.totalorder %v969, 1
    %v974 = vsel %vm970, %v953, 0.0
    %v975 = vsel %vm971, %v952, 0.0
    %v976 = vsel %vm972, %v951, 0.0
    %v977 = vsel %vm973, %v950, 0.0
    %978 = vrot.lane.b32.xlu0 %v937, 32
    %v979 = vpop.permute.xlu0 %978
    %980 = vrot.lane.b32.xlu0 %v938, 32
    %v981 = vpop.permute.xlu0 %980
    %982 = vrot.lane.b32.xlu0 %v939, 32
    %v983 = vpop.permute.xlu0 %982
    %984 = vrot.lane.b32.xlu0 %v940, 32
    %v985 = vpop.permute.xlu0 %984
    %vm986 = vcmp.lt.s32.totalorder %v26, 32
    %v987 = vsel %vm986, %v983, %v985
    %v988 = vsel %vm986, %v981, %v983
    %v989 = vsel %vm986, %v979, %v981
    %v990 = vsel %vm986, %v985, %v979
    %v991 = vsel %vm954, 1, 0
    %v992 = vsel %vm955, 1, 0
    %v993 = vsel %vm956, 1, 0
    %v994 = vsel %vm957, 1, 0
    %vm995 = vcmp.eq.s32.totalorder %v991, 1
    %vm996 = vcmp.eq.s32.totalorder %v992, 1
    %vm997 = vcmp.eq.s32.totalorder %v993, 1
    %vm998 = vcmp.eq.s32.totalorder %v994, 1
    %v999 = vsel %vm995, %v990, 0.0
    %v1000 = vsel %vm996, %v989, 0.0
    %v1001 = vsel %vm997, %v988, 0.0
    %v1002 = vsel %vm998, %v987, 0.0
    %1003 = vrot.lane.b32.xlu0 %v937, 30
    %v1004 = vpop.permute.xlu0 %1003
    %1005 = vrot.lane.b32.xlu0 %v938, 30
    %v1006 = vpop.permute.xlu0 %1005
    %1007 = vrot.lane.b32.xlu0 %v939, 30
    %v1008 = vpop.permute.xlu0 %1007
    %1009 = vrot.lane.b32.xlu0 %v940, 30
    %v1010 = vpop.permute.xlu0 %1009
    %vm1011 = vcmp.lt.s32.totalorder %v26, 30
    %v1012 = vsel %vm1011, %v1008, %v1010
    %v1013 = vsel %vm1011, %v1006, %v1008
    %v1014 = vsel %vm1011, %v1004, %v1006
    %v1015 = vsel %vm1011, %v1010, %v1004
    %vm1016 = vcmp.lt.s32.totalorder %v30, 14
    %vm1017 = vcmp.lt.s32.totalorder %v31, 14
    %vm1018 = vcmp.lt.s32.totalorder %v32, 14
    %vm1019 = vcmp.lt.s32.totalorder %v33, 14
    %vm1020 = vmand %vm954, %vm1016
    %vm1021 = vmand %vm955, %vm1017
    %vm1022 = vmand %vm956, %vm1018
    %vm1023 = vmand %vm957, %vm1019
    %v1024 = vsel %vm1020, 1, 0
    %v1025 = vsel %vm1021, 1, 0
    %v1026 = vsel %vm1022, 1, 0
    %v1027 = vsel %vm1023, 1, 0
    %vm1028 = vcmp.eq.s32.totalorder %v1024, 1
    %vm1029 = vcmp.eq.s32.totalorder %v1025, 1
    %vm1030 = vcmp.eq.s32.totalorder %v1026, 1
    %vm1031 = vcmp.eq.s32.totalorder %v1027, 1
    %v1032 = vsel %vm1028, %v1015, 0.0
    %v1033 = vsel %vm1029, %v1014, 0.0
    %v1034 = vsel %vm1030, %v1013, 0.0
    %v1035 = vsel %vm1031, %v1012, 0.0
    %1036 = vrot.lane.b32.xlu0 %v937, 2
    %v1037 = vpop.permute.xlu0 %1036
    %1038 = vrot.lane.b32.xlu0 %v938, 2
    %v1039 = vpop.permute.xlu0 %1038
    %1040 = vrot.lane.b32.xlu0 %v939, 2
    %v1041 = vpop.permute.xlu0 %1040
    %1042 = vrot.lane.b32.xlu0 %v940, 2
    %v1043 = vpop.permute.xlu0 %1042
    %vm1044 = vcmp.lt.s32.totalorder %v26, 2
    %v1045 = vsel %vm1044, %v1041, %v1043
    %v1046 = vsel %vm1044, %v1039, %v1041
    %v1047 = vsel %vm1044, %v1037, %v1039
    %v1048 = vsel %vm1044, %v1043, %v1037
    %v1049 = vsel %vm958, 1, 0
    %v1050 = vsel %vm959, 1, 0
    %v1051 = vsel %vm960, 1, 0
    %v1052 = vsel %vm961, 1, 0
    %vm1053 = vcmp.eq.s32.totalorder %v1049, 1
    %vm1054 = vcmp.eq.s32.totalorder %v1050, 1
    %vm1055 = vcmp.eq.s32.totalorder %v1051, 1
    %vm1056 = vcmp.eq.s32.totalorder %v1052, 1
    %v1057 = vsel %vm1053, %v1048, 0.0
    %v1058 = vsel %vm1054, %v1047, 0.0
    %v1059 = vsel %vm1055, %v1046, 0.0
    %v1060 = vsel %vm1056, %v1045, 0.0
    %1061 = vrot.lane.b32.xlu0 %v937, 126
    %v1062 = vpop.permute.xlu0 %1061
    %1063 = vrot.lane.b32.xlu0 %v938, 126
    %v1064 = vpop.permute.xlu0 %1063
    %1065 = vrot.lane.b32.xlu0 %v939, 126
    %v1066 = vpop.permute.xlu0 %1065
    %1067 = vrot.lane.b32.xlu0 %v940, 126
    %v1068 = vpop.permute.xlu0 %1067
    %vm1069 = vcmp.lt.s32.totalorder %v26, 126
    %v1070 = vsel %vm1069, %v1066, %v1068
    %v1071 = vsel %vm1069, %v1064, %v1066
    %v1072 = vsel %vm1069, %v1062, %v1064
    %v1073 = vsel %vm1069, %v1068, %v1062
    %v1074 = vsel %vm1016, 1, 0
    %v1075 = vsel %vm1017, 1, 0
    %v1076 = vsel %vm1018, 1, 0
    %v1077 = vsel %vm1019, 1, 0
    %vm1078 = vcmp.eq.s32.totalorder %v1074, 1
    %vm1079 = vcmp.eq.s32.totalorder %v1075, 1
    %vm1080 = vcmp.eq.s32.totalorder %v1076, 1
    %vm1081 = vcmp.eq.s32.totalorder %v1077, 1
    %v1082 = vsel %vm1078, %v1072, 0.0
    %v1083 = vsel %vm1079, %v1071, 0.0
    %v1084 = vsel %vm1080, %v1070, 0.0
    %v1085 = vsel %vm1081, %v1073, 0.0
    %1086 = vrot.lane.b32.xlu0 %v937, 98
    %v1087 = vpop.permute.xlu0 %1086
    %1088 = vrot.lane.b32.xlu0 %v938, 98
    %v1089 = vpop.permute.xlu0 %1088
    %1090 = vrot.lane.b32.xlu0 %v939, 98
    %v1091 = vpop.permute.xlu0 %1090
    %1092 = vrot.lane.b32.xlu0 %v940, 98
    %v1093 = vpop.permute.xlu0 %1092
    %vm1094 = vcmp.lt.s32.totalorder %v26, 98
    %v1095 = vsel %vm1094, %v1091, %v1093
    %v1096 = vsel %vm1094, %v1089, %v1091
    %v1097 = vsel %vm1094, %v1087, %v1089
    %v1098 = vsel %vm1094, %v1093, %v1087
    %vm1099 = vcmp.lt.s32.totalorder %v38, 14
    %vm1100 = vcmp.lt.s32.totalorder %v39, 14
    %vm1101 = vcmp.lt.s32.totalorder %v40, 14
    %vm1102 = vcmp.lt.s32.totalorder %v41, 14
    %vm1103 = vmand %vm1099, %vm958
    %vm1104 = vmand %vm1100, %vm959
    %vm1105 = vmand %vm1101, %vm960
    %vm1106 = vmand %vm1102, %vm961
    %v1107 = vsel %vm1103, 1, 0
    %v1108 = vsel %vm1104, 1, 0
    %v1109 = vsel %vm1105, 1, 0
    %v1110 = vsel %vm1106, 1, 0
    %vm1111 = vcmp.eq.s32.totalorder %v1107, 1
    %vm1112 = vcmp.eq.s32.totalorder %v1108, 1
    %vm1113 = vcmp.eq.s32.totalorder %v1109, 1
    %vm1114 = vcmp.eq.s32.totalorder %v1110, 1
    %v1115 = vsel %vm1111, %v1097, 0.0
    %v1116 = vsel %vm1112, %v1096, 0.0
    %v1117 = vsel %vm1113, %v1095, 0.0
    %v1118 = vsel %vm1114, %v1098, 0.0
    %1119 = vrot.lane.b32.xlu0 %v937, 96
    %v1120 = vpop.permute.xlu0 %1119
    %1121 = vrot.lane.b32.xlu0 %v938, 96
    %v1122 = vpop.permute.xlu0 %1121
    %1123 = vrot.lane.b32.xlu0 %v939, 96
    %v1124 = vpop.permute.xlu0 %1123
    %1125 = vrot.lane.b32.xlu0 %v940, 96
    %v1126 = vpop.permute.xlu0 %1125
    %vm1127 = vcmp.lt.s32.totalorder %v26, 96
    %v1128 = vsel %vm1127, %v1124, %v1126
    %v1129 = vsel %vm1127, %v1122, %v1124
    %v1130 = vsel %vm1127, %v1120, %v1122
    %v1131 = vsel %vm1127, %v1126, %v1120
    %v1132 = vsel %vm1099, 1, 0
    %v1133 = vsel %vm1100, 1, 0
    %v1134 = vsel %vm1101, 1, 0
    %v1135 = vsel %vm1102, 1, 0
    %vm1136 = vcmp.eq.s32.totalorder %v1132, 1
    %vm1137 = vcmp.eq.s32.totalorder %v1133, 1
    %vm1138 = vcmp.eq.s32.totalorder %v1134, 1
    %vm1139 = vcmp.eq.s32.totalorder %v1135, 1
    %v1140 = vsel %vm1136, %v1130, 0.0
    %v1141 = vsel %vm1137, %v1129, 0.0
    %v1142 = vsel %vm1138, %v1128, 0.0
    %v1143 = vsel %vm1139, %v1131, 0.0
    %1144 = vrot.lane.b32.xlu0 %v937, 94
    %v1145 = vpop.permute.xlu0 %1144
    %1146 = vrot.lane.b32.xlu0 %v938, 94
    %v1147 = vpop.permute.xlu0 %1146
    %1148 = vrot.lane.b32.xlu0 %v939, 94
    %v1149 = vpop.permute.xlu0 %1148
    %1150 = vrot.lane.b32.xlu0 %v940, 94
    %v1151 = vpop.permute.xlu0 %1150
    %vm1152 = vcmp.lt.s32.totalorder %v26, 94
    %v1153 = vsel %vm1152, %v1149, %v1151
    %v1154 = vsel %vm1152, %v1147, %v1149
    %v1155 = vsel %vm1152, %v1145, %v1147
    %v1156 = vsel %vm1152, %v1151, %v1145
    %vm1157 = vmand %vm1099, %vm1016
    %vm1158 = vmand %vm1100, %vm1017
    %vm1159 = vmand %vm1101, %vm1018
    %vm1160 = vmand %vm1102, %vm1019
    %v1161 = vsel %vm1157, 1, 0
    %v1162 = vsel %vm1158, 1, 0
    %v1163 = vsel %vm1159, 1, 0
    %v1164 = vsel %vm1160, 1, 0
    %vm1165 = vcmp.eq.s32.totalorder %v1161, 1
    %vm1166 = vcmp.eq.s32.totalorder %v1162, 1
    %vm1167 = vcmp.eq.s32.totalorder %v1163, 1
    %vm1168 = vcmp.eq.s32.totalorder %v1164, 1
    %v1169 = vsel %vm1165, %v1155, 0.0
    %v1170 = vsel %vm1166, %v1154, 0.0
    %v1171 = vsel %vm1167, %v1153, 0.0
    %v1172 = vsel %vm1168, %v1156, 0.0
    %v1173 = vld [vmem:[#allocation2 + $0x20] sm:$0xff]
    %v1174 = vld [vmem:[#allocation2 + $0x30] sm:$0xff]
    %1176 = vset.pattern.permute.xlu0 72
    %1177 = vperm.xlu0 %1176, %v1173
    %v1178 = vpop.permute.xlu0 %1177
    %1181 = vset.pattern.permute.xlu0 72
    %1182 = vperm.xlu0 %1181, %v1174
    %v1183 = vpop.permute.xlu0 %1182
    %v1185 = vsel %vm718, %v1173, 0
    %v1187 = vsel %vm718, %v1174, 0
    %1189 = vmatprep.subr.mxu0 0.0
    %1190 = vmatpush1.msra.mxu0 0.0
    %1191 = vmatprep.subr.mxu0 0.0
    %1192 = vmatpush1.msra.mxu0 0.0
    %1193 = vmatprep.subr.mxu0 0.0
    %1194 = vmatpush1.msra.mxu0 0.0
    %1195 = vmatprep.subr.mxu0 0.0
    %1196 = vmatpush1.msra.mxu0 0.0
    %1197 = vmatprep.subr.mxu0 0.0
    %1198 = vmatpush1.msra.mxu0 0.0
    %1199 = vmatprep.subr.mxu0 0.0
    %1200 = vmatpush1.msra.mxu0 0.0
    %1201 = vmatprep.subr.mxu0 0.0
    %1202 = vmatpush1.msra.mxu0 0.0
    %1203 = vmatprep.subr.mxu0 %v1170
    %1204 = vmatpush1.msra.mxu0 %v1169
    %1205 = vmatprep.subr.mxu0 %v1141
    %1206 = vmatpush1.msra.mxu0 %v1140
    %1207 = vmatprep.subr.mxu0 %v1116
    %1208 = vmatpush1.msra.mxu0 %v1115
    %1209 = vmatprep.subr.mxu0 %v1083
    %1210 = vmatpush1.msra.mxu0 %v1082
    %1211 = vmatprep.subr.mxu0 %v938
    %1212 = vmatpush1.msra.mxu0 %v937
    %1213 = vmatprep.subr.mxu0 %v1058
    %1214 = vmatpush1.msra.mxu0 %v1057
    %1215 = vmatprep.subr.mxu0 %v1033
    %1216 = vmatpush1.msra.mxu0 %v1032
    %1217 = vmatprep.subr.mxu0 %v1000
    %1218 = vmatpush1.msra.mxu0 %v999
    %1219 = vmatprep.subr.mxu0 %v975
    %1220 = vmatpush1.msra.mxu0 %v974
    %1221 = vmatprep.subr.mxu0 0.0
    %1222 = vmatpush2.msra.mxu0 0.0
    %1223 = vmatprep.subr.mxu0 0.0
    %1224 = vmatpush2.msra.mxu0 0.0
    %1225 = vmatprep.subr.mxu0 0.0
    %1226 = vmatpush2.msra.mxu0 0.0
    %1227 = vmatprep.subr.mxu0 0.0
    %1228 = vmatpush2.msra.mxu0 0.0
    %1229 = vmatprep.subr.mxu0 0.0
    %1230 = vmatpush2.msra.mxu0 0.0
    %1231 = vmatprep.subr.mxu0 0.0
    %1232 = vmatpush2.msra.mxu0 0.0
    %1233 = vmatprep.subr.mxu0 0.0
    %1234 = vmatpush2.msra.mxu0 0.0
    %1235 = vmatprep.subr.mxu0 0.0
    %1236 = vmatpush2.msra.mxu0 0.0
    %1237 = vmatprep.subr.mxu0 0.0
    %1238 = vmatpush2.msra.mxu0 0.0
    %1239 = vmatprep.subr.mxu0 0.0
    %1240 = vmatpush2.msra.mxu0 0.0
    %1241 = vmatprep.subr.mxu0 0.0
    %1242 = vmatpush2.msra.mxu0 0.0
    %1243 = vmatprep.subr.mxu0 0.0
    %1244 = vmatpush2.msra.mxu0 0.0
    %1245 = vmatprep.subr.mxu0 0.0
    %1246 = vmatpush2.msra.mxu0 0.0
    %1247 = vmatprep.subr.mxu0 0.0
    %1248 = vmatpush2.msra.mxu0 0.0
    %1249 = vmatprep.subr.mxu0 0.0
    %1250 = vmatpush2.msra.mxu0 0.0
    %1251 = vmatprep.subr.mxu0 0.0
    %1252 = vmatpush2.msra.mxu0 0.0
    %1253 = vmatprep.mubr.f32.mxu0 0.0
    %1254 = vmatmul.mubr.f32.gmra.mxu0 %v1185
    %v1255 = vpop.f32.mrf.mxu0
    %v1256 = vadd.f32 %v1178, %v1255
    %v1257 = vpop.f32.mrf.mxu0
    %v1258 = vadd.f32 %v1178, %v1257
    %1259 = vmatprep.mubr.f32.mxu0 0.0
    %1260 = vmatmul.mubr.f32.gmra.mxu0 %v1187
    %v1261 = vpop.f32.mrf.mxu0
    %v1262 = vadd.f32 %v1183, %v1261
    %v1263 = vpop.f32.mrf.mxu0
    %v1264 = vadd.f32 %v1183, %v1263
    %1265 = vdwg.mxu0
    %1266 = vmatprep.subr.mxu0 0.0
    %1267 = vmatpush1.msra.mxu0 0.0
    %1268 = vmatprep.subr.mxu0 0.0
    %1269 = vmatpush1.msra.mxu0 0.0
    %1270 = vmatprep.subr.mxu0 0.0
    %1271 = vmatpush1.msra.mxu0 0.0
    %1272 = vmatprep.subr.mxu0 0.0
    %1273 = vmatpush1.msra.mxu0 0.0
    %1274 = vmatprep.subr.mxu0 0.0
    %1275 = vmatpush1.msra.mxu0 0.0
    %1276 = vmatprep.subr.mxu0 0.0
    %1277 = vmatpush1.msra.mxu0 0.0
    %1278 = vmatprep.subr.mxu0 0.0
    %1279 = vmatpush1.msra.mxu0 0.0
    %1280 = vmatprep.subr.mxu0 %v1172
    %1281 = vmatpush1.msra.mxu0 %v1171
    %1282 = vmatprep.subr.mxu0 %v1143
    %1283 = vmatpush1.msra.mxu0 %v1142
    %1284 = vmatprep.subr.mxu0 %v1118
    %1285 = vmatpush1.msra.mxu0 %v1117
    %1286 = vmatprep.subr.mxu0 %v1085
    %1287 = vmatpush1.msra.mxu0 %v1084
    %1288 = vmatprep.subr.mxu0 %v940
    %1289 = vmatpush1.msra.mxu0 %v939
    %1290 = vmatprep.subr.mxu0 %v1060
    %1291 = vmatpush1.msra.mxu0 %v1059
    %1292 = vmatprep.subr.mxu0 %v1035
    %1293 = vmatpush1.msra.mxu0 %v1034
    %1294 = vmatprep.subr.mxu0 %v1002
    %1295 = vmatpush1.msra.mxu0 %v1001
    %1296 = vmatprep.subr.mxu0 %v977
    %1297 = vmatpush1.msra.mxu0 %v976
    %1298 = vmatprep.subr.mxu0 0.0
    %1299 = vmatpush2.msra.mxu0 0.0
    %1300 = vmatprep.subr.mxu0 0.0
    %1301 = vmatpush2.msra.mxu0 0.0
    %1302 = vmatprep.subr.mxu0 0.0
    %1303 = vmatpush2.msra.mxu0 0.0
    %1304 = vmatprep.subr.mxu0 0.0
    %1305 = vmatpush2.msra.mxu0 0.0
    %1306 = vmatprep.subr.mxu0 0.0
    %1307 = vmatpush2.msra.mxu0 0.0
    %1308 = vmatprep.subr.mxu0 0.0
    %1309 = vmatpush2.msra.mxu0 0.0
    %1310 = vmatprep.subr.mxu0 0.0
    %1311 = vmatpush2.msra.mxu0 0.0
    %1312 = vmatprep.subr.mxu0 0.0
    %1313 = vmatpush2.msra.mxu0 0.0
    %1314 = vmatprep.subr.mxu0 0.0
    %1315 = vmatpush2.msra.mxu0 0.0
    %1316 = vmatprep.subr.mxu0 0.0
    %1317 = vmatpush2.msra.mxu0 0.0
    %1318 = vmatprep.subr.mxu0 0.0
    %1319 = vmatpush2.msra.mxu0 0.0
    %1320 = vmatprep.subr.mxu0 0.0
    %1321 = vmatpush2.msra.mxu0 0.0
    %1322 = vmatprep.subr.mxu0 0.0
    %1323 = vmatpush2.msra.mxu0 0.0
    %1324 = vmatprep.subr.mxu0 0.0
    %1325 = vmatpush2.msra.mxu0 0.0
    %1326 = vmatprep.subr.mxu0 0.0
    %1327 = vmatpush2.msra.mxu0 0.0
    %1328 = vmatprep.subr.mxu0 0.0
    %1329 = vmatpush2.msra.mxu0 0.0
    %1330 = vmatprep.mubr.f32.mxu0 0.0
    %1331 = vmatmul.mubr.f32.gmra.mxu0 %v1185
    %v1332 = vpop.f32.mrf.mxu0
    %v1333 = vadd.f32 %v1178, %v1332
    %v1334 = vpop.f32.mrf.mxu0
    %v1335 = vadd.f32 %v1178, %v1334
    %1336 = vmatprep.mubr.f32.mxu0 0.0
    %1337 = vmatmul.mubr.f32.gmra.mxu0 %v1187
    %v1338 = vpop.f32.mrf.mxu0
    %v1339 = vadd.f32 %v1183, %v1338
    %v1340 = vpop.f32.mrf.mxu0
    %v1341 = vadd.f32 %v1183, %v1340
    %1342 = vdwg.mxu0
    %v1343 = vand.u32 %v30, 1
    %v1344 = vand.u32 %v31, 1
    %v1345 = vand.u32 %v32, 1
    %v1346 = vand.u32 %v33, 1
    %vm1347 = vcmp.eq.s32.totalorder %v1343, 0
    %vm1348 = vcmp.eq.s32.totalorder %v1344, 0
    %vm1349 = vcmp.eq.s32.totalorder %v1345, 0
    %vm1350 = vcmp.eq.s32.totalorder %v1346, 0
    %v1351 = vand.u32 %v38, 1
    %v1352 = vand.u32 %v39, 1
    %v1353 = vand.u32 %v40, 1
    %v1354 = vand.u32 %v41, 1
    %vm1355 = vcmp.eq.s32.totalorder %v1351, 0
    %vm1356 = vcmp.eq.s32.totalorder %v1352, 0
    %vm1357 = vcmp.eq.s32.totalorder %v1353, 0
    %vm1358 = vcmp.eq.s32.totalorder %v1354, 0
    %vm1359 = vmand %vm1347, %vm1355
    %vm1360 = vmand %vm1348, %vm1356
    %vm1361 = vmand %vm1349, %vm1357
    %vm1362 = vmand %vm1350, %vm1358
    %v1363 = vsel %vm1359, 1, 0
    %v1364 = vsel %vm1360, 1, 0
    %v1365 = vsel %vm1361, 1, 0
    %v1366 = vsel %vm1362, 1, 0
    %vm1367 = vcmp.eq.s32.totalorder %v1363, 1
    %vm1368 = vcmp.eq.s32.totalorder %v1364, 1
    %vm1369 = vcmp.eq.s32.totalorder %v1365, 1
    %vm1370 = vcmp.eq.s32.totalorder %v1366, 1
    %v1371 = vsel %vm1367, %v1256, 0.0
    %v1372 = vsel %vm1368, %v1258, 0.0
    %v1373 = vsel %vm1369, %v1333, 0.0
    %v1374 = vsel %vm1370, %v1335, 0.0
    %v1375 = vsel %vm1367, %v1262, 0.0
    %v1376 = vsel %vm1368, %v1264, 0.0
    %v1377 = vsel %vm1369, %v1339, 0.0
    %v1378 = vsel %vm1370, %v1341, 0.0
    %v1379 = vadd.f32 %v1371, %v1372
    %v1380 = vadd.f32 %v1379, %v1373
    %v1381 = vadd.f32 %v1380, %v1374
    %1382 = vadd.xlane.f32.xlu0 %v1381
    %v1383 = vpop.xlane.xlu0 %1382
    %v1384 = vadd.f32 %v1375, %v1376
    %v1385 = vadd.f32 %v1384, %v1377
    %v1386 = vadd.f32 %v1385, %v1378
    %1387 = vadd.xlane.f32.xlu0 %v1386
    %v1388 = vpop.xlane.xlu0 %1387
    %v1389 = vmul.f32 %v1383, 0.0078125
    %v1390 = vmul.f32 %v1388, 0.0078125
    %v1391 = vsub.f32 %v1256, %v1389
    %v1392 = vsub.f32 %v1258, %v1389
    %v1393 = vsub.f32 %v1333, %v1389
    %v1394 = vsub.f32 %v1335, %v1389
    %v1395 = vsub.f32 %v1262, %v1390
    %v1396 = vsub.f32 %v1264, %v1390
    %v1397 = vsub.f32 %v1339, %v1390
    %v1398 = vsub.f32 %v1341, %v1390
    %v1399 = vmul.f32 %v1391, %v1391
    %v1400 = vmul.f32 %v1392, %v1392
    %v1401 = vmul.f32 %v1393, %v1393
    %v1402 = vmul.f32 %v1394, %v1394
    %v1403 = vmul.f32 %v1395, %v1395
    %v1404 = vmul.f32 %v1396, %v1396
    %v1405 = vmul.f32 %v1397, %v1397
    %v1406 = vmul.f32 %v1398, %v1398
    %v1407 = vsel %vm1367, %v1399, 0.0
    %v1408 = vsel %vm1368, %v1400, 0.0
    %v1409 = vsel %vm1369, %v1401, 0.0
    %v1410 = vsel %vm1370, %v1402, 0.0
    %v1411 = vsel %vm1367, %v1403, 0.0
    %v1412 = vsel %vm1368, %v1404, 0.0
    %v1413 = vsel %vm1369, %v1405, 0.0
    %v1414 = vsel %vm1370, %v1406, 0.0
    %v1415 = vadd.f32 %v1407, %v1408
    %v1416 = vadd.f32 %v1415, %v1409
    %v1417 = vadd.f32 %v1416, %v1410
    %1418 = vadd.xlane.f32.xlu0 %v1417
    %v1419 = vpop.xlane.xlu0 %1418
    %v1420 = vadd.f32 %v1411, %v1412
    %v1421 = vadd.f32 %v1420, %v1413
    %v1422 = vadd.f32 %v1421, %v1414
    %1423 = vadd.xlane.f32.xlu0 %v1422
    %v1424 = vpop.xlane.xlu0 %1423
    %v1425 = vmul.f32 %v1419, 0.0078125
    %v1426 = vmul.f32 %v1424, 0.0078125
    %v1427 = vadd.f32 %v1425, 1e-05
    %v1428 = vadd.f32 %v1426, 1e-05
    %v1429 = vrsqrt.pop %v1427
    %v1430 = vrsqrt.pop %v1428
    %v1431 = vmul.f32 %v1391, %v1429
    %v1432 = vmul.f32 %v1392, %v1429
    %v1433 = vmul.f32 %v1393, %v1429
    %v1434 = vmul.f32 %v1394, %v1429
    %v1435 = vmul.f32 %v1395, %v1430
    %v1436 = vmul.f32 %v1396, %v1430
    %v1437 = vmul.f32 %v1397, %v1430
    %v1438 = vmul.f32 %v1398, %v1430
    %1439 = vset.pattern.permute.xlu0 73
    %1440 = vperm.xlu0 %1439, %v1173
    %v1441 = vpop.permute.xlu0 %1440
    %1443 = vset.pattern.permute.xlu0 73
    %1444 = vperm.xlu0 %1443, %v1174
    %v1445 = vpop.permute.xlu0 %1444
    %v1447 = vmul.f32 %v1431, %v1441
    %v1448 = vmul.f32 %v1432, %v1441
    %v1449 = vmul.f32 %v1433, %v1441
    %v1450 = vmul.f32 %v1434, %v1441
    %v1451 = vmul.f32 %v1435, %v1445
    %v1452 = vmul.f32 %v1436, %v1445
    %v1453 = vmul.f32 %v1437, %v1445
    %v1454 = vmul.f32 %v1438, %v1445
    %1455 = vset.pattern.permute.xlu0 74
    %1456 = vperm.xlu0 %1455, %v1173
    %v1457 = vpop.permute.xlu0 %1456
    %1459 = vset.pattern.permute.xlu0 74
    %1460 = vperm.xlu0 %1459, %v1174
    %v1461 = vpop.permute.xlu0 %1460
    %v1463 = vadd.f32 %v1447, %v1457
    %v1464 = vadd.f32 %v1448, %v1457
    %v1465 = vadd.f32 %v1449, %v1457
    %v1466 = vadd.f32 %v1450, %v1457
    %v1467 = vadd.f32 %v1451, %v1461
    %v1468 = vadd.f32 %v1452, %v1461
    %v1469 = vadd.f32 %v1453, %v1461
    %v1470 = vadd.f32 %v1454, %v1461
    %v1471 = vmax.f32 %v1463, 0.0
    %v1472 = vmax.f32 %v1464, 0.0
    %v1473 = vmax.f32 %v1465, 0.0
    %v1474 = vmax.f32 %v1466, 0.0
    %v1475 = vmax.f32 %v1467, 0.0
    %v1476 = vmax.f32 %v1468, 0.0
    %v1477 = vmax.f32 %v1469, 0.0
    %v1478 = vmax.f32 %v1470, 0.0
    %1479 = vrot.lane.b32.xlu0 %v1471, 126
    %v1480 = vpop.permute.xlu0 %1479
    %1481 = vrot.lane.b32.xlu0 %v1475, 126
    %v1482 = vpop.permute.xlu0 %1481
    %1483 = vrot.lane.b32.xlu0 %v1472, 126
    %v1484 = vpop.permute.xlu0 %1483
    %1485 = vrot.lane.b32.xlu0 %v1476, 126
    %v1486 = vpop.permute.xlu0 %1485
    %1487 = vrot.lane.b32.xlu0 %v1473, 126
    %v1488 = vpop.permute.xlu0 %1487
    %1489 = vrot.lane.b32.xlu0 %v1477, 126
    %v1490 = vpop.permute.xlu0 %1489
    %1491 = vrot.lane.b32.xlu0 %v1474, 126
    %v1492 = vpop.permute.xlu0 %1491
    %1493 = vrot.lane.b32.xlu0 %v1478, 126
    %v1494 = vpop.permute.xlu0 %1493
    %v1495 = vsel %vm1069, %v1488, %v1492
    %v1496 = vsel %vm1069, %v1490, %v1494
    %v1497 = vsel %vm1069, %v1484, %v1488
    %v1498 = vsel %vm1069, %v1486, %v1490
    %v1499 = vsel %vm1069, %v1480, %v1484
    %v1500 = vsel %vm1069, %v1482, %v1486
    %v1501 = vsel %vm1069, %v1492, %v1480
    %v1502 = vsel %vm1069, %v1494, %v1482
    %v1503 = vmax.f32 %v1471, %v1499
    %v1504 = vmax.f32 %v1472, %v1497
    %v1505 = vmax.f32 %v1473, %v1495
    %v1506 = vmax.f32 %v1474, %v1501
    %v1507 = vmax.f32 %v1475, %v1500
    %v1508 = vmax.f32 %v1476, %v1498
    %v1509 = vmax.f32 %v1477, %v1496
    %v1510 = vmax.f32 %v1478, %v1502
    %1511 = vrot.lane.b32.xlu0 %v1503, 96
    %v1512 = vpop.permute.xlu0 %1511
    %1513 = vrot.lane.b32.xlu0 %v1507, 96
    %v1514 = vpop.permute.xlu0 %1513
    %1515 = vrot.lane.b32.xlu0 %v1504, 96
    %v1516 = vpop.permute.xlu0 %1515
    %1517 = vrot.lane.b32.xlu0 %v1508, 96
    %v1518 = vpop.permute.xlu0 %1517
    %1519 = vrot.lane.b32.xlu0 %v1505, 96
    %v1520 = vpop.permute.xlu0 %1519
    %1521 = vrot.lane.b32.xlu0 %v1509, 96
    %v1522 = vpop.permute.xlu0 %1521
    %1523 = vrot.lane.b32.xlu0 %v1506, 96
    %v1524 = vpop.permute.xlu0 %1523
    %1525 = vrot.lane.b32.xlu0 %v1510, 96
    %v1526 = vpop.permute.xlu0 %1525
    %v1527 = vsel %vm1127, %v1520, %v1524
    %v1528 = vsel %vm1127, %v1522, %v1526
    %v1529 = vsel %vm1127, %v1516, %v1520
    %v1530 = vsel %vm1127, %v1518, %v1522
    %v1531 = vsel %vm1127, %v1512, %v1516
    %v1532 = vsel %vm1127, %v1514, %v1518
    %v1533 = vsel %vm1127, %v1524, %v1512
    %v1534 = vsel %vm1127, %v1526, %v1514
    %v1535 = vmax.f32 %v1503, %v1531
    %v1536 = vmax.f32 %v1504, %v1529
    %v1537 = vmax.f32 %v1505, %v1527
    %v1538 = vmax.f32 %v1506, %v1533
    %v1539 = vmax.f32 %v1507, %v1532
    %v1540 = vmax.f32 %v1508, %v1530
    %v1541 = vmax.f32 %v1509, %v1528
    %v1542 = vmax.f32 %v1510, %v1534
    %1543 = vrot.lane.b32.xlu0 %v1535, 68
    %v1544 = vpop.permute.xlu0 %1543
    %1545 = vrot.lane.b32.xlu0 %v1539, 68
    %v1546 = vpop.permute.xlu0 %1545
    %1547 = vrot.lane.b32.xlu0 %v1536, 68
    %v1548 = vpop.permute.xlu0 %1547
    %1549 = vrot.lane.b32.xlu0 %v1540, 68
    %v1550 = vpop.permute.xlu0 %1549
    %1551 = vrot.lane.b32.xlu0 %v1537, 68
    %v1552 = vpop.permute.xlu0 %1551
    %1553 = vrot.lane.b32.xlu0 %v1541, 68
    %v1554 = vpop.permute.xlu0 %1553
    %1555 = vrot.lane.b32.xlu0 %v1538, 68
    %v1556 = vpop.permute.xlu0 %1555
    %1557 = vrot.lane.b32.xlu0 %v1542, 68
    %v1558 = vpop.permute.xlu0 %1557
    %vm1559 = vcmp.lt.s32.totalorder %v26, 68
    %v1560 = vsel %vm1559, %v1552, %v1556
    %v1561 = vsel %vm1559, %v1554, %v1558
    %v1562 = vsel %vm1559, %v1548, %v1552
    %v1563 = vsel %vm1559, %v1550, %v1554
    %v1564 = vsel %vm1559, %v1544, %v1548
    %v1565 = vsel %vm1559, %v1546, %v1550
    %v1566 = vsel %vm1559, %v1556, %v1544
    %v1567 = vsel %vm1559, %v1558, %v1546
    %vm1568 = vcmp.ge.s32.totalorder %v38, 4
    %vm1569 = vcmp.ge.s32.totalorder %v39, 4
    %vm1570 = vcmp.ge.s32.totalorder %v40, 4
    %vm1571 = vcmp.ge.s32.totalorder %v41, 4
    %vm1572 = vcmp.ge.s32.totalorder %v30, 4
    %vm1573 = vcmp.ge.s32.totalorder %v31, 4
    %vm1574 = vcmp.ge.s32.totalorder %v32, 4
    %vm1575 = vcmp.ge.s32.totalorder %v33, 4
    %vm1576 = vmand %vm1568, %vm1572
    %vm1577 = vmand %vm1569, %vm1573
    %vm1578 = vmand %vm1570, %vm1574
    %vm1579 = vmand %vm1571, %vm1575
    %v1580 = vsel %vm1576, 1, 0
    %v1581 = vsel %vm1577, 1, 0
    %v1582 = vsel %vm1578, 1, 0
    %v1583 = vsel %vm1579, 1, 0
    %vm1584 = vcmp.eq.s32.totalorder %v1580, 1
    %vm1585 = vcmp.eq.s32.totalorder %v1581, 1
    %vm1586 = vcmp.eq.s32.totalorder %v1582, 1
    %vm1587 = vcmp.eq.s32.totalorder %v1583, 1
    %v1588 = vsel %vm1584, %v1566, 0.0
    %v1589 = vsel %vm1585, %v1564, 0.0
    %v1590 = vsel %vm1586, %v1562, 0.0
    %v1591 = vsel %vm1587, %v1560, 0.0
    %v1592 = vsel %vm1584, %v1567, 0.0
    %v1593 = vsel %vm1585, %v1565, 0.0
    %v1594 = vsel %vm1586, %v1563, 0.0
    %v1595 = vsel %vm1587, %v1561, 0.0
    %1596 = vrot.lane.b32.xlu0 %v1535, 64
    %v1597 = vpop.permute.xlu0 %1596
    %1598 = vrot.lane.b32.xlu0 %v1539, 64
    %v1599 = vpop.permute.xlu0 %1598
    %1600 = vrot.lane.b32.xlu0 %v1536, 64
    %v1601 = vpop.permute.xlu0 %1600
    %1602 = vrot.lane.b32.xlu0 %v1540, 64
    %v1603 = vpop.permute.xlu0 %1602
    %1604 = vrot.lane.b32.xlu0 %v1537, 64
    %v1605 = vpop.permute.xlu0 %1604
    %1606 = vrot.lane.b32.xlu0 %v1541, 64
    %v1607 = vpop.permute.xlu0 %1606
    %1608 = vrot.lane.b32.xlu0 %v1538, 64
    %v1609 = vpop.permute.xlu0 %1608
    %1610 = vrot.lane.b32.xlu0 %v1542, 64
    %v1611 = vpop.permute.xlu0 %1610
    %vm1612 = vcmp.lt.s32.totalorder %v26, 64
    %v1613 = vsel %vm1612, %v1605, %v1609
    %v1614 = vsel %vm1612, %v1607, %v1611
    %v1615 = vsel %vm1612, %v1601, %v1605
    %v1616 = vsel %vm1612, %v1603, %v1607
    %v1617 = vsel %vm1612, %v1597, %v1601
    %v1618 = vsel %vm1612, %v1599, %v1603
    %v1619 = vsel %vm1612, %v1609, %v1597
    %v1620 = vsel %vm1612, %v1611, %v1599
    %v1621 = vsel %vm1568, 1, 0
    %v1622 = vsel %vm1569, 1, 0
    %v1623 = vsel %vm1570, 1, 0
    %v1624 = vsel %vm1571, 1, 0
    %vm1625 = vcmp.eq.s32.totalorder %v1621, 1
    %vm1626 = vcmp.eq.s32.totalorder %v1622, 1
    %vm1627 = vcmp.eq.s32.totalorder %v1623, 1
    %vm1628 = vcmp.eq.s32.totalorder %v1624, 1
    %v1629 = vsel %vm1625, %v1619, 0.0
    %v1630 = vsel %vm1626, %v1617, 0.0
    %v1631 = vsel %vm1627, %v1615, 0.0
    %v1632 = vsel %vm1628, %v1613, 0.0
    %v1633 = vsel %vm1625, %v1620, 0.0
    %v1634 = vsel %vm1626, %v1618, 0.0
    %v1635 = vsel %vm1627, %v1616, 0.0
    %v1636 = vsel %vm1628, %v1614, 0.0
    %1637 = vrot.lane.b32.xlu0 %v1535, 60
    %v1638 = vpop.permute.xlu0 %1637
    %1639 = vrot.lane.b32.xlu0 %v1539, 60
    %v1640 = vpop.permute.xlu0 %1639
    %1641 = vrot.lane.b32.xlu0 %v1536, 60
    %v1642 = vpop.permute.xlu0 %1641
    %1643 = vrot.lane.b32.xlu0 %v1540, 60
    %v1644 = vpop.permute.xlu0 %1643
    %1645 = vrot.lane.b32.xlu0 %v1537, 60
    %v1646 = vpop.permute.xlu0 %1645
    %1647 = vrot.lane.b32.xlu0 %v1541, 60
    %v1648 = vpop.permute.xlu0 %1647
    %1649 = vrot.lane.b32.xlu0 %v1538, 60
    %v1650 = vpop.permute.xlu0 %1649
    %1651 = vrot.lane.b32.xlu0 %v1542, 60
    %v1652 = vpop.permute.xlu0 %1651
    %vm1653 = vcmp.lt.s32.totalorder %v26, 60
    %v1654 = vsel %vm1653, %v1646, %v1650
    %v1655 = vsel %vm1653, %v1648, %v1652
    %v1656 = vsel %vm1653, %v1642, %v1646
    %v1657 = vsel %vm1653, %v1644, %v1648
    %v1658 = vsel %vm1653, %v1638, %v1642
    %v1659 = vsel %vm1653, %v1640, %v1644
    %v1660 = vsel %vm1653, %v1650, %v1638
    %v1661 = vsel %vm1653, %v1652, %v1640
    %vm1662 = vcmp.lt.s32.totalorder %v30, 12
    %vm1663 = vcmp.lt.s32.totalorder %v31, 12
    %vm1664 = vcmp.lt.s32.totalorder %v32, 12
    %vm1665 = vcmp.lt.s32.totalorder %v33, 12
    %vm1666 = vmand %vm1568, %vm1662
    %vm1667 = vmand %vm1569, %vm1663
    %vm1668 = vmand %vm1570, %vm1664
    %vm1669 = vmand %vm1571, %vm1665
    %v1670 = vsel %vm1666, 1, 0
    %v1671 = vsel %vm1667, 1, 0
    %v1672 = vsel %vm1668, 1, 0
    %v1673 = vsel %vm1669, 1, 0
    %vm1674 = vcmp.eq.s32.totalorder %v1670, 1
    %vm1675 = vcmp.eq.s32.totalorder %v1671, 1
    %vm1676 = vcmp.eq.s32.totalorder %v1672, 1
    %vm1677 = vcmp.eq.s32.totalorder %v1673, 1
    %v1678 = vsel %vm1674, %v1660, 0.0
    %v1679 = vsel %vm1675, %v1658, 0.0
    %v1680 = vsel %vm1676, %v1656, 0.0
    %v1681 = vsel %vm1677, %v1654, 0.0
    %v1682 = vsel %vm1674, %v1661, 0.0
    %v1683 = vsel %vm1675, %v1659, 0.0
    %v1684 = vsel %vm1676, %v1657, 0.0
    %v1685 = vsel %vm1677, %v1655, 0.0
    %1686 = vrot.lane.b32.xlu0 %v1535, 4
    %v1687 = vpop.permute.xlu0 %1686
    %1688 = vrot.lane.b32.xlu0 %v1539, 4
    %v1689 = vpop.permute.xlu0 %1688
    %1690 = vrot.lane.b32.xlu0 %v1536, 4
    %v1691 = vpop.permute.xlu0 %1690
    %1692 = vrot.lane.b32.xlu0 %v1540, 4
    %v1693 = vpop.permute.xlu0 %1692
    %1694 = vrot.lane.b32.xlu0 %v1537, 4
    %v1695 = vpop.permute.xlu0 %1694
    %1696 = vrot.lane.b32.xlu0 %v1541, 4
    %v1697 = vpop.permute.xlu0 %1696
    %1698 = vrot.lane.b32.xlu0 %v1538, 4
    %v1699 = vpop.permute.xlu0 %1698
    %1700 = vrot.lane.b32.xlu0 %v1542, 4
    %v1701 = vpop.permute.xlu0 %1700
    %vm1702 = vcmp.lt.s32.totalorder %v26, 4
    %v1703 = vsel %vm1702, %v1695, %v1699
    %v1704 = vsel %vm1702, %v1697, %v1701
    %v1705 = vsel %vm1702, %v1691, %v1695
    %v1706 = vsel %vm1702, %v1693, %v1697
    %v1707 = vsel %vm1702, %v1687, %v1691
    %v1708 = vsel %vm1702, %v1689, %v1693
    %v1709 = vsel %vm1702, %v1699, %v1687
    %v1710 = vsel %vm1702, %v1701, %v1689
    %v1711 = vsel %vm1572, 1, 0
    %v1712 = vsel %vm1573, 1, 0
    %v1713 = vsel %vm1574, 1, 0
    %v1714 = vsel %vm1575, 1, 0
    %vm1715 = vcmp.eq.s32.totalorder %v1711, 1
    %vm1716 = vcmp.eq.s32.totalorder %v1712, 1
    %vm1717 = vcmp.eq.s32.totalorder %v1713, 1
    %vm1718 = vcmp.eq.s32.totalorder %v1714, 1
    %v1719 = vsel %vm1715, %v1709, 0.0
    %v1720 = vsel %vm1716, %v1707, 0.0
    %v1721 = vsel %vm1717, %v1705, 0.0
    %v1722 = vsel %vm1718, %v1703, 0.0
    %v1723 = vsel %vm1715, %v1710, 0.0
    %v1724 = vsel %vm1716, %v1708, 0.0
    %v1725 = vsel %vm1717, %v1706, 0.0
    %v1726 = vsel %vm1718, %v1704, 0.0
    %1727 = vrot.lane.b32.xlu0 %v1535, 124
    %v1728 = vpop.permute.xlu0 %1727
    %1729 = vrot.lane.b32.xlu0 %v1539, 124
    %v1730 = vpop.permute.xlu0 %1729
    %1731 = vrot.lane.b32.xlu0 %v1536, 124
    %v1732 = vpop.permute.xlu0 %1731
    %1733 = vrot.lane.b32.xlu0 %v1540, 124
    %v1734 = vpop.permute.xlu0 %1733
    %1735 = vrot.lane.b32.xlu0 %v1537, 124
    %v1736 = vpop.permute.xlu0 %1735
    %1737 = vrot.lane.b32.xlu0 %v1541, 124
    %v1738 = vpop.permute.xlu0 %1737
    %1739 = vrot.lane.b32.xlu0 %v1538, 124
    %v1740 = vpop.permute.xlu0 %1739
    %1741 = vrot.lane.b32.xlu0 %v1542, 124
    %v1742 = vpop.permute.xlu0 %1741
    %vm1743 = vcmp.lt.s32.totalorder %v26, 124
    %v1744 = vsel %vm1743, %v1736, %v1740
    %v1745 = vsel %vm1743, %v1738, %v1742
    %v1746 = vsel %vm1743, %v1732, %v1736
    %v1747 = vsel %vm1743, %v1734, %v1738
    %v1748 = vsel %vm1743, %v1728, %v1732
    %v1749 = vsel %vm1743, %v1730, %v1734
    %v1750 = vsel %vm1743, %v1740, %v1728
    %v1751 = vsel %vm1743, %v1742, %v1730
    %v1752 = vsel %vm1662, 1, 0
    %v1753 = vsel %vm1663, 1, 0
    %v1754 = vsel %vm1664, 1, 0
    %v1755 = vsel %vm1665, 1, 0
    %vm1756 = vcmp.eq.s32.totalorder %v1752, 1
    %vm1757 = vcmp.eq.s32.totalorder %v1753, 1
    %vm1758 = vcmp.eq.s32.totalorder %v1754, 1
    %vm1759 = vcmp.eq.s32.totalorder %v1755, 1
    %v1760 = vsel %vm1756, %v1748, 0.0
    %v1761 = vsel %vm1757, %v1746, 0.0
    %v1762 = vsel %vm1758, %v1744, 0.0
    %v1763 = vsel %vm1759, %v1750, 0.0
    %v1764 = vsel %vm1756, %v1749, 0.0
    %v1765 = vsel %vm1757, %v1747, 0.0
    %v1766 = vsel %vm1758, %v1745, 0.0
    %v1767 = vsel %vm1759, %v1751, 0.0
    %vm1768 = vcmp.lt.s32.totalorder %v38, 12
    %vm1769 = vcmp.lt.s32.totalorder %v39, 12
    %vm1770 = vcmp.lt.s32.totalorder %v40, 12
    %vm1771 = vcmp.lt.s32.totalorder %v41, 12
    %vm1772 = vmand %vm1768, %vm1572
    %vm1773 = vmand %vm1769, %vm1573
    %vm1774 = vmand %vm1770, %vm1574
    %vm1775 = vmand %vm1771, %vm1575
    %v1776 = vsel %vm1772, 1, 0
    %v1777 = vsel %vm1773, 1, 0
    %v1778 = vsel %vm1774, 1, 0
    %v1779 = vsel %vm1775, 1, 0
    %vm1780 = vcmp.eq.s32.totalorder %v1776, 1
    %vm1781 = vcmp.eq.s32.totalorder %v1777, 1
    %vm1782 = vcmp.eq.s32.totalorder %v1778, 1
    %vm1783 = vcmp.eq.s32.totalorder %v1779, 1
    %v1784 = vsel %vm1780, %v1564, 0.0
    %v1785 = vsel %vm1781, %v1562, 0.0
    %v1786 = vsel %vm1782, %v1560, 0.0
    %v1787 = vsel %vm1783, %v1566, 0.0
    %v1788 = vsel %vm1780, %v1565, 0.0
    %v1789 = vsel %vm1781, %v1563, 0.0
    %v1790 = vsel %vm1782, %v1561, 0.0
    %v1791 = vsel %vm1783, %v1567, 0.0
    %v1792 = vsel %vm1768, 1, 0
    %v1793 = vsel %vm1769, 1, 0
    %v1794 = vsel %vm1770, 1, 0
    %v1795 = vsel %vm1771, 1, 0
    %vm1796 = vcmp.eq.s32.totalorder %v1792, 1
    %vm1797 = vcmp.eq.s32.totalorder %v1793, 1
    %vm1798 = vcmp.eq.s32.totalorder %v1794, 1
    %vm1799 = vcmp.eq.s32.totalorder %v1795, 1
    %v1800 = vsel %vm1796, %v1617, 0.0
    %v1801 = vsel %vm1797, %v1615, 0.0
    %v1802 = vsel %vm1798, %v1613, 0.0
    %v1803 = vsel %vm1799, %v1619, 0.0
    %v1804 = vsel %vm1796, %v1618, 0.0
    %v1805 = vsel %vm1797, %v1616, 0.0
    %v1806 = vsel %vm1798, %v1614, 0.0
    %v1807 = vsel %vm1799, %v1620, 0.0
    %vm1808 = vmand %vm1768, %vm1662
    %vm1809 = vmand %vm1769, %vm1663
    %vm1810 = vmand %vm1770, %vm1664
    %vm1811 = vmand %vm1771, %vm1665
    %v1812 = vsel %vm1808, 1, 0
    %v1813 = vsel %vm1809, 1, 0
    %v1814 = vsel %vm1810, 1, 0
    %v1815 = vsel %vm1811, 1, 0
    %vm1816 = vcmp.eq.s32.totalorder %v1812, 1
    %vm1817 = vcmp.eq.s32.totalorder %v1813, 1
    %vm1818 = vcmp.eq.s32.totalorder %v1814, 1
    %vm1819 = vcmp.eq.s32.totalorder %v1815, 1
    %v1820 = vsel %vm1816, %v1658, 0.0
    %v1821 = vsel %vm1817, %v1656, 0.0
    %v1822 = vsel %vm1818, %v1654, 0.0
    %v1823 = vsel %vm1819, %v1660, 0.0
    %v1824 = vsel %vm1816, %v1659, 0.0
    %v1825 = vsel %vm1817, %v1657, 0.0
    %v1826 = vsel %vm1818, %v1655, 0.0
    %v1827 = vsel %vm1819, %v1661, 0.0
    %v1828 = vld [vmem:[#allocation2 + $0x40] sm:$0xff]
    %v1829 = vld [vmem:[#allocation2 + $0x48] sm:$0xff]
    %1831 = vset.pattern.permute.xlu0 16
    %1832 = vperm.xlu0 %1831, %v1829
    %v1833 = vpop.permute.xlu0 %1832
    %vm1835 = vcmask 130048
    %v1836 = vsel %vm1835, %v1829, 0
    %1838 = vmatprep.subr.mxu0 %v1805
    %1839 = vmatpush1.msra.mxu0 %v1804
    %1840 = vmatprep.subr.mxu0 %v1801
    %1841 = vmatpush1.msra.mxu0 %v1800
    %1842 = vmatprep.subr.mxu0 %v1789
    %1843 = vmatpush1.msra.mxu0 %v1788
    %1844 = vmatprep.subr.mxu0 %v1785
    %1845 = vmatpush1.msra.mxu0 %v1784
    %1846 = vmatprep.subr.mxu0 %v1765
    %1847 = vmatpush1.msra.mxu0 %v1764
    %1848 = vmatprep.subr.mxu0 %v1761
    %1849 = vmatpush1.msra.mxu0 %v1760
    %1850 = vmatprep.subr.mxu0 %v1540
    %1851 = vmatpush1.msra.mxu0 %v1539
    %1852 = vmatprep.subr.mxu0 %v1536
    %1853 = vmatpush1.msra.mxu0 %v1535
    %1854 = vmatprep.subr.mxu0 %v1724
    %1855 = vmatpush1.msra.mxu0 %v1723
    %1856 = vmatprep.subr.mxu0 %v1720
    %1857 = vmatpush1.msra.mxu0 %v1719
    %1858 = vmatprep.subr.mxu0 %v1683
    %1859 = vmatpush1.msra.mxu0 %v1682
    %1860 = vmatprep.subr.mxu0 %v1679
    %1861 = vmatpush1.msra.mxu0 %v1678
    %1862 = vmatprep.subr.mxu0 %v1634
    %1863 = vmatpush1.msra.mxu0 %v1633
    %1864 = vmatprep.subr.mxu0 %v1630
    %1865 = vmatpush1.msra.mxu0 %v1629
    %1866 = vmatprep.subr.mxu0 %v1593
    %1867 = vmatpush1.msra.mxu0 %v1592
    %1868 = vmatprep.subr.mxu0 %v1589
    %1869 = vmatpush1.msra.mxu0 %v1588
    %1870 = vmatprep.subr.mxu0 0.0
    %1871 = vmatpush2.msra.mxu0 0.0
    %1872 = vmatprep.subr.mxu0 0.0
    %1873 = vmatpush2.msra.mxu0 0.0
    %1874 = vmatprep.subr.mxu0 0.0
    %1875 = vmatpush2.msra.mxu0 0.0
    %1876 = vmatprep.subr.mxu0 0.0
    %1877 = vmatpush2.msra.mxu0 0.0
    %1878 = vmatprep.subr.mxu0 0.0
    %1879 = vmatpush2.msra.mxu0 0.0
    %1880 = vmatprep.subr.mxu0 0.0
    %1881 = vmatpush2.msra.mxu0 0.0
    %1882 = vmatprep.subr.mxu0 0.0
    %1883 = vmatpush2.msra.mxu0 0.0
    %1884 = vmatprep.subr.mxu0 0.0
    %1885 = vmatpush2.msra.mxu0 0.0
    %1886 = vmatprep.subr.mxu0 0.0
    %1887 = vmatpush2.msra.mxu0 0.0
    %1888 = vmatprep.subr.mxu0 0.0
    %1889 = vmatpush2.msra.mxu0 0.0
    %1890 = vmatprep.subr.mxu0 0.0
    %1891 = vmatpush2.msra.mxu0 0.0
    %1892 = vmatprep.subr.mxu0 0.0
    %1893 = vmatpush2.msra.mxu0 0.0
    %1894 = vmatprep.subr.mxu0 0.0
    %1895 = vmatpush2.msra.mxu0 0.0
    %1896 = vmatprep.subr.mxu0 0.0
    %1897 = vmatpush2.msra.mxu0 0.0
    %1898 = vmatprep.subr.mxu0 %v1825
    %1899 = vmatpush2.msra.mxu0 %v1824
    %1900 = vmatprep.subr.mxu0 %v1821
    %1901 = vmatpush2.msra.mxu0 %v1820
    %1902 = vmatprep.mubr.f32.mxu0 %v1836
    %1903 = vmatmul.mubr.f32.gmra.mxu0 %v1828
    %v1904 = vpop.f32.mrf.mxu0
    %v1905 = vadd.f32 %v1833, %v1904
    %v1906 = vpop.f32.mrf.mxu0
    %v1907 = vadd.f32 %v1833, %v1906
    %1908 = vdwg.mxu0
    %1909 = vmatprep.subr.mxu0 %v1807
    %1910 = vmatpush1.msra.mxu0 %v1806
    %1911 = vmatprep.subr.mxu0 %v1803
    %1912 = vmatpush1.msra.mxu0 %v1802
    %1913 = vmatprep.subr.mxu0 %v1791
    %1914 = vmatpush1.msra.mxu0 %v1790
    %1915 = vmatprep.subr.mxu0 %v1787
    %1916 = vmatpush1.msra.mxu0 %v1786
    %1917 = vmatprep.subr.mxu0 %v1767
    %1918 = vmatpush1.msra.mxu0 %v1766
    %1919 = vmatprep.subr.mxu0 %v1763
    %1920 = vmatpush1.msra.mxu0 %v1762
    %1921 = vmatprep.subr.mxu0 %v1542
    %1922 = vmatpush1.msra.mxu0 %v1541
    %1923 = vmatprep.subr.mxu0 %v1538
    %1924 = vmatpush1.msra.mxu0 %v1537
    %1925 = vmatprep.subr.mxu0 %v1726
    %1926 = vmatpush1.msra.mxu0 %v1725
    %1927 = vmatprep.subr.mxu0 %v1722
    %1928 = vmatpush1.msra.mxu0 %v1721
    %1929 = vmatprep.subr.mxu0 %v1685
    %1930 = vmatpush1.msra.mxu0 %v1684
    %1931 = vmatprep.subr.mxu0 %v1681
    %1932 = vmatpush1.msra.mxu0 %v1680
    %1933 = vmatprep.subr.mxu0 %v1636
    %1934 = vmatpush1.msra.mxu0 %v1635
    %1935 = vmatprep.subr.mxu0 %v1632
    %1936 = vmatpush1.msra.mxu0 %v1631
    %1937 = vmatprep.subr.mxu0 %v1595
    %1938 = vmatpush1.msra.mxu0 %v1594
    %1939 = vmatprep.subr.mxu0 %v1591
    %1940 = vmatpush1.msra.mxu0 %v1590
    %1941 = vmatprep.subr.mxu0 0.0
    %1942 = vmatpush2.msra.mxu0 0.0
    %1943 = vmatprep.subr.mxu0 0.0
    %1944 = vmatpush2.msra.mxu0 0.0
    %1945 = vmatprep.subr.mxu0 0.0
    %1946 = vmatpush2.msra.mxu0 0.0
    %1947 = vmatprep.subr.mxu0 0.0
    %1948 = vmatpush2.msra.mxu0 0.0
    %1949 = vmatprep.subr.mxu0 0.0
    %1950 = vmatpush2.msra.mxu0 0.0
    %1951 = vmatprep.subr.mxu0 0.0
    %1952 = vmatpush2.msra.mxu0 0.0
    %1953 = vmatprep.subr.mxu0 0.0
    %1954 = vmatpush2.msra.mxu0 0.0
    %1955 = vmatprep.subr.mxu0 0.0
    %1956 = vmatpush2.msra.mxu0 0.0
    %1957 = vmatprep.subr.mxu0 0.0
    %1958 = vmatpush2.msra.mxu0 0.0
    %1959 = vmatprep.subr.mxu0 0.0
    %1960 = vmatpush2.msra.mxu0 0.0
    %1961 = vmatprep.subr.mxu0 0.0
    %1962 = vmatpush2.msra.mxu0 0.0
    %1963 = vmatprep.subr.mxu0 0.0
    %1964 = vmatpush2.msra.mxu0 0.0
    %1965 = vmatprep.subr.mxu0 0.0
    %1966 = vmatpush2.msra.mxu0 0.0
    %1967 = vmatprep.subr.mxu0 0.0
    %1968 = vmatpush2.msra.mxu0 0.0
    %1969 = vmatprep.subr.mxu0 %v1827
    %1970 = vmatpush2.msra.mxu0 %v1826
    %1971 = vmatprep.subr.mxu0 %v1823
    %1972 = vmatpush2.msra.mxu0 %v1822
    %1973 = vmatprep.mubr.f32.mxu0 %v1836
    %1974 = vmatmul.mubr.f32.gmra.mxu0 %v1828
    %v1975 = vpop.f32.mrf.mxu0
    %v1976 = vadd.f32 %v1833, %v1975
    %v1977 = vpop.f32.mrf.mxu0
    %v1978 = vadd.f32 %v1833, %v1977
    %1979 = vdwg.mxu0
    %v1980 = vand.u32 %v30, 3
    %v1981 = vand.u32 %v31, 3
    %v1982 = vand.u32 %v32, 3
    %v1983 = vand.u32 %v33, 3
    %vm1984 = vcmp.eq.s32.totalorder %v1980, 0
    %vm1985 = vcmp.eq.s32.totalorder %v1981, 0
    %vm1986 = vcmp.eq.s32.totalorder %v1982, 0
    %vm1987 = vcmp.eq.s32.totalorder %v1983, 0
    %v1988 = vand.u32 %v38, 3
    %v1989 = vand.u32 %v39, 3
    %v1990 = vand.u32 %v40, 3
    %v1991 = vand.u32 %v41, 3
    %vm1992 = vcmp.eq.s32.totalorder %v1988, 0
    %vm1993 = vcmp.eq.s32.totalorder %v1989, 0
    %vm1994 = vcmp.eq.s32.totalorder %v1990, 0
    %vm1995 = vcmp.eq.s32.totalorder %v1991, 0
    %vm1996 = vmand %vm1984, %vm1992
    %vm1997 = vmand %vm1985, %vm1993
    %vm1998 = vmand %vm1986, %vm1994
    %vm1999 = vmand %vm1987, %vm1995
    %v2000 = vsel %vm1996, 1, 0
    %v2001 = vsel %vm1997, 1, 0
    %v2002 = vsel %vm1998, 1, 0
    %v2003 = vsel %vm1999, 1, 0
    %vm2004 = vcmp.eq.s32.totalorder %v2000, 1
    %vm2005 = vcmp.eq.s32.totalorder %v2001, 1
    %vm2006 = vcmp.eq.s32.totalorder %v2002, 1
    %vm2007 = vcmp.eq.s32.totalorder %v2003, 1
    %v2008 = vsel %vm2004, %v1905, 0.0
    %v2009 = vsel %vm2005, %v1907, 0.0
    %v2010 = vsel %vm2006, %v1976, 0.0
    %v2011 = vsel %vm2007, %v1978, 0.0
    %v2012 = vadd.f32 %v2008, %v2009
    %v2013 = vadd.f32 %v2012, %v2010
    %v2014 = vadd.f32 %v2013, %v2011
    %2015 = vadd.xlane.f32.xlu0 %v2014
    %v2016 = vpop.xlane.xlu0 %2015
    %v2017 = vmul.f32 %v2016, 0.03125
    %v2018 = vsub.f32 %v1905, %v2017
    %v2019 = vsub.f32 %v1907, %v2017
    %v2020 = vsub.f32 %v1976, %v2017
    %v2021 = vsub.f32 %v1978, %v2017
    %v2022 = vmul.f32 %v2018, %v2018
    %v2023 = vmul.f32 %v2019, %v2019
    %v2024 = vmul.f32 %v2020, %v2020
    %v2025 = vmul.f32 %v2021, %v2021
    %v2026 = vsel %vm2004, %v2022, 0.0
    %v2027 = vsel %vm2005, %v2023, 0.0
    %v2028 = vsel %vm2006, %v2024, 0.0
    %v2029 = vsel %vm2007, %v2025, 0.0
    %v2030 = vadd.f32 %v2026, %v2027
    %v2031 = vadd.f32 %v2030, %v2028
    %v2032 = vadd.f32 %v2031, %v2029
    %2033 = vadd.xlane.f32.xlu0 %v2032
    %v2034 = vpop.xlane.xlu0 %2033
    %v2035 = vmul.f32 %v2034, 0.03125
    %v2036 = vadd.f32 %v2035, 1e-05
    %v2037 = vrsqrt.pop %v2036
    %v2038 = vmul.f32 %v2018, %v2037
    %v2039 = vmul.f32 %v2019, %v2037
    %v2040 = vmul.f32 %v2020, %v2037
    %v2041 = vmul.f32 %v2021, %v2037
    %2042 = vset.pattern.permute.xlu0 17
    %2043 = vperm.xlu0 %2042, %v1829
    %v2044 = vpop.permute.xlu0 %2043
    %v2046 = vmul.f32 %v2038, %v2044
    %v2047 = vmul.f32 %v2039, %v2044
    %v2048 = vmul.f32 %v2040, %v2044
    %v2049 = vmul.f32 %v2041, %v2044
    %2050 = vset.pattern.permute.xlu0 18
    %2051 = vperm.xlu0 %2050, %v1829
    %v2052 = vpop.permute.xlu0 %2051
    %v2054 = vadd.f32 %v2046, %v2052
    %v2055 = vadd.f32 %v2047, %v2052
    %v2056 = vadd.f32 %v2048, %v2052
    %v2057 = vadd.f32 %v2049, %v2052
    %v2058 = vmax.f32 %v2054, 0.0
    %v2059 = vmax.f32 %v2055, 0.0
    %v2060 = vmax.f32 %v2056, 0.0
    %v2061 = vmax.f32 %v2057, 0.0
    %v2062 = vand.u32 %v30, 2
    %v2063 = vand.u32 %v31, 2
    %v2064 = vand.u32 %v32, 2
    %v2065 = vand.u32 %v33, 2
    %vm2066 = vcmp.ne.s32.totalorder %v2062, 0
    %vm2067 = vcmp.ne.s32.totalorder %v2063, 0
    %vm2068 = vcmp.ne.s32.totalorder %v2064, 0
    %vm2069 = vcmp.ne.s32.totalorder %v2065, 0
    %2070 = vrot.lane.b32.xlu0 %v2058, 2
    %v2071 = vpop.permute.xlu0 %2070
    %2072 = vrot.lane.b32.xlu0 %v2059, 2
    %v2073 = vpop.permute.xlu0 %2072
    %2074 = vrot.lane.b32.xlu0 %v2060, 2
    %v2075 = vpop.permute.xlu0 %2074
    %2076 = vrot.lane.b32.xlu0 %v2061, 2
    %v2077 = vpop.permute.xlu0 %2076
    %v2078 = vsel %vm1044, %v2075, %v2077
    %v2079 = vsel %vm1044, %v2073, %v2075
    %v2080 = vsel %vm1044, %v2071, %v2073
    %v2081 = vsel %vm1044, %v2077, %v2071
    %v2082 = vsel %vm2066, 1, 0
    %v2083 = vsel %vm2067, 1, 0
    %v2084 = vsel %vm2068, 1, 0
    %v2085 = vsel %vm2069, 1, 0
    %vm2086 = vcmp.eq.s32.totalorder %v2082, 1
    %vm2087 = vcmp.eq.s32.totalorder %v2083, 1
    %vm2088 = vcmp.eq.s32.totalorder %v2084, 1
    %vm2089 = vcmp.eq.s32.totalorder %v2085, 1
    %v2090 = vsel %vm2086, %v2081, %v2058
    %v2091 = vsel %vm2087, %v2080, %v2059
    %v2092 = vsel %vm2088, %v2079, %v2060
    %v2093 = vsel %vm2089, %v2078, %v2061
    %v2094 = vand.u32 %v38, 2
    %v2095 = vand.u32 %v39, 2
    %v2096 = vand.u32 %v40, 2
    %v2097 = vand.u32 %v41, 2
    %vm2098 = vcmp.ne.s32.totalorder %v2094, 0
    %vm2099 = vcmp.ne.s32.totalorder %v2095, 0
    %vm2100 = vcmp.ne.s32.totalorder %v2096, 0
    %vm2101 = vcmp.ne.s32.totalorder %v2097, 0
    %2102 = vrot.lane.b32.xlu0 %v2090, 32
    %v2103 = vpop.permute.xlu0 %2102
    %2104 = vrot.lane.b32.xlu0 %v2091, 32
    %v2105 = vpop.permute.xlu0 %2104
    %2106 = vrot.lane.b32.xlu0 %v2092, 32
    %v2107 = vpop.permute.xlu0 %2106
    %2108 = vrot.lane.b32.xlu0 %v2093, 32
    %v2109 = vpop.permute.xlu0 %2108
    %v2110 = vsel %vm986, %v2107, %v2109
    %v2111 = vsel %vm986, %v2105, %v2107
    %v2112 = vsel %vm986, %v2103, %v2105
    %v2113 = vsel %vm986, %v2109, %v2103
    %v2114 = vsel %vm2098, 1, 0
    %v2115 = vsel %vm2099, 1, 0
    %v2116 = vsel %vm2100, 1, 0
    %v2117 = vsel %vm2101, 1, 0
    %vm2118 = vcmp.eq.s32.totalorder %v2114, 1
    %vm2119 = vcmp.eq.s32.totalorder %v2115, 1
    %vm2120 = vcmp.eq.s32.totalorder %v2116, 1
    %vm2121 = vcmp.eq.s32.totalorder %v2117, 1
    %v2122 = vsel %vm2118, %v2113, %v2090
    %v2123 = vsel %vm2119, %v2112, %v2091
    %v2124 = vsel %vm2120, %v2111, %v2092
    %v2125 = vsel %vm2121, %v2110, %v2093
    %v2126 = vadd.f32 %v2122, %v937
    %v2127 = vadd.f32 %v2123, %v938
    %v2128 = vadd.f32 %v2124, %v939
    %v2129 = vadd.f32 %v2125, %v940
    %2130 = vrot.lane.b32.xlu0 %v2126, 34
    %v2131 = vpop.permute.xlu0 %2130
    %2132 = vrot.lane.b32.xlu0 %v2127, 34
    %v2133 = vpop.permute.xlu0 %2132
    %2134 = vrot.lane.b32.xlu0 %v2128, 34
    %v2135 = vpop.permute.xlu0 %2134
    %2136 = vrot.lane.b32.xlu0 %v2129, 34
    %v2137 = vpop.permute.xlu0 %2136
    %v2138 = vsel %vm949, %v2135, %v2137
    %v2139 = vsel %vm949, %v2133, %v2135
    %v2140 = vsel %vm949, %v2131, %v2133
    %v2141 = vsel %vm949, %v2137, %v2131
    %v2142 = vsel %vm970, %v2141, 0.0
    %v2143 = vsel %vm971, %v2140, 0.0
    %v2144 = vsel %vm972, %v2139, 0.0
    %v2145 = vsel %vm973, %v2138, 0.0
    %2146 = vrot.lane.b32.xlu0 %v2126, 32
    %v2147 = vpop.permute.xlu0 %2146
    %2148 = vrot.lane.b32.xlu0 %v2127, 32
    %v2149 = vpop.permute.xlu0 %2148
    %2150 = vrot.lane.b32.xlu0 %v2128, 32
    %v2151 = vpop.permute.xlu0 %2150
    %2152 = vrot.lane.b32.xlu0 %v2129, 32
    %v2153 = vpop.permute.xlu0 %2152
    %v2154 = vsel %vm986, %v2151, %v2153
    %v2155 = vsel %vm986, %v2149, %v2151
    %v2156 = vsel %vm986, %v2147, %v2149
    %v2157 = vsel %vm986, %v2153, %v2147
    %v2158 = vsel %vm995, %v2157, 0.0
    %v2159 = vsel %vm996, %v2156, 0.0
    %v2160 = vsel %vm997, %v2155, 0.0
    %v2161 = vsel %vm998, %v2154, 0.0
    %2162 = vrot.lane.b32.xlu0 %v2126, 30
    %v2163 = vpop.permute.xlu0 %2162
    %2164 = vrot.lane.b32.xlu0 %v2127, 30
    %v2165 = vpop.permute.xlu0 %2164
    %2166 = vrot.lane.b32.xlu0 %v2128, 30
    %v2167 = vpop.permute.xlu0 %2166
    %2168 = vrot.lane.b32.xlu0 %v2129, 30
    %v2169 = vpop.permute.xlu0 %2168
    %v2170 = vsel %vm1011, %v2167, %v2169
    %v2171 = vsel %vm1011, %v2165, %v2167
    %v2172 = vsel %vm1011, %v2163, %v2165
    %v2173 = vsel %vm1011, %v2169, %v2163
    %v2174 = vsel %vm1028, %v2173, 0.0
    %v2175 = vsel %vm1029, %v2172, 0.0
    %v2176 = vsel %vm1030, %v2171, 0.0
    %v2177 = vsel %vm1031, %v2170, 0.0
    %2178 = vrot.lane.b32.xlu0 %v2126, 2
    %v2179 = vpop.permute.xlu0 %2178
    %2180 = vrot.lane.b32.xlu0 %v2127, 2
    %v2181 = vpop.permute.xlu0 %2180
    %2182 = vrot.lane.b32.xlu0 %v2128, 2
    %v2183 = vpop.permute.xlu0 %2182
    %2184 = vrot.lane.b32.xlu0 %v2129, 2
    %v2185 = vpop.permute.xlu0 %2184
    %v2186 = vsel %vm1044, %v2183, %v2185
    %v2187 = vsel %vm1044, %v2181, %v2183
    %v2188 = vsel %vm1044, %v2179, %v2181
    %v2189 = vsel %vm1044, %v2185, %v2179
    %v2190 = vsel %vm1053, %v2189, 0.0
    %v2191 = vsel %vm1054, %v2188, 0.0
    %v2192 = vsel %vm1055, %v2187, 0.0
    %v2193 = vsel %vm1056, %v2186, 0.0
    %2194 = vrot.lane.b32.xlu0 %v2126, 126
    %v2195 = vpop.permute.xlu0 %2194
    %2196 = vrot.lane.b32.xlu0 %v2127, 126
    %v2197 = vpop.permute.xlu0 %2196
    %2198 = vrot.lane.b32.xlu0 %v2128, 126
    %v2199 = vpop.permute.xlu0 %2198
    %2200 = vrot.lane.b32.xlu0 %v2129, 126
    %v2201 = vpop.permute.xlu0 %2200
    %v2202 = vsel %vm1069, %v2199, %v2201
    %v2203 = vsel %vm1069, %v2197, %v2199
    %v2204 = vsel %vm1069, %v2195, %v2197
    %v2205 = vsel %vm1069, %v2201, %v2195
    %v2206 = vsel %vm1078, %v2204, 0.0
    %v2207 = vsel %vm1079, %v2203, 0.0
    %v2208 = vsel %vm1080, %v2202, 0.0
    %v2209 = vsel %vm1081, %v2205, 0.0
    %2210 = vrot.lane.b32.xlu0 %v2126, 98
    %v2211 = vpop.permute.xlu0 %2210
    %2212 = vrot.lane.b32.xlu0 %v2127, 98
    %v2213 = vpop.permute.xlu0 %2212
    %2214 = vrot.lane.b32.xlu0 %v2128, 98
    %v2215 = vpop.permute.xlu0 %2214
    %2216 = vrot.lane.b32.xlu0 %v2129, 98
    %v2217 = vpop.permute.xlu0 %2216
    %v2218 = vsel %vm1094, %v2215, %v2217
    %v2219 = vsel %vm1094, %v2213, %v2215
    %v2220 = vsel %vm1094, %v2211, %v2213
    %v2221 = vsel %vm1094, %v2217, %v2211
    %v2222 = vsel %vm1111, %v2220, 0.0
    %v2223 = vsel %vm1112, %v2219, 0.0
    %v2224 = vsel %vm1113, %v2218, 0.0
    %v2225 = vsel %vm1114, %v2221, 0.0
    %2226 = vrot.lane.b32.xlu0 %v2126, 96
    %v2227 = vpop.permute.xlu0 %2226
    %2228 = vrot.lane.b32.xlu0 %v2127, 96
    %v2229 = vpop.permute.xlu0 %2228
    %2230 = vrot.lane.b32.xlu0 %v2128, 96
    %v2231 = vpop.permute.xlu0 %2230
    %2232 = vrot.lane.b32.xlu0 %v2129, 96
    %v2233 = vpop.permute.xlu0 %2232
    %v2234 = vsel %vm1127, %v2231, %v2233
    %v2235 = vsel %vm1127, %v2229, %v2231
    %v2236 = vsel %vm1127, %v2227, %v2229
    %v2237 = vsel %vm1127, %v2233, %v2227
    %v2238 = vsel %vm1136, %v2236, 0.0
    %v2239 = vsel %vm1137, %v2235, 0.0
    %v2240 = vsel %vm1138, %v2234, 0.0
    %v2241 = vsel %vm1139, %v2237, 0.0
    %2242 = vrot.lane.b32.xlu0 %v2126, 94
    %v2243 = vpop.permute.xlu0 %2242
    %2244 = vrot.lane.b32.xlu0 %v2127, 94
    %v2245 = vpop.permute.xlu0 %2244
    %2246 = vrot.lane.b32.xlu0 %v2128, 94
    %v2247 = vpop.permute.xlu0 %2246
    %2248 = vrot.lane.b32.xlu0 %v2129, 94
    %v2249 = vpop.permute.xlu0 %2248
    %v2250 = vsel %vm1152, %v2247, %v2249
    %v2251 = vsel %vm1152, %v2245, %v2247
    %v2252 = vsel %vm1152, %v2243, %v2245
    %v2253 = vsel %vm1152, %v2249, %v2243
    %v2254 = vsel %vm1165, %v2252, 0.0
    %v2255 = vsel %vm1166, %v2251, 0.0
    %v2256 = vsel %vm1167, %v2250, 0.0
    %v2257 = vsel %vm1168, %v2253, 0.0
    %v2258 = vld [vmem:[#allocation2 + $0x50] sm:$0xff]
    %2260 = vset.pattern.permute.xlu0 72
    %2261 = vperm.xlu0 %2260, %v2258
    %v2262 = vpop.permute.xlu0 %2261
    %v2264 = vsel %vm718, %v2258, 0
    %2266 = vmatprep.subr.mxu0 0.0
    %2267 = vmatpush1.msra.mxu0 0.0
    %2268 = vmatprep.subr.mxu0 0.0
    %2269 = vmatpush1.msra.mxu0 0.0
    %2270 = vmatprep.subr.mxu0 0.0
    %2271 = vmatpush1.msra.mxu0 0.0
    %2272 = vmatprep.subr.mxu0 0.0
    %2273 = vmatpush1.msra.mxu0 0.0
    %2274 = vmatprep.subr.mxu0 0.0
    %2275 = vmatpush1.msra.mxu0 0.0
    %2276 = vmatprep.subr.mxu0 0.0
    %2277 = vmatpush1.msra.mxu0 0.0
    %2278 = vmatprep.subr.mxu0 0.0
    %2279 = vmatpush1.msra.mxu0 0.0
    %2280 = vmatprep.subr.mxu0 %v2255
    %2281 = vmatpush1.msra.mxu0 %v2254
    %2282 = vmatprep.subr.mxu0 %v2239
    %2283 = vmatpush1.msra.mxu0 %v2238
    %2284 = vmatprep.subr.mxu0 %v2223
    %2285 = vmatpush1.msra.mxu0 %v2222
    %2286 = vmatprep.subr.mxu0 %v2207
    %2287 = vmatpush1.msra.mxu0 %v2206
    %2288 = vmatprep.subr.mxu0 %v2127
    %2289 = vmatpush1.msra.mxu0 %v2126
    %2290 = vmatprep.subr.mxu0 %v2191
    %2291 = vmatpush1.msra.mxu0 %v2190
    %2292 = vmatprep.subr.mxu0 %v2175
    %2293 = vmatpush1.msra.mxu0 %v2174
    %2294 = vmatprep.subr.mxu0 %v2159
    %2295 = vmatpush1.msra.mxu0 %v2158
    %2296 = vmatprep.subr.mxu0 %v2143
    %2297 = vmatpush1.msra.mxu0 %v2142
    %2298 = vmatprep.subr.mxu0 0.0
    %2299 = vmatpush2.msra.mxu0 0.0
    %2300 = vmatprep.subr.mxu0 0.0
    %2301 = vmatpush2.msra.mxu0 0.0
    %2302 = vmatprep.subr.mxu0 0.0
    %2303 = vmatpush2.msra.mxu0 0.0
    %2304 = vmatprep.subr.mxu0 0.0
    %2305 = vmatpush2.msra.mxu0 0.0
    %2306 = vmatprep.subr.mxu0 0.0
    %2307 = vmatpush2.msra.mxu0 0.0
    %2308 = vmatprep.subr.mxu0 0.0
    %2309 = vmatpush2.msra.mxu0 0.0
    %2310 = vmatprep.subr.mxu0 0.0
    %2311 = vmatpush2.msra.mxu0 0.0
    %2312 = vmatprep.subr.mxu0 0.0
    %2313 = vmatpush2.msra.mxu0 0.0
    %2314 = vmatprep.subr.mxu0 0.0
    %2315 = vmatpush2.msra.mxu0 0.0
    %2316 = vmatprep.subr.mxu0 0.0
    %2317 = vmatpush2.msra.mxu0 0.0
    %2318 = vmatprep.subr.mxu0 0.0
    %2319 = vmatpush2.msra.mxu0 0.0
    %2320 = vmatprep.subr.mxu0 0.0
    %2321 = vmatpush2.msra.mxu0 0.0
    %2322 = vmatprep.subr.mxu0 0.0
    %2323 = vmatpush2.msra.mxu0 0.0
    %2324 = vmatprep.subr.mxu0 0.0
    %2325 = vmatpush2.msra.mxu0 0.0
    %2326 = vmatprep.subr.mxu0 0.0
    %2327 = vmatpush2.msra.mxu0 0.0
    %2328 = vmatprep.subr.mxu0 0.0
    %2329 = vmatpush2.msra.mxu0 0.0
    %2330 = vmatprep.mubr.f32.mxu0 0.0
    %2331 = vmatmul.mubr.f32.gmra.mxu0 %v2264
    %v2332 = vpop.f32.mrf.mxu0
    %v2333 = vadd.f32 %v2262, %v2332
    %v2334 = vpop.f32.mrf.mxu0
    %v2335 = vadd.f32 %v2262, %v2334
    %2336 = vdwg.mxu0
    %2337 = vmatprep.subr.mxu0 0.0
    %2338 = vmatpush1.msra.mxu0 0.0
    %2339 = vmatprep.subr.mxu0 0.0
    %2340 = vmatpush1.msra.mxu0 0.0
    %2341 = vmatprep.subr.mxu0 0.0
    %2342 = vmatpush1.msra.mxu0 0.0
    %2343 = vmatprep.subr.mxu0 0.0
    %2344 = vmatpush1.msra.mxu0 0.0
    %2345 = vmatprep.subr.mxu0 0.0
    %2346 = vmatpush1.msra.mxu0 0.0
    %2347 = vmatprep.subr.mxu0 0.0
    %2348 = vmatpush1.msra.mxu0 0.0
    %2349 = vmatprep.subr.mxu0 0.0
    %2350 = vmatpush1.msra.mxu0 0.0
    %2351 = vmatprep.subr.mxu0 %v2257
    %2352 = vmatpush1.msra.mxu0 %v2256
    %2353 = vmatprep.subr.mxu0 %v2241
    %2354 = vmatpush1.msra.mxu0 %v2240
    %2355 = vmatprep.subr.mxu0 %v2225
    %2356 = vmatpush1.msra.mxu0 %v2224
    %2357 = vmatprep.subr.mxu0 %v2209
    %2358 = vmatpush1.msra.mxu0 %v2208
    %2359 = vmatprep.subr.mxu0 %v2129
    %2360 = vmatpush1.msra.mxu0 %v2128
    %2361 = vmatprep.subr.mxu0 %v2193
    %2362 = vmatpush1.msra.mxu0 %v2192
    %2363 = vmatprep.subr.mxu0 %v2177
    %2364 = vmatpush1.msra.mxu0 %v2176
    %2365 = vmatprep.subr.mxu0 %v2161
    %2366 = vmatpush1.msra.mxu0 %v2160
    %2367 = vmatprep.subr.mxu0 %v2145
    %2368 = vmatpush1.msra.mxu0 %v2144
    %2369 = vmatprep.subr.mxu0 0.0
    %2370 = vmatpush2.msra.mxu0 0.0
    %2371 = vmatprep.subr.mxu0 0.0
    %2372 = vmatpush2.msra.mxu0 0.0
    %2373 = vmatprep.subr.mxu0 0.0
    %2374 = vmatpush2.msra.mxu0 0.0
    %2375 = vmatprep.subr.mxu0 0.0
    %2376 = vmatpush2.msra.mxu0 0.0
    %2377 = vmatprep.subr.mxu0 0.0
    %2378 = vmatpush2.msra.mxu0 0.0
    %2379 = vmatprep.subr.mxu0 0.0
    %2380 = vmatpush2.msra.mxu0 0.0
    %2381 = vmatprep.subr.mxu0 0.0
    %2382 = vmatpush2.msra.mxu0 0.0
    %2383 = vmatprep.subr.mxu0 0.0
    %2384 = vmatpush2.msra.mxu0 0.0
    %2385 = vmatprep.subr.mxu0 0.0
    %2386 = vmatpush2.msra.mxu0 0.0
    %2387 = vmatprep.subr.mxu0 0.0
    %2388 = vmatpush2.msra.mxu0 0.0
    %2389 = vmatprep.subr.mxu0 0.0
    %2390 = vmatpush2.msra.mxu0 0.0
    %2391 = vmatprep.subr.mxu0 0.0
    %2392 = vmatpush2.msra.mxu0 0.0
    %2393 = vmatprep.subr.mxu0 0.0
    %2394 = vmatpush2.msra.mxu0 0.0
    %2395 = vmatprep.subr.mxu0 0.0
    %2396 = vmatpush2.msra.mxu0 0.0
    %2397 = vmatprep.subr.mxu0 0.0
    %2398 = vmatpush2.msra.mxu0 0.0
    %2399 = vmatprep.subr.mxu0 0.0
    %2400 = vmatpush2.msra.mxu0 0.0
    %2401 = vmatprep.mubr.f32.mxu0 0.0
    %2402 = vmatmul.mubr.f32.gmra.mxu0 %v2264
    %v2403 = vpop.f32.mrf.mxu0
    %v2404 = vadd.f32 %v2262, %v2403
    %v2405 = vpop.f32.mrf.mxu0
    %v2406 = vadd.f32 %v2262, %v2405
    %2407 = vdwg.mxu0
    %v2408 = vsel %vm1367, %v2333, 0.0
    %v2409 = vsel %vm1368, %v2335, 0.0
    %v2410 = vsel %vm1369, %v2404, 0.0
    %v2411 = vsel %vm1370, %v2406, 0.0
    %v2412 = vadd.f32 %v2408, %v2409
    %v2413 = vadd.f32 %v2412, %v2410
    %v2414 = vadd.f32 %v2413, %v2411
    %2415 = vadd.xlane.f32.xlu0 %v2414
    %v2416 = vpop.xlane.xlu0 %2415
    %v2417 = vmul.f32 %v2416, 0.0078125
    %v2418 = vsub.f32 %v2333, %v2417
    %v2419 = vsub.f32 %v2335, %v2417
    %v2420 = vsub.f32 %v2404, %v2417
    %v2421 = vsub.f32 %v2406, %v2417
    %v2422 = vmul.f32 %v2418, %v2418
    %v2423 = vmul.f32 %v2419, %v2419
    %v2424 = vmul.f32 %v2420, %v2420
    %v2425 = vmul.f32 %v2421, %v2421
    %v2426 = vsel %vm1367, %v2422, 0.0
    %v2427 = vsel %vm1368, %v2423, 0.0
    %v2428 = vsel %vm1369, %v2424, 0.0
    %v2429 = vsel %vm1370, %v2425, 0.0
    %v2430 = vadd.f32 %v2426, %v2427
    %v2431 = vadd.f32 %v2430, %v2428
    %v2432 = vadd.f32 %v2431, %v2429
    %2433 = vadd.xlane.f32.xlu0 %v2432
    %v2434 = vpop.xlane.xlu0 %2433
    %v2435 = vmul.f32 %v2434, 0.0078125
    %v2436 = vadd.f32 %v2435, 1e-05
    %v2437 = vrsqrt.pop %v2436
    %v2438 = vmul.f32 %v2418, %v2437
    %v2439 = vmul.f32 %v2419, %v2437
    %v2440 = vmul.f32 %v2420, %v2437
    %v2441 = vmul.f32 %v2421, %v2437
    %2442 = vset.pattern.permute.xlu0 73
    %2443 = vperm.xlu0 %2442, %v2258
    %v2444 = vpop.permute.xlu0 %2443
    %v2446 = vmul.f32 %v2438, %v2444
    %v2447 = vmul.f32 %v2439, %v2444
    %v2448 = vmul.f32 %v2440, %v2444
    %v2449 = vmul.f32 %v2441, %v2444
    %2450 = vset.pattern.permute.xlu0 74
    %2451 = vperm.xlu0 %2450, %v2258
    %v2452 = vpop.permute.xlu0 %2451
    %v2454 = vadd.f32 %v2446, %v2452
    %v2455 = vadd.f32 %v2447, %v2452
    %v2456 = vadd.f32 %v2448, %v2452
    %v2457 = vadd.f32 %v2449, %v2452
    %v2458 = vmax.f32 %v2454, 0.0
    %v2459 = vmax.f32 %v2455, 0.0
    %v2460 = vmax.f32 %v2456, 0.0
    %v2461 = vmax.f32 %v2457, 0.0
    %2462 = vrot.lane.b32.xlu0 %v2458, 34
    %v2463 = vpop.permute.xlu0 %2462
    %2464 = vrot.lane.b32.xlu0 %v2459, 34
    %v2465 = vpop.permute.xlu0 %2464
    %2466 = vrot.lane.b32.xlu0 %v2460, 34
    %v2467 = vpop.permute.xlu0 %2466
    %2468 = vrot.lane.b32.xlu0 %v2461, 34
    %v2469 = vpop.permute.xlu0 %2468
    %v2470 = vsel %vm949, %v2467, %v2469
    %v2471 = vsel %vm949, %v2465, %v2467
    %v2472 = vsel %vm949, %v2463, %v2465
    %v2473 = vsel %vm949, %v2469, %v2463
    %v2474 = vsel %vm970, %v2473, 0.0
    %v2475 = vsel %vm971, %v2472, 0.0
    %v2476 = vsel %vm972, %v2471, 0.0
    %v2477 = vsel %vm973, %v2470, 0.0
    %2478 = vrot.lane.b32.xlu0 %v2458, 32
    %v2479 = vpop.permute.xlu0 %2478
    %2480 = vrot.lane.b32.xlu0 %v2459, 32
    %v2481 = vpop.permute.xlu0 %2480
    %2482 = vrot.lane.b32.xlu0 %v2460, 32
    %v2483 = vpop.permute.xlu0 %2482
    %2484 = vrot.lane.b32.xlu0 %v2461, 32
    %v2485 = vpop.permute.xlu0 %2484
    %v2486 = vsel %vm986, %v2483, %v2485
    %v2487 = vsel %vm986, %v2481, %v2483
    %v2488 = vsel %vm986, %v2479, %v2481
    %v2489 = vsel %vm986, %v2485, %v2479
    %v2490 = vsel %vm995, %v2489, 0.0
    %v2491 = vsel %vm996, %v2488, 0.0
    %v2492 = vsel %vm997, %v2487, 0.0
    %v2493 = vsel %vm998, %v2486, 0.0
    %2494 = vrot.lane.b32.xlu0 %v2458, 30
    %v2495 = vpop.permute.xlu0 %2494
    %2496 = vrot.lane.b32.xlu0 %v2459, 30
    %v2497 = vpop.permute.xlu0 %2496
    %2498 = vrot.lane.b32.xlu0 %v2460, 30
    %v2499 = vpop.permute.xlu0 %2498
    %2500 = vrot.lane.b32.xlu0 %v2461, 30
    %v2501 = vpop.permute.xlu0 %2500
    %v2502 = vsel %vm1011, %v2499, %v2501
    %v2503 = vsel %vm1011, %v2497, %v2499
    %v2504 = vsel %vm1011, %v2495, %v2497
    %v2505 = vsel %vm1011, %v2501, %v2495
    %v2506 = vsel %vm1028, %v2505, 0.0
    %v2507 = vsel %vm1029, %v2504, 0.0
    %v2508 = vsel %vm1030, %v2503, 0.0
    %v2509 = vsel %vm1031, %v2502, 0.0
    %2510 = vrot.lane.b32.xlu0 %v2458, 2
    %v2511 = vpop.permute.xlu0 %2510
    %2512 = vrot.lane.b32.xlu0 %v2459, 2
    %v2513 = vpop.permute.xlu0 %2512
    %2514 = vrot.lane.b32.xlu0 %v2460, 2
    %v2515 = vpop.permute.xlu0 %2514
    %2516 = vrot.lane.b32.xlu0 %v2461, 2
    %v2517 = vpop.permute.xlu0 %2516
    %v2518 = vsel %vm1044, %v2515, %v2517
    %v2519 = vsel %vm1044, %v2513, %v2515
    %v2520 = vsel %vm1044, %v2511, %v2513
    %v2521 = vsel %vm1044, %v2517, %v2511
    %v2522 = vsel %vm1053, %v2521, 0.0
    %v2523 = vsel %vm1054, %v2520, 0.0
    %v2524 = vsel %vm1055, %v2519, 0.0
    %v2525 = vsel %vm1056, %v2518, 0.0
    %2526 = vrot.lane.b32.xlu0 %v2458, 126
    %v2527 = vpop.permute.xlu0 %2526
    %2528 = vrot.lane.b32.xlu0 %v2459, 126
    %v2529 = vpop.permute.xlu0 %2528
    %2530 = vrot.lane.b32.xlu0 %v2460, 126
    %v2531 = vpop.permute.xlu0 %2530
    %2532 = vrot.lane.b32.xlu0 %v2461, 126
    %v2533 = vpop.permute.xlu0 %2532
    %v2534 = vsel %vm1069, %v2531, %v2533
    %v2535 = vsel %vm1069, %v2529, %v2531
    %v2536 = vsel %vm1069, %v2527, %v2529
    %v2537 = vsel %vm1069, %v2533, %v2527
    %v2538 = vsel %vm1078, %v2536, 0.0
    %v2539 = vsel %vm1079, %v2535, 0.0
    %v2540 = vsel %vm1080, %v2534, 0.0
    %v2541 = vsel %vm1081, %v2537, 0.0
    %2542 = vrot.lane.b32.xlu0 %v2458, 98
    %v2543 = vpop.permute.xlu0 %2542
    %2544 = vrot.lane.b32.xlu0 %v2459, 98
    %v2545 = vpop.permute.xlu0 %2544
    %2546 = vrot.lane.b32.xlu0 %v2460, 98
    %v2547 = vpop.permute.xlu0 %2546
    %2548 = vrot.lane.b32.xlu0 %v2461, 98
    %v2549 = vpop.permute.xlu0 %2548
    %v2550 = vsel %vm1094, %v2547, %v2549
    %v2551 = vsel %vm1094, %v2545, %v2547
    %v2552 = vsel %vm1094, %v2543, %v2545
    %v2553 = vsel %vm1094, %v2549, %v2543
    %v2554 = vsel %vm1111, %v2552, 0.0
    %v2555 = vsel %vm1112, %v2551, 0.0
    %v2556 = vsel %vm1113, %v2550, 0.0
    %v2557 = vsel %vm1114, %v2553, 0.0
    %2558 = vrot.lane.b32.xlu0 %v2458, 96
    %v2559 = vpop.permute.xlu0 %2558
    %2560 = vrot.lane.b32.xlu0 %v2459, 96
    %v2561 = vpop.permute.xlu0 %2560
    %2562 = vrot.lane.b32.xlu0 %v2460, 96
    %v2563 = vpop.permute.xlu0 %2562
    %2564 = vrot.lane.b32.xlu0 %v2461, 96
    %v2565 = vpop.permute.xlu0 %2564
    %v2566 = vsel %vm1127, %v2563, %v2565
    %v2567 = vsel %vm1127, %v2561, %v2563
    %v2568 = vsel %vm1127, %v2559, %v2561
    %v2569 = vsel %vm1127, %v2565, %v2559
    %v2570 = vsel %vm1136, %v2568, 0.0
    %v2571 = vsel %vm1137, %v2567, 0.0
    %v2572 = vsel %vm1138, %v2566, 0.0
    %v2573 = vsel %vm1139, %v2569, 0.0
    %2574 = vrot.lane.b32.xlu0 %v2458, 94
    %v2575 = vpop.permute.xlu0 %2574
    %2576 = vrot.lane.b32.xlu0 %v2459, 94
    %v2577 = vpop.permute.xlu0 %2576
    %2578 = vrot.lane.b32.xlu0 %v2460, 94
    %v2579 = vpop.permute.xlu0 %2578
    %2580 = vrot.lane.b32.xlu0 %v2461, 94
    %v2581 = vpop.permute.xlu0 %2580
    %v2582 = vsel %vm1152, %v2579, %v2581
    %v2583 = vsel %vm1152, %v2577, %v2579
    %v2584 = vsel %vm1152, %v2575, %v2577
    %v2585 = vsel %vm1152, %v2581, %v2575
    %v2586 = vsel %vm1165, %v2584, 0.0
    %v2587 = vsel %vm1166, %v2583, 0.0
    %v2588 = vsel %vm1167, %v2582, 0.0
    %v2589 = vsel %vm1168, %v2585, 0.0
    %2590 = vmatprep.subr.mxu0 0.0
    %2591 = vmatpush1.msra.mxu0 0.0
    %2592 = vmatprep.subr.mxu0 0.0
    %2593 = vmatpush1.msra.mxu0 0.0
    %2594 = vmatprep.subr.mxu0 0.0
    %2595 = vmatpush1.msra.mxu0 0.0
    %2596 = vmatprep.subr.mxu0 0.0
    %2597 = vmatpush1.msra.mxu0 0.0
    %2598 = vmatprep.subr.mxu0 0.0
    %2599 = vmatpush1.msra.mxu0 0.0
    %2600 = vmatprep.subr.mxu0 0.0
    %2601 = vmatpush1.msra.mxu0 0.0
    %2602 = vmatprep.subr.mxu0 0.0
    %2603 = vmatpush1.msra.mxu0 0.0
    %2604 = vmatprep.subr.mxu0 %v2587
    %2605 = vmatpush1.msra.mxu0 %v2586
    %2606 = vmatprep.subr.mxu0 %v2571
    %2607 = vmatpush1.msra.mxu0 %v2570
    %2608 = vmatprep.subr.mxu0 %v2555
    %2609 = vmatpush1.msra.mxu0 %v2554
    %2610 = vmatprep.subr.mxu0 %v2539
    %2611 = vmatpush1.msra.mxu0 %v2538
    %2612 = vmatprep.subr.mxu0 %v2459
    %2613 = vmatpush1.msra.mxu0 %v2458
    %2614 = vmatprep.subr.mxu0 %v2523
    %2615 = vmatpush1.msra.mxu0 %v2522
    %2616 = vmatprep.subr.mxu0 %v2507
    %2617 = vmatpush1.msra.mxu0 %v2506
    %2618 = vmatprep.subr.mxu0 %v2491
    %2619 = vmatpush1.msra.mxu0 %v2490
    %2620 = vmatprep.subr.mxu0 %v2475
    %2621 = vmatpush1.msra.mxu0 %v2474
    %2622 = vmatprep.subr.mxu0 0.0
    %2623 = vmatpush2.msra.mxu0 0.0
    %2624 = vmatprep.subr.mxu0 0.0
    %2625 = vmatpush2.msra.mxu0 0.0
    %2626 = vmatprep.subr.mxu0 0.0
    %2627 = vmatpush2.msra.mxu0 0.0
    %2628 = vmatprep.subr.mxu0 0.0
    %2629 = vmatpush2.msra.mxu0 0.0
    %2630 = vmatprep.subr.mxu0 0.0
    %2631 = vmatpush2.msra.mxu0 0.0
    %2632 = vmatprep.subr.mxu0 0.0
    %2633 = vmatpush2.msra.mxu0 0.0
    %2634 = vmatprep.subr.mxu0 0.0
    %2635 = vmatpush2.msra.mxu0 0.0
    %2636 = vmatprep.subr.mxu0 0.0
    %2637 = vmatpush2.msra.mxu0 0.0
    %2638 = vmatprep.subr.mxu0 0.0
    %2639 = vmatpush2.msra.mxu0 0.0
    %2640 = vmatprep.subr.mxu0 0.0
    %2641 = vmatpush2.msra.mxu0 0.0
    %2642 = vmatprep.subr.mxu0 0.0
    %2643 = vmatpush2.msra.mxu0 0.0
    %2644 = vmatprep.subr.mxu0 0.0
    %2645 = vmatpush2.msra.mxu0 0.0
    %2646 = vmatprep.subr.mxu0 0.0
    %2647 = vmatpush2.msra.mxu0 0.0
    %2648 = vmatprep.subr.mxu0 0.0
    %2649 = vmatpush2.msra.mxu0 0.0
    %2650 = vmatprep.subr.mxu0 0.0
    %2651 = vmatpush2.msra.mxu0 0.0
    %2652 = vmatprep.subr.mxu0 0.0
    %2653 = vmatpush2.msra.mxu0 0.0
    %2654 = vmatprep.mubr.f32.mxu0 0.0
    %2655 = vmatmul.mubr.f32.gmra.mxu0 %v2264
    %v2656 = vpop.f32.mrf.mxu0
    %v2657 = vadd.f32 %v2262, %v2656
    %v2658 = vpop.f32.mrf.mxu0
    %v2659 = vadd.f32 %v2262, %v2658
    %2660 = vdwg.mxu0
    %2661 = vmatprep.subr.mxu0 0.0
    %2662 = vmatpush1.msra.mxu0 0.0
    %2663 = vmatprep.subr.mxu0 0.0
    %2664 = vmatpush1.msra.mxu0 0.0
    %2665 = vmatprep.subr.mxu0 0.0
    %2666 = vmatpush1.msra.mxu0 0.0
    %2667 = vmatprep.subr.mxu0 0.0
    %2668 = vmatpush1.msra.mxu0 0.0
    %2669 = vmatprep.subr.mxu0 0.0
    %2670 = vmatpush1.msra.mxu0 0.0
    %2671 = vmatprep.subr.mxu0 0.0
    %2672 = vmatpush1.msra.mxu0 0.0
    %2673 = vmatprep.subr.mxu0 0.0
    %2674 = vmatpush1.msra.mxu0 0.0
    %2675 = vmatprep.subr.mxu0 %v2589
    %2676 = vmatpush1.msra.mxu0 %v2588
    %2677 = vmatprep.subr.mxu0 %v2573
    %2678 = vmatpush1.msra.mxu0 %v2572
    %2679 = vmatprep.subr.mxu0 %v2557
    %2680 = vmatpush1.msra.mxu0 %v2556
    %2681 = vmatprep.subr.mxu0 %v2541
    %2682 = vmatpush1.msra.mxu0 %v2540
    %2683 = vmatprep.subr.mxu0 %v2461
    %2684 = vmatpush1.msra.mxu0 %v2460
    %2685 = vmatprep.subr.mxu0 %v2525
    %2686 = vmatpush1.msra.mxu0 %v2524
    %2687 = vmatprep.subr.mxu0 %v2509
    %2688 = vmatpush1.msra.mxu0 %v2508
    %2689 = vmatprep.subr.mxu0 %v2493
    %2690 = vmatpush1.msra.mxu0 %v2492
    %2691 = vmatprep.subr.mxu0 %v2477
    %2692 = vmatpush1.msra.mxu0 %v2476
    %2693 = vmatprep.subr.mxu0 0.0
    %2694 = vmatpush2.msra.mxu0 0.0
    %2695 = vmatprep.subr.mxu0 0.0
    %2696 = vmatpush2.msra.mxu0 0.0
    %2697 = vmatprep.subr.mxu0 0.0
    %2698 = vmatpush2.msra.mxu0 0.0
    %2699 = vmatprep.subr.mxu0 0.0
    %2700 = vmatpush2.msra.mxu0 0.0
    %2701 = vmatprep.subr.mxu0 0.0
    %2702 = vmatpush2.msra.mxu0 0.0
    %2703 = vmatprep.subr.mxu0 0.0
    %2704 = vmatpush2.msra.mxu0 0.0
    %2705 = vmatprep.subr.mxu0 0.0
    %2706 = vmatpush2.msra.mxu0 0.0
    %2707 = vmatprep.subr.mxu0 0.0
    %2708 = vmatpush2.msra.mxu0 0.0
    %2709 = vmatprep.subr.mxu0 0.0
    %2710 = vmatpush2.msra.mxu0 0.0
    %2711 = vmatprep.subr.mxu0 0.0
    %2712 = vmatpush2.msra.mxu0 0.0
    %2713 = vmatprep.subr.mxu0 0.0
    %2714 = vmatpush2.msra.mxu0 0.0
    %2715 = vmatprep.subr.mxu0 0.0
    %2716 = vmatpush2.msra.mxu0 0.0
    %2717 = vmatprep.subr.mxu0 0.0
    %2718 = vmatpush2.msra.mxu0 0.0
    %2719 = vmatprep.subr.mxu0 0.0
    %2720 = vmatpush2.msra.mxu0 0.0
    %2721 = vmatprep.subr.mxu0 0.0
    %2722 = vmatpush2.msra.mxu0 0.0
    %2723 = vmatprep.subr.mxu0 0.0
    %2724 = vmatpush2.msra.mxu0 0.0
    %2725 = vmatprep.mubr.f32.mxu0 0.0
    %2726 = vmatmul.mubr.f32.gmra.mxu0 %v2264
    %v2727 = vpop.f32.mrf.mxu0
    %v2728 = vadd.f32 %v2262, %v2727
    %v2729 = vpop.f32.mrf.mxu0
    %v2730 = vadd.f32 %v2262, %v2729
    %2731 = vdwg.mxu0
    %v2732 = vsel %vm1367, %v2657, 0.0
    %v2733 = vsel %vm1368, %v2659, 0.0
    %v2734 = vsel %vm1369, %v2728, 0.0
    %v2735 = vsel %vm1370, %v2730, 0.0
    %v2736 = vadd.f32 %v2732, %v2733
    %v2737 = vadd.f32 %v2736, %v2734
    %v2738 = vadd.f32 %v2737, %v2735
    %2739 = vadd.xlane.f32.xlu0 %v2738
    %v2740 = vpop.xlane.xlu0 %2739
    %v2741 = vmul.f32 %v2740, 0.0078125
    %v2742 = vsub.f32 %v2657, %v2741
    %v2743 = vsub.f32 %v2659, %v2741
    %v2744 = vsub.f32 %v2728, %v2741
    %v2745 = vsub.f32 %v2730, %v2741
    %v2746 = vmul.f32 %v2742, %v2742
    %v2747 = vmul.f32 %v2743, %v2743
    %v2748 = vmul.f32 %v2744, %v2744
    %v2749 = vmul.f32 %v2745, %v2745
    %v2750 = vsel %vm1367, %v2746, 0.0
    %v2751 = vsel %vm1368, %v2747, 0.0
    %v2752 = vsel %vm1369, %v2748, 0.0
    %v2753 = vsel %vm1370, %v2749, 0.0
    %v2754 = vadd.f32 %v2750, %v2751
    %v2755 = vadd.f32 %v2754, %v2752
    %v2756 = vadd.f32 %v2755, %v2753
    %2757 = vadd.xlane.f32.xlu0 %v2756
    %v2758 = vpop.xlane.xlu0 %2757
    %v2759 = vmul.f32 %v2758, 0.0078125
    %v2760 = vadd.f32 %v2759, 1e-05
    %v2761 = vrsqrt.pop %v2760
    %v2762 = vmul.f32 %v2742, %v2761
    %v2763 = vmul.f32 %v2743, %v2761
    %v2764 = vmul.f32 %v2744, %v2761
    %v2765 = vmul.f32 %v2745, %v2761
    %v2766 = vmul.f32 %v2762, %v2444
    %v2767 = vmul.f32 %v2763, %v2444
    %v2768 = vmul.f32 %v2764, %v2444
    %v2769 = vmul.f32 %v2765, %v2444
    %v2770 = vadd.f32 %v2766, %v2452
    %v2771 = vadd.f32 %v2767, %v2452
    %v2772 = vadd.f32 %v2768, %v2452
    %v2773 = vadd.f32 %v2769, %v2452
    %v2774 = vmax.f32 %v2770, 0.0
    %v2775 = vmax.f32 %v2771, 0.0
    %v2776 = vmax.f32 %v2772, 0.0
    %v2777 = vmax.f32 %v2773, 0.0
    %vm2778 = vcmp.ne.s32.totalorder %v1343, 0
    %vm2779 = vcmp.ne.s32.totalorder %v1344, 0
    %vm2780 = vcmp.ne.s32.totalorder %v1345, 0
    %vm2781 = vcmp.ne.s32.totalorder %v1346, 0
    %2782 = vrot.lane.b32.xlu0 %v2774, 1
    %v2783 = vpop.permute.xlu0 %2782
    %2784 = vrot.lane.b32.xlu0 %v2775, 1
    %v2785 = vpop.permute.xlu0 %2784
    %2786 = vrot.lane.b32.xlu0 %v2776, 1
    %v2787 = vpop.permute.xlu0 %2786
    %2788 = vrot.lane.b32.xlu0 %v2777, 1
    %v2789 = vpop.permute.xlu0 %2788
    %v2790 = vsel %vm225, %v2787, %v2789
    %v2791 = vsel %vm225, %v2785, %v2787
    %v2792 = vsel %vm225, %v2783, %v2785
    %v2793 = vsel %vm225, %v2789, %v2783
    %v2794 = vsel %vm2778, 1, 0
    %v2795 = vsel %vm2779, 1, 0
    %v2796 = vsel %vm2780, 1, 0
    %v2797 = vsel %vm2781, 1, 0
    %vm2798 = vcmp.eq.s32.totalorder %v2794, 1
    %vm2799 = vcmp.eq.s32.totalorder %v2795, 1
    %vm2800 = vcmp.eq.s32.totalorder %v2796, 1
    %vm2801 = vcmp.eq.s32.totalorder %v2797, 1
    %v2802 = vsel %vm2798, %v2793, %v2774
    %v2803 = vsel %vm2799, %v2792, %v2775
    %v2804 = vsel %vm2800, %v2791, %v2776
    %v2805 = vsel %vm2801, %v2790, %v2777
    %vm2806 = vcmp.ne.s32.totalorder %v1351, 0
    %vm2807 = vcmp.ne.s32.totalorder %v1352, 0
    %vm2808 = vcmp.ne.s32.totalorder %v1353, 0
    %vm2809 = vcmp.ne.s32.totalorder %v1354, 0
    %2810 = vrot.lane.b32.xlu0 %v2802, 16
    %v2811 = vpop.permute.xlu0 %2810
    %2812 = vrot.lane.b32.xlu0 %v2803, 16
    %v2813 = vpop.permute.xlu0 %2812
    %2814 = vrot.lane.b32.xlu0 %v2804, 16
    %v2815 = vpop.permute.xlu0 %2814
    %2816 = vrot.lane.b32.xlu0 %v2805, 16
    %v2817 = vpop.permute.xlu0 %2816
    %v2818 = vsel %vm127, %v2815, %v2817
    %v2819 = vsel %vm127, %v2813, %v2815
    %v2820 = vsel %vm127, %v2811, %v2813
    %v2821 = vsel %vm127, %v2817, %v2811
    %v2822 = vsel %vm2806, 1, 0
    %v2823 = vsel %vm2807, 1, 0
    %v2824 = vsel %vm2808, 1, 0
    %v2825 = vsel %vm2809, 1, 0
    %vm2826 = vcmp.eq.s32.totalorder %v2822, 1
    %vm2827 = vcmp.eq.s32.totalorder %v2823, 1
    %vm2828 = vcmp.eq.s32.totalorder %v2824, 1
    %vm2829 = vcmp.eq.s32.totalorder %v2825, 1
    %v2830 = vsel %vm2826, %v2821, %v2802
    %v2831 = vsel %vm2827, %v2820, %v2803
    %v2832 = vsel %vm2828, %v2819, %v2804
    %v2833 = vsel %vm2829, %v2818, %v2805
    %v2834 = vadd.f32 %v2830, %v47
    %v2835 = vadd.f32 %v2831, %v51
    %v2836 = vadd.f32 %v2832, %v55
    %v2837 = vadd.f32 %v2833, %v59
    %2838 = vrot.lane.b32.xlu0 %v2834, 17
    %v2839 = vpop.permute.xlu0 %2838
    %2840 = vrot.lane.b32.xlu0 %v2835, 17
    %v2841 = vpop.permute.xlu0 %2840
    %2842 = vrot.lane.b32.xlu0 %v2836, 17
    %v2843 = vpop.permute.xlu0 %2842
    %2844 = vrot.lane.b32.xlu0 %v2837, 17
    %v2845 = vpop.permute.xlu0 %2844
    %v2846 = vsel %vm72, %v2843, %v2845
    %v2847 = vsel %vm72, %v2841, %v2843
    %v2848 = vsel %vm72, %v2839, %v2841
    %v2849 = vsel %vm72, %v2845, %v2839
    %v2850 = vsel %vm536, %v2849, 0.0
    %v2851 = vsel %vm537, %v2848, 0.0
    %v2852 = vsel %vm538, %v2847, 0.0
    %v2853 = vsel %vm539, %v2846, 0.0
    %2854 = vrot.lane.b32.xlu0 %v2834, 16
    %v2855 = vpop.permute.xlu0 %2854
    %2856 = vrot.lane.b32.xlu0 %v2835, 16
    %v2857 = vpop.permute.xlu0 %2856
    %2858 = vrot.lane.b32.xlu0 %v2836, 16
    %v2859 = vpop.permute.xlu0 %2858
    %2860 = vrot.lane.b32.xlu0 %v2837, 16
    %v2861 = vpop.permute.xlu0 %2860
    %v2862 = vsel %vm127, %v2859, %v2861
    %v2863 = vsel %vm127, %v2857, %v2859
    %v2864 = vsel %vm127, %v2855, %v2857
    %v2865 = vsel %vm127, %v2861, %v2855
    %v2866 = vsel %vm560, %v2865, 0.0
    %v2867 = vsel %vm561, %v2864, 0.0
    %v2868 = vsel %vm562, %v2863, 0.0
    %v2869 = vsel %vm563, %v2862, 0.0
    %2870 = vrot.lane.b32.xlu0 %v2834, 15
    %v2871 = vpop.permute.xlu0 %2870
    %2872 = vrot.lane.b32.xlu0 %v2835, 15
    %v2873 = vpop.permute.xlu0 %2872
    %2874 = vrot.lane.b32.xlu0 %v2836, 15
    %v2875 = vpop.permute.xlu0 %2874
    %2876 = vrot.lane.b32.xlu0 %v2837, 15
    %v2877 = vpop.permute.xlu0 %2876
    %v2878 = vsel %vm172, %v2875, %v2877
    %v2879 = vsel %vm172, %v2873, %v2875
    %v2880 = vsel %vm172, %v2871, %v2873
    %v2881 = vsel %vm172, %v2877, %v2871
    %v2882 = vsel %vm584, %v2881, 0.0
    %v2883 = vsel %vm585, %v2880, 0.0
    %v2884 = vsel %vm586, %v2879, 0.0
    %v2885 = vsel %vm587, %v2878, 0.0
    %2886 = vrot.lane.b32.xlu0 %v2834, 1
    %v2887 = vpop.permute.xlu0 %2886
    %2888 = vrot.lane.b32.xlu0 %v2835, 1
    %v2889 = vpop.permute.xlu0 %2888
    %2890 = vrot.lane.b32.xlu0 %v2836, 1
    %v2891 = vpop.permute.xlu0 %2890
    %2892 = vrot.lane.b32.xlu0 %v2837, 1
    %v2893 = vpop.permute.xlu0 %2892
    %v2894 = vsel %vm225, %v2891, %v2893
    %v2895 = vsel %vm225, %v2889, %v2891
    %v2896 = vsel %vm225, %v2887, %v2889
    %v2897 = vsel %vm225, %v2893, %v2887
    %v2898 = vsel %vm608, %v2897, 0.0
    %v2899 = vsel %vm609, %v2896, 0.0
    %v2900 = vsel %vm610, %v2895, 0.0
    %v2901 = vsel %vm611, %v2894, 0.0
    %2902 = vrot.lane.b32.xlu0 %v2834, 127
    %v2903 = vpop.permute.xlu0 %2902
    %2904 = vrot.lane.b32.xlu0 %v2835, 127
    %v2905 = vpop.permute.xlu0 %2904
    %2906 = vrot.lane.b32.xlu0 %v2836, 127
    %v2907 = vpop.permute.xlu0 %2906
    %2908 = vrot.lane.b32.xlu0 %v2837, 127
    %v2909 = vpop.permute.xlu0 %2908
    %v2910 = vsel %vm282, %v2907, %v2909
    %v2911 = vsel %vm282, %v2905, %v2907
    %v2912 = vsel %vm282, %v2903, %v2905
    %v2913 = vsel %vm282, %v2909, %v2903
    %v2914 = vsel %vm632, %v2912, 0.0
    %v2915 = vsel %vm633, %v2911, 0.0
    %v2916 = vsel %vm634, %v2910, 0.0
    %v2917 = vsel %vm635, %v2913, 0.0
    %2918 = vrot.lane.b32.xlu0 %v2834, 113
    %v2919 = vpop.permute.xlu0 %2918
    %2920 = vrot.lane.b32.xlu0 %v2835, 113
    %v2921 = vpop.permute.xlu0 %2920
    %2922 = vrot.lane.b32.xlu0 %v2836, 113
    %v2923 = vpop.permute.xlu0 %2922
    %2924 = vrot.lane.b32.xlu0 %v2837, 113
    %v2925 = vpop.permute.xlu0 %2924
    %v2926 = vsel %vm327, %v2923, %v2925
    %v2927 = vsel %vm327, %v2921, %v2923
    %v2928 = vsel %vm327, %v2919, %v2921
    %v2929 = vsel %vm327, %v2925, %v2919
    %v2930 = vsel %vm656, %v2928, 0.0
    %v2931 = vsel %vm657, %v2927, 0.0
    %v2932 = vsel %vm658, %v2926, 0.0
    %v2933 = vsel %vm659, %v2929, 0.0
    %2934 = vrot.lane.b32.xlu0 %v2834, 112
    %v2935 = vpop.permute.xlu0 %2934
    %2936 = vrot.lane.b32.xlu0 %v2835, 112
    %v2937 = vpop.permute.xlu0 %2936
    %2938 = vrot.lane.b32.xlu0 %v2836, 112
    %v2939 = vpop.permute.xlu0 %2938
    %2940 = vrot.lane.b32.xlu0 %v2837, 112
    %v2941 = vpop.permute.xlu0 %2940
    %v2942 = vsel %vm380, %v2939, %v2941
    %v2943 = vsel %vm380, %v2937, %v2939
    %v2944 = vsel %vm380, %v2935, %v2937
    %v2945 = vsel %vm380, %v2941, %v2935
    %v2946 = vsel %vm680, %v2944, 0.0
    %v2947 = vsel %vm681, %v2943, 0.0
    %v2948 = vsel %vm682, %v2942, 0.0
    %v2949 = vsel %vm683, %v2945, 0.0
    %2950 = vrot.lane.b32.xlu0 %v2834, 111
    %v2951 = vpop.permute.xlu0 %2950
    %2952 = vrot.lane.b32.xlu0 %v2835, 111
    %v2953 = vpop.permute.xlu0 %2952
    %2954 = vrot.lane.b32.xlu0 %v2836, 111
    %v2955 = vpop.permute.xlu0 %2954
    %2956 = vrot.lane.b32.xlu0 %v2837, 111
    %v2957 = vpop.permute.xlu0 %2956
    %v2958 = vsel %vm425, %v2955, %v2957
    %v2959 = vsel %vm425, %v2953, %v2955
    %v2960 = vsel %vm425, %v2951, %v2953
    %v2961 = vsel %vm425, %v2957, %v2951
    %v2962 = vsel %vm704, %v2960, 0.0
    %v2963 = vsel %vm705, %v2959, 0.0
    %v2964 = vsel %vm706, %v2958, 0.0
    %v2965 = vsel %vm707, %v2961, 0.0
    %v2966 = vld [vmem:[#allocation2 + $0x60] sm:$0xff]
    %2968 = vset.pattern.permute.xlu0 72
    %2969 = vperm.xlu0 %2968, %v2966
    %v2970 = vpop.permute.xlu0 %2969
    %v2972 = vsel %vm718, %v2966, 0
    %2974 = vmatprep.subr.mxu0 0.0
    %2975 = vmatpush1.msra.mxu0 0.0
    %2976 = vmatprep.subr.mxu0 0.0
    %2977 = vmatpush1.msra.mxu0 0.0
    %2978 = vmatprep.subr.mxu0 0.0
    %2979 = vmatpush1.msra.mxu0 0.0
    %2980 = vmatprep.subr.mxu0 0.0
    %2981 = vmatpush1.msra.mxu0 0.0
    %2982 = vmatprep.subr.mxu0 0.0
    %2983 = vmatpush1.msra.mxu0 0.0
    %2984 = vmatprep.subr.mxu0 0.0
    %2985 = vmatpush1.msra.mxu0 0.0
    %2986 = vmatprep.subr.mxu0 0.0
    %2987 = vmatpush1.msra.mxu0 0.0
    %2988 = vmatprep.subr.mxu0 %v2963
    %2989 = vmatpush1.msra.mxu0 %v2962
    %2990 = vmatprep.subr.mxu0 %v2947
    %2991 = vmatpush1.msra.mxu0 %v2946
    %2992 = vmatprep.subr.mxu0 %v2931
    %2993 = vmatpush1.msra.mxu0 %v2930
    %2994 = vmatprep.subr.mxu0 %v2915
    %2995 = vmatpush1.msra.mxu0 %v2914
    %2996 = vmatprep.subr.mxu0 %v2835
    %2997 = vmatpush1.msra.mxu0 %v2834
    %2998 = vmatprep.subr.mxu0 %v2899
    %2999 = vmatpush1.msra.mxu0 %v2898
    %3000 = vmatprep.subr.mxu0 %v2883
    %3001 = vmatpush1.msra.mxu0 %v2882
    %3002 = vmatprep.subr.mxu0 %v2867
    %3003 = vmatpush1.msra.mxu0 %v2866
    %3004 = vmatprep.subr.mxu0 %v2851
    %3005 = vmatpush1.msra.mxu0 %v2850
    %3006 = vmatprep.subr.mxu0 0.0
    %3007 = vmatpush2.msra.mxu0 0.0
    %3008 = vmatprep.subr.mxu0 0.0
    %3009 = vmatpush2.msra.mxu0 0.0
    %3010 = vmatprep.subr.mxu0 0.0
    %3011 = vmatpush2.msra.mxu0 0.0
    %3012 = vmatprep.subr.mxu0 0.0
    %3013 = vmatpush2.msra.mxu0 0.0
    %3014 = vmatprep.subr.mxu0 0.0
    %3015 = vmatpush2.msra.mxu0 0.0
    %3016 = vmatprep.subr.mxu0 0.0
    %3017 = vmatpush2.msra.mxu0 0.0
    %3018 = vmatprep.subr.mxu0 0.0
    %3019 = vmatpush2.msra.mxu0 0.0
    %3020 = vmatprep.subr.mxu0 0.0
    %3021 = vmatpush2.msra.mxu0 0.0
    %3022 = vmatprep.subr.mxu0 0.0
    %3023 = vmatpush2.msra.mxu0 0.0
    %3024 = vmatprep.subr.mxu0 0.0
    %3025 = vmatpush2.msra.mxu0 0.0
    %3026 = vmatprep.subr.mxu0 0.0
    %3027 = vmatpush2.msra.mxu0 0.0
    %3028 = vmatprep.subr.mxu0 0.0
    %3029 = vmatpush2.msra.mxu0 0.0
    %3030 = vmatprep.subr.mxu0 0.0
    %3031 = vmatpush2.msra.mxu0 0.0
    %3032 = vmatprep.subr.mxu0 0.0
    %3033 = vmatpush2.msra.mxu0 0.0
    %3034 = vmatprep.subr.mxu0 0.0
    %3035 = vmatpush2.msra.mxu0 0.0
    %3036 = vmatprep.subr.mxu0 0.0
    %3037 = vmatpush2.msra.mxu0 0.0
    %3038 = vmatprep.mubr.f32.mxu0 0.0
    %3039 = vmatmul.mubr.f32.gmra.mxu0 %v2972
    %v3040 = vpop.f32.mrf.mxu0
    %v3041 = vadd.f32 %v2970, %v3040
    %v3042 = vpop.f32.mrf.mxu0
    %v3043 = vadd.f32 %v2970, %v3042
    %3044 = vdwg.mxu0
    %3045 = vmatprep.subr.mxu0 0.0
    %3046 = vmatpush1.msra.mxu0 0.0
    %3047 = vmatprep.subr.mxu0 0.0
    %3048 = vmatpush1.msra.mxu0 0.0
    %3049 = vmatprep.subr.mxu0 0.0
    %3050 = vmatpush1.msra.mxu0 0.0
    %3051 = vmatprep.subr.mxu0 0.0
    %3052 = vmatpush1.msra.mxu0 0.0
    %3053 = vmatprep.subr.mxu0 0.0
    %3054 = vmatpush1.msra.mxu0 0.0
    %3055 = vmatprep.subr.mxu0 0.0
    %3056 = vmatpush1.msra.mxu0 0.0
    %3057 = vmatprep.subr.mxu0 0.0
    %3058 = vmatpush1.msra.mxu0 0.0
    %3059 = vmatprep.subr.mxu0 %v2965
    %3060 = vmatpush1.msra.mxu0 %v2964
    %3061 = vmatprep.subr.mxu0 %v2949
    %3062 = vmatpush1.msra.mxu0 %v2948
    %3063 = vmatprep.subr.mxu0 %v2933
    %3064 = vmatpush1.msra.mxu0 %v2932
    %3065 = vmatprep.subr.mxu0 %v2917
    %3066 = vmatpush1.msra.mxu0 %v2916
    %3067 = vmatprep.subr.mxu0 %v2837
    %3068 = vmatpush1.msra.mxu0 %v2836
    %3069 = vmatprep.subr.mxu0 %v2901
    %3070 = vmatpush1.msra.mxu0 %v2900
    %3071 = vmatprep.subr.mxu0 %v2885
    %3072 = vmatpush1.msra.mxu0 %v2884
    %3073 = vmatprep.subr.mxu0 %v2869
    %3074 = vmatpush1.msra.mxu0 %v2868
    %3075 = vmatprep.subr.mxu0 %v2853
    %3076 = vmatpush1.msra.mxu0 %v2852
    %3077 = vmatprep.subr.mxu0 0.0
    %3078 = vmatpush2.msra.mxu0 0.0
    %3079 = vmatprep.subr.mxu0 0.0
    %3080 = vmatpush2.msra.mxu0 0.0
    %3081 = vmatprep.subr.mxu0 0.0
    %3082 = vmatpush2.msra.mxu0 0.0
    %3083 = vmatprep.subr.mxu0 0.0
    %3084 = vmatpush2.msra.mxu0 0.0
    %3085 = vmatprep.subr.mxu0 0.0
    %3086 = vmatpush2.msra.mxu0 0.0
    %3087 = vmatprep.subr.mxu0 0.0
    %3088 = vmatpush2.msra.mxu0 0.0
    %3089 = vmatprep.subr.mxu0 0.0
    %3090 = vmatpush2.msra.mxu0 0.0
    %3091 = vmatprep.subr.mxu0 0.0
    %3092 = vmatpush2.msra.mxu0 0.0
    %3093 = vmatprep.subr.mxu0 0.0
    %3094 = vmatpush2.msra.mxu0 0.0
    %3095 = vmatprep.subr.mxu0 0.0
    %3096 = vmatpush2.msra.mxu0 0.0
    %3097 = vmatprep.subr.mxu0 0.0
    %3098 = vmatpush2.msra.mxu0 0.0
    %3099 = vmatprep.subr.mxu0 0.0
    %3100 = vmatpush2.msra.mxu0 0.0
    %3101 = vmatprep.subr.mxu0 0.0
    %3102 = vmatpush2.msra.mxu0 0.0
    %3103 = vmatprep.subr.mxu0 0.0
    %3104 = vmatpush2.msra.mxu0 0.0
    %3105 = vmatprep.subr.mxu0 0.0
    %3106 = vmatpush2.msra.mxu0 0.0
    %3107 = vmatprep.subr.mxu0 0.0
    %3108 = vmatpush2.msra.mxu0 0.0
    %3109 = vmatprep.mubr.f32.mxu0 0.0
    %3110 = vmatmul.mubr.f32.gmra.mxu0 %v2972
    %v3111 = vpop.f32.mrf.mxu0
    %v3112 = vadd.f32 %v2970, %v3111
    %v3113 = vpop.f32.mrf.mxu0
    %v3114 = vadd.f32 %v2970, %v3113
    %3115 = vdwg.mxu0
    %v3116 = vadd.f32 %v3041, %v3043
    %v3117 = vadd.f32 %v3116, %v3112
    %v3118 = vadd.f32 %v3117, %v3114
    %3119 = vadd.xlane.f32.xlu0 %v3118
    %v3120 = vpop.xlane.xlu0 %3119
    %v3121 = vmul.f32 %v3120, 0.001953125
    %v3122 = vsub.f32 %v3041, %v3121
    %v3123 = vsub.f32 %v3043, %v3121
    %v3124 = vsub.f32 %v3112, %v3121
    %v3125 = vsub.f32 %v3114, %v3121
    %v3126 = vmul.f32 %v3122, %v3122
    %v3127 = vmul.f32 %v3123, %v3123
    %v3128 = vmul.f32 %v3124, %v3124
    %v3129 = vmul.f32 %v3125, %v3125
    %v3130 = vadd.f32 %v3126, %v3127
    %v3131 = vadd.f32 %v3130, %v3128
    %v3132 = vadd.f32 %v3131, %v3129
    %3133 = vadd.xlane.f32.xlu0 %v3132
    %v3134 = vpop.xlane.xlu0 %3133
    %v3135 = vmul.f32 %v3134, 0.001953125
    %v3136 = vadd.f32 %v3135, 1e-05
    %v3137 = vrsqrt.pop %v3136
    %v3138 = vmul.f32 %v3122, %v3137
    %v3139 = vmul.f32 %v3123, %v3137
    %v3140 = vmul.f32 %v3124, %v3137
    %v3141 = vmul.f32 %v3125, %v3137
    %3142 = vset.pattern.permute.xlu0 73
    %3143 = vperm.xlu0 %3142, %v2966
    %v3144 = vpop.permute.xlu0 %3143
    %v3146 = vmul.f32 %v3138, %v3144
    %v3147 = vmul.f32 %v3139, %v3144
    %v3148 = vmul.f32 %v3140, %v3144
    %v3149 = vmul.f32 %v3141, %v3144
    %3150 = vset.pattern.permute.xlu0 74
    %3151 = vperm.xlu0 %3150, %v2966
    %v3152 = vpop.permute.xlu0 %3151
    %v3154 = vadd.f32 %v3146, %v3152
    %v3155 = vadd.f32 %v3147, %v3152
    %v3156 = vadd.f32 %v3148, %v3152
    %v3157 = vadd.f32 %v3149, %v3152
    %v3158 = vmax.f32 %v3154, 0.0
    %v3159 = vmax.f32 %v3155, 0.0
    %v3160 = vmax.f32 %v3156, 0.0
    %v3161 = vmax.f32 %v3157, 0.0
    %3162 = vrot.lane.b32.xlu0 %v3158, 17
    %v3163 = vpop.permute.xlu0 %3162
    %3164 = vrot.lane.b32.xlu0 %v3159, 17
    %v3165 = vpop.permute.xlu0 %3164
    %3166 = vrot.lane.b32.xlu0 %v3160, 17
    %v3167 = vpop.permute.xlu0 %3166
    %3168 = vrot.lane.b32.xlu0 %v3161, 17
    %v3169 = vpop.permute.xlu0 %3168
    %v3170 = vsel %vm72, %v3167, %v3169
    %v3171 = vsel %vm72, %v3165, %v3167
    %v3172 = vsel %vm72, %v3163, %v3165
    %v3173 = vsel %vm72, %v3169, %v3163
    %v3174 = vsel %vm536, %v3173, 0.0
    %v3175 = vsel %vm537, %v3172, 0.0
    %v3176 = vsel %vm538, %v3171, 0.0
    %v3177 = vsel %vm539, %v3170, 0.0
    %3178 = vrot.lane.b32.xlu0 %v3158, 16
    %v3179 = vpop.permute.xlu0 %3178
    %3180 = vrot.lane.b32.xlu0 %v3159, 16
    %v3181 = vpop.permute.xlu0 %3180
    %3182 = vrot.lane.b32.xlu0 %v3160, 16
    %v3183 = vpop.permute.xlu0 %3182
    %3184 = vrot.lane.b32.xlu0 %v3161, 16
    %v3185 = vpop.permute.xlu0 %3184
    %v3186 = vsel %vm127, %v3183, %v3185
    %v3187 = vsel %vm127, %v3181, %v3183
    %v3188 = vsel %vm127, %v3179, %v3181
    %v3189 = vsel %vm127, %v3185, %v3179
    %v3190 = vsel %vm560, %v3189, 0.0
    %v3191 = vsel %vm561, %v3188, 0.0
    %v3192 = vsel %vm562, %v3187, 0.0
    %v3193 = vsel %vm563, %v3186, 0.0
    %3194 = vrot.lane.b32.xlu0 %v3158, 15
    %v3195 = vpop.permute.xlu0 %3194
    %3196 = vrot.lane.b32.xlu0 %v3159, 15
    %v3197 = vpop.permute.xlu0 %3196
    %3198 = vrot.lane.b32.xlu0 %v3160, 15
    %v3199 = vpop.permute.xlu0 %3198
    %3200 = vrot.lane.b32.xlu0 %v3161, 15
    %v3201 = vpop.permute.xlu0 %3200
    %v3202 = vsel %vm172, %v3199, %v3201
    %v3203 = vsel %vm172, %v3197, %v3199
    %v3204 = vsel %vm172, %v3195, %v3197
    %v3205 = vsel %vm172, %v3201, %v3195
    %v3206 = vsel %vm584, %v3205, 0.0
    %v3207 = vsel %vm585, %v3204, 0.0
    %v3208 = vsel %vm586, %v3203, 0.0
    %v3209 = vsel %vm587, %v3202, 0.0
    %3210 = vrot.lane.b32.xlu0 %v3158, 1
    %v3211 = vpop.permute.xlu0 %3210
    %3212 = vrot.lane.b32.xlu0 %v3159, 1
    %v3213 = vpop.permute.xlu0 %3212
    %3214 = vrot.lane.b32.xlu0 %v3160, 1
    %v3215 = vpop.permute.xlu0 %3214
    %3216 = vrot.lane.b32.xlu0 %v3161, 1
    %v3217 = vpop.permute.xlu0 %3216
    %v3218 = vsel %vm225, %v3215, %v3217
    %v3219 = vsel %vm225, %v3213, %v3215
    %v3220 = vsel %vm225, %v3211, %v3213
    %v3221 = vsel %vm225, %v3217, %v3211
    %v3222 = vsel %vm608, %v3221, 0.0
    %v3223 = vsel %vm609, %v3220, 0.0
    %v3224 = vsel %vm610, %v3219, 0.0
    %v3225 = vsel %vm611, %v3218, 0.0
    %3226 = vrot.lane.b32.xlu0 %v3158, 127
    %v3227 = vpop.permute.xlu0 %3226
    %3228 = vrot.lane.b32.xlu0 %v3159, 127
    %v3229 = vpop.permute.xlu0 %3228
    %3230 = vrot.lane.b32.xlu0 %v3160, 127
    %v3231 = vpop.permute.xlu0 %3230
    %3232 = vrot.lane.b32.xlu0 %v3161, 127
    %v3233 = vpop.permute.xlu0 %3232
    %v3234 = vsel %vm282, %v3231, %v3233
    %v3235 = vsel %vm282, %v3229, %v3231
    %v3236 = vsel %vm282, %v3227, %v3229
    %v3237 = vsel %vm282, %v3233, %v3227
    %v3238 = vsel %vm632, %v3236, 0.0
    %v3239 = vsel %vm633, %v3235, 0.0
    %v3240 = vsel %vm634, %v3234, 0.0
    %v3241 = vsel %vm635, %v3237, 0.0
    %3242 = vrot.lane.b32.xlu0 %v3158, 113
    %v3243 = vpop.permute.xlu0 %3242
    %3244 = vrot.lane.b32.xlu0 %v3159, 113
    %v3245 = vpop.permute.xlu0 %3244
    %3246 = vrot.lane.b32.xlu0 %v3160, 113
    %v3247 = vpop.permute.xlu0 %3246
    %3248 = vrot.lane.b32.xlu0 %v3161, 113
    %v3249 = vpop.permute.xlu0 %3248
    %v3250 = vsel %vm327, %v3247, %v3249
    %v3251 = vsel %vm327, %v3245, %v3247
    %v3252 = vsel %vm327, %v3243, %v3245
    %v3253 = vsel %vm327, %v3249, %v3243
    %v3254 = vsel %vm656, %v3252, 0.0
    %v3255 = vsel %vm657, %v3251, 0.0
    %v3256 = vsel %vm658, %v3250, 0.0
    %v3257 = vsel %vm659, %v3253, 0.0
    %3258 = vrot.lane.b32.xlu0 %v3158, 112
    %v3259 = vpop.permute.xlu0 %3258
    %3260 = vrot.lane.b32.xlu0 %v3159, 112
    %v3261 = vpop.permute.xlu0 %3260
    %3262 = vrot.lane.b32.xlu0 %v3160, 112
    %v3263 = vpop.permute.xlu0 %3262
    %3264 = vrot.lane.b32.xlu0 %v3161, 112
    %v3265 = vpop.permute.xlu0 %3264
    %v3266 = vsel %vm380, %v3263, %v3265
    %v3267 = vsel %vm380, %v3261, %v3263
    %v3268 = vsel %vm380, %v3259, %v3261
    %v3269 = vsel %vm380, %v3265, %v3259
    %v3270 = vsel %vm680, %v3268, 0.0
    %v3271 = vsel %vm681, %v3267, 0.0
    %v3272 = vsel %vm682, %v3266, 0.0
    %v3273 = vsel %vm683, %v3269, 0.0
    %3274 = vrot.lane.b32.xlu0 %v3158, 111
    %v3275 = vpop.permute.xlu0 %3274
    %3276 = vrot.lane.b32.xlu0 %v3159, 111
    %v3277 = vpop.permute.xlu0 %3276
    %3278 = vrot.lane.b32.xlu0 %v3160, 111
    %v3279 = vpop.permute.xlu0 %3278
    %3280 = vrot.lane.b32.xlu0 %v3161, 111
    %v3281 = vpop.permute.xlu0 %3280
    %v3282 = vsel %vm425, %v3279, %v3281
    %v3283 = vsel %vm425, %v3277, %v3279
    %v3284 = vsel %vm425, %v3275, %v3277
    %v3285 = vsel %vm425, %v3281, %v3275
    %v3286 = vsel %vm704, %v3284, 0.0
    %v3287 = vsel %vm705, %v3283, 0.0
    %v3288 = vsel %vm706, %v3282, 0.0
    %v3289 = vsel %vm707, %v3285, 0.0
    %3290 = vmatprep.subr.mxu0 0.0
    %3291 = vmatpush1.msra.mxu0 0.0
    %3292 = vmatprep.subr.mxu0 0.0
    %3293 = vmatpush1.msra.mxu0 0.0
    %3294 = vmatprep.subr.mxu0 0.0
    %3295 = vmatpush1.msra.mxu0 0.0
    %3296 = vmatprep.subr.mxu0 0.0
    %3297 = vmatpush1.msra.mxu0 0.0
    %3298 = vmatprep.subr.mxu0 0.0
    %3299 = vmatpush1.msra.mxu0 0.0
    %3300 = vmatprep.subr.mxu0 0.0
    %3301 = vmatpush1.msra.mxu0 0.0
    %3302 = vmatprep.subr.mxu0 0.0
    %3303 = vmatpush1.msra.mxu0 0.0
    %3304 = vmatprep.subr.mxu0 %v3287
    %3305 = vmatpush1.msra.mxu0 %v3286
    %3306 = vmatprep.subr.mxu0 %v3271
    %3307 = vmatpush1.msra.mxu0 %v3270
    %3308 = vmatprep.subr.mxu0 %v3255
    %3309 = vmatpush1.msra.mxu0 %v3254
    %3310 = vmatprep.subr.mxu0 %v3239
    %3311 = vmatpush1.msra.mxu0 %v3238
    %3312 = vmatprep.subr.mxu0 %v3159
    %3313 = vmatpush1.msra.mxu0 %v3158
    %3314 = vmatprep.subr.mxu0 %v3223
    %3315 = vmatpush1.msra.mxu0 %v3222
    %3316 = vmatprep.subr.mxu0 %v3207
    %3317 = vmatpush1.msra.mxu0 %v3206
    %3318 = vmatprep.subr.mxu0 %v3191
    %3319 = vmatpush1.msra.mxu0 %v3190
    %3320 = vmatprep.subr.mxu0 %v3175
    %3321 = vmatpush1.msra.mxu0 %v3174
    %3322 = vmatprep.subr.mxu0 0.0
    %3323 = vmatpush2.msra.mxu0 0.0
    %3324 = vmatprep.subr.mxu0 0.0
    %3325 = vmatpush2.msra.mxu0 0.0
    %3326 = vmatprep.subr.mxu0 0.0
    %3327 = vmatpush2.msra.mxu0 0.0
    %3328 = vmatprep.subr.mxu0 0.0
    %3329 = vmatpush2.msra.mxu0 0.0
    %3330 = vmatprep.subr.mxu0 0.0
    %3331 = vmatpush2.msra.mxu0 0.0
    %3332 = vmatprep.subr.mxu0 0.0
    %3333 = vmatpush2.msra.mxu0 0.0
    %3334 = vmatprep.subr.mxu0 0.0
    %3335 = vmatpush2.msra.mxu0 0.0
    %3336 = vmatprep.subr.mxu0 0.0
    %3337 = vmatpush2.msra.mxu0 0.0
    %3338 = vmatprep.subr.mxu0 0.0
    %3339 = vmatpush2.msra.mxu0 0.0
    %3340 = vmatprep.subr.mxu0 0.0
    %3341 = vmatpush2.msra.mxu0 0.0
    %3342 = vmatprep.subr.mxu0 0.0
    %3343 = vmatpush2.msra.mxu0 0.0
    %3344 = vmatprep.subr.mxu0 0.0
    %3345 = vmatpush2.msra.mxu0 0.0
    %3346 = vmatprep.subr.mxu0 0.0
    %3347 = vmatpush2.msra.mxu0 0.0
    %3348 = vmatprep.subr.mxu0 0.0
    %3349 = vmatpush2.msra.mxu0 0.0
    %3350 = vmatprep.subr.mxu0 0.0
    %3351 = vmatpush2.msra.mxu0 0.0
    %3352 = vmatprep.subr.mxu0 0.0
    %3353 = vmatpush2.msra.mxu0 0.0
    %3354 = vmatprep.mubr.f32.mxu0 0.0
    %3355 = vmatmul.mubr.f32.gmra.mxu0 %v2972
    %v3356 = vpop.f32.mrf.mxu0
    %v3357 = vadd.f32 %v2970, %v3356
    %v3358 = vpop.f32.mrf.mxu0
    %v3359 = vadd.f32 %v2970, %v3358
    %3360 = vdwg.mxu0
    %3361 = vmatprep.subr.mxu0 0.0
    %3362 = vmatpush1.msra.mxu0 0.0
    %3363 = vmatprep.subr.mxu0 0.0
    %3364 = vmatpush1.msra.mxu0 0.0
    %3365 = vmatprep.subr.mxu0 0.0
    %3366 = vmatpush1.msra.mxu0 0.0
    %3367 = vmatprep.subr.mxu0 0.0
    %3368 = vmatpush1.msra.mxu0 0.0
    %3369 = vmatprep.subr.mxu0 0.0
    %3370 = vmatpush1.msra.mxu0 0.0
    %3371 = vmatprep.subr.mxu0 0.0
    %3372 = vmatpush1.msra.mxu0 0.0
    %3373 = vmatprep.subr.mxu0 0.0
    %3374 = vmatpush1.msra.mxu0 0.0
    %3375 = vmatprep.subr.mxu0 %v3289
    %3376 = vmatpush1.msra.mxu0 %v3288
    %3377 = vmatprep.subr.mxu0 %v3273
    %3378 = vmatpush1.msra.mxu0 %v3272
    %3379 = vmatprep.subr.mxu0 %v3257
    %3380 = vmatpush1.msra.mxu0 %v3256
    %3381 = vmatprep.subr.mxu0 %v3241
    %3382 = vmatpush1.msra.mxu0 %v3240
    %3383 = vmatprep.subr.mxu0 %v3161
    %3384 = vmatpush1.msra.mxu0 %v3160
    %3385 = vmatprep.subr.mxu0 %v3225
    %3386 = vmatpush1.msra.mxu0 %v3224
    %3387 = vmatprep.subr.mxu0 %v3209
    %3388 = vmatpush1.msra.mxu0 %v3208
    %3389 = vmatprep.subr.mxu0 %v3193
    %3390 = vmatpush1.msra.mxu0 %v3192
    %3391 = vmatprep.subr.mxu0 %v3177
    %3392 = vmatpush1.msra.mxu0 %v3176
    %3393 = vmatprep.subr.mxu0 0.0
    %3394 = vmatpush2.msra.mxu0 0.0
    %3395 = vmatprep.subr.mxu0 0.0
    %3396 = vmatpush2.msra.mxu0 0.0
    %3397 = vmatprep.subr.mxu0 0.0
    %3398 = vmatpush2.msra.mxu0 0.0
    %3399 = vmatprep.subr.mxu0 0.0
    %3400 = vmatpush2.msra.mxu0 0.0
    %3401 = vmatprep.subr.mxu0 0.0
    %3402 = vmatpush2.msra.mxu0 0.0
    %3403 = vmatprep.subr.mxu0 0.0
    %3404 = vmatpush2.msra.mxu0 0.0
    %3405 = vmatprep.subr.mxu0 0.0
    %3406 = vmatpush2.msra.mxu0 0.0
    %3407 = vmatprep.subr.mxu0 0.0
    %3408 = vmatpush2.msra.mxu0 0.0
    %3409 = vmatprep.subr.mxu0 0.0
    %3410 = vmatpush2.msra.mxu0 0.0
    %3411 = vmatprep.subr.mxu0 0.0
    %3412 = vmatpush2.msra.mxu0 0.0
    %3413 = vmatprep.subr.mxu0 0.0
    %3414 = vmatpush2.msra.mxu0 0.0
    %3415 = vmatprep.subr.mxu0 0.0
    %3416 = vmatpush2.msra.mxu0 0.0
    %3417 = vmatprep.subr.mxu0 0.0
    %3418 = vmatpush2.msra.mxu0 0.0
    %3419 = vmatprep.subr.mxu0 0.0
    %3420 = vmatpush2.msra.mxu0 0.0
    %3421 = vmatprep.subr.mxu0 0.0
    %3422 = vmatpush2.msra.mxu0 0.0
    %3423 = vmatprep.subr.mxu0 0.0
    %3424 = vmatpush2.msra.mxu0 0.0
    %3425 = vmatprep.mubr.f32.mxu0 0.0
    %3426 = vmatmul.mubr.f32.gmra.mxu0 %v2972
    %v3427 = vpop.f32.mrf.mxu0
    %v3428 = vadd.f32 %v2970, %v3427
    %v3429 = vpop.f32.mrf.mxu0
    %v3430 = vadd.f32 %v2970, %v3429
    %3431 = vdwg.mxu0
    %v3432 = vadd.f32 %v3357, %v3359
    %v3433 = vadd.f32 %v3432, %v3428
    %v3434 = vadd.f32 %v3433, %v3430
    %3435 = vadd.xlane.f32.xlu0 %v3434
    %v3436 = vpop.xlane.xlu0 %3435
    %v3437 = vmul.f32 %v3436, 0.001953125
    %v3438 = vsub.f32 %v3357, %v3437
    %v3439 = vsub.f32 %v3359, %v3437
    %v3440 = vsub.f32 %v3428, %v3437
    %v3441 = vsub.f32 %v3430, %v3437
    %v3442 = vmul.f32 %v3438, %v3438
    %v3443 = vmul.f32 %v3439, %v3439
    %v3444 = vmul.f32 %v3440, %v3440
    %v3445 = vmul.f32 %v3441, %v3441
    %v3446 = vadd.f32 %v3442, %v3443
    %v3447 = vadd.f32 %v3446, %v3444
    %v3448 = vadd.f32 %v3447, %v3445
    %3449 = vadd.xlane.f32.xlu0 %v3448
    %v3450 = vpop.xlane.xlu0 %3449
    %v3451 = vmul.f32 %v3450, 0.001953125
    %v3452 = vadd.f32 %v3451, 1e-05
    %v3453 = vrsqrt.pop %v3452
    %v3454 = vmul.f32 %v3438, %v3453
    %v3455 = vmul.f32 %v3439, %v3453
    %v3456 = vmul.f32 %v3440, %v3453
    %v3457 = vmul.f32 %v3441, %v3453
    %v3458 = vmul.f32 %v3454, %v3144
    %v3459 = vmul.f32 %v3455, %v3144
    %v3460 = vmul.f32 %v3456, %v3144
    %v3461 = vmul.f32 %v3457, %v3144
    %v3462 = vadd.f32 %v3458, %v3152
    %v3463 = vadd.f32 %v3459, %v3152
    %v3464 = vadd.f32 %v3460, %v3152
    %v3465 = vadd.f32 %v3461, %v3152
    %v3466 = vmax.f32 %v3462, 0.0
    %v3467 = vmax.f32 %v3463, 0.0
    %v3468 = vmax.f32 %v3464, 0.0
    %v3469 = vmax.f32 %v3465, 0.0
    %v3470 = vld [vmem:[#allocation2 + $0x70] sm:$0xff]
    %v3471 = vld [vmem:[#allocation2 + $0x70] ss:$0 sm:$0xff]
    %3473 = vset.pattern.permute.xlu0 0
    %3474 = vperm.xlu0 %3473, %v3470
    %v3475 = vpop.permute.xlu0 %3474
    %v3477 = vmul.f32 %v3466, %v3475
    %v3478 = vmul.f32 %v3467, %v3475
    %v3479 = vmul.f32 %v3468, %v3475
    %v3480 = vmul.f32 %v3469, %v3475
    %v3481 = vrot.slane %v3477, 4
    %v3482 = vadd.f32 %v3477, %v3481
    %v3483 = vrot.slane %v3482, 2
    %v3484 = vadd.f32 %v3482, %v3483
    %v3485 = vrot.slane %v3484, 1
    %v3486 = vadd.f32 %v3484, %v3485
    %v3487 = vrot.slane %v3478, 4
    %v3488 = vadd.f32 %v3478, %v3487
    %v3489 = vrot.slane %v3488, 2
    %v3490 = vadd.f32 %v3488, %v3489
    %v3491 = vrot.slane %v3490, 1
    %v3492 = vadd.f32 %v3490, %v3491
    %v3493 = vrot.slane %v3479, 4
    %v3494 = vadd.f32 %v3479, %v3493
    %v3495 = vrot.slane %v3494, 2
    %v3496 = vadd.f32 %v3494, %v3495
    %v3497 = vrot.slane %v3496, 1
    %v3498 = vadd.f32 %v3496, %v3497
    %v3499 = vrot.slane %v3480, 4
    %v3500 = vadd.f32 %v3480, %v3499
    %v3501 = vrot.slane %v3500, 2
    %v3502 = vadd.f32 %v3500, %v3501
    %v3503 = vrot.slane %v3502, 1
    %v3504 = vadd.f32 %v3502, %v3503
    %3506 = vset.pattern.permute.xlu0 1
    %3507 = vperm.xlu0 %3506, %v3471
    %v3508 = vpop.permute.xlu0 %3507
    %v3510 = vadd.f32 %v3486, %v3508
    %v3511 = vadd.f32 %v3492, %v3508
    %v3512 = vadd.f32 %v3498, %v3508
    %v3513 = vadd.f32 %v3504, %v3508
    %v3518 = vcombine.low %v3510, %v3511
    %v3519 = vcombine.low %v3512, %v3513
    %v3521 = vunpack.c.l.s4 1966171168
    %v3522 = vunpack.c.0.s8 %v3521
    %v3523 = vlaneseq
    %v3524 = vshrl.u32 %v3523, 7
    %v3525 = vsub.s32 %v3522, %v3524
    %v3526 = vrot.slane %v3518, %v3525
    %v3528 = vunpack.c.l.s4 1966171168
    %v3529 = vunpack.c.0.s8 %v3528
    %v3530 = vlaneseq
    %v3531 = vshrl.u32 %v3530, 7
    %v3532 = vsub.s32 %v3529, %v3531
    %v3533 = vrot.slane %v3519, %v3532
    %v3534 = vcombine.low %v3526, %v3533
    %v3536 = vunpack.c.l.s4 1966171168
    %v3537 = vunpack.c.0.s8 %v3536
    %v3538 = vlaneseq
    %v3539 = vshrl.u32 %v3538, 7
    %v3540 = vsub.s32 %v3537, %v3539
    %v3541 = vrot.slane %v3534, %v3540
    %v3543 = vlaneseq
    %vm3544 = vcmp.ge.s32.totalorder %v3543, 0
    %vm3545 = vcmp.lt.s32.totalorder %v3543, 512
    %vm3546 = vmand %vm3544, %vm3545
    %3547 = vst.msk [vmem:[%s2] sm:$0xf] %vm3546, %v3541
    // Predicated region
    $region14: #{_lambda_.1} parent=1 // pred_check
      _
    $region15: #{_lambda_.1} parent=1 // pred_check_branch
      %3549 = sbr.rel (0) target = $region17
    $region16: #{_lambda_.1} parent=1 // pred_region
      _
    $region17: #{_lambda_.1} parent=1 // pred_fallthru
      _
    // Predicated region
    $region18: #{_lambda_.1} parent=1 // pred_check
      _
    $region19: #{_lambda_.1} parent=1 // pred_check_branch
      %3551 = sbr.rel (0) target = $region21
    $region20: #{_lambda_.1} parent=1 // pred_region
      _
    $region21: #{_lambda_.1} parent=1 // pred_fallthru
      _
    %3552 = vsyncpa [#allocation3], 1

</llo_original>
